<compile_context>
chip_gen: v5e
topology: v5e:2x2
jax: 0.10.0
libtpu: 0.0.40
codegen_flags: <defaults>
</compile_context>

<pallas_src>
import functools

import jax
import jax.numpy as jnp
from jax.experimental import pallas as pl
from jax.experimental.pallas import tpu as pltpu

LANE = 128      # vreg lane width: flat H*W axis is padded to a multiple of this
OUT_PAD = 8     # conv4/conv5 output channels zero-padded to a sublane multiple


def _ceil_to(x, m):
    return (x + m - 1) // m * m


def _vmem_capacity_bytes():
    try:
        return int(getattr(pltpu.get_tpu_info(), "vmem_capacity_bytes", 64 << 20))
    except Exception:
        return 64 << 20


def _vmem_limit_bytes(estimate):
    cap = _vmem_capacity_bytes()
    hi = max(int(cap * 0.8), 32 << 20)        # leave Mosaic-scratch headroom
    return int(min(max(int(estimate) + (4 << 20), 32 << 20), hi))


def _choose_cin_tiling(cin, hw_pad, vmem_capacity):
    """Pick the Cin reduction tile from a VMEM budget (bf16, double-buffered)."""
    budget = max(vmem_capacity // 8, 4 << 20)
    max_ck = budget // (2 * hw_pad * 2)
    if cin <= max(max_ck, 8):
        return cin, 1
    ck = max((max_ck // 128) * 128, 128)      # lane-aligned K tiles
    kt = -(-cin // ck)                        # ceil divide; last tile zero-padded
    return ck, kt


# ----------------------------------------------------------------------------
# Fused branch kernel.
#   1x1 conv (Cin-tiled MXU reduction) + folded BN   ->  edge_fea (bf16)
#   3x3 conv: ONE stacked (72, mid) matmul, then per-tap lane roll + f32 mask
#             on the 8-row result slices, accumulated in f32   ->  edge (f32)
# Grid: (batch, Cin tiles); edge_fea accumulates over Cin tiles in VMEM.
# ----------------------------------------------------------------------------
def _branch_kernel(x_ref, w1t_ref, s_ref, b_ref, w4s_ref, b4_ref, m_ref,
                   fea_ref, edge_ref, facc, *, width):
    k = pl.program_id(1)
    nk = pl.num_programs(1)

    @pl.when(k == 0)
    def _():
        facc[...] = jnp.zeros_like(facc)

    # 1x1 conv: channel contraction on the MXU (bf16 in, f32 accumulate).
    facc[...] += jnp.dot(w1t_ref[...], x_ref[0],
                         preferred_element_type=jnp.float32)

    @pl.when(k == nk - 1)
    def _():
        # Folded BatchNorm epilogue (per-channel scale/bias along sublanes),
        # done in place in the accumulator; bf16 edge_fea is stored and then
        # re-read from the output buffer as the 3x3 conv's MXU operand.
        facc[...] = facc[...] * s_ref[...] + b_ref[...]
        fea_ref[0] = facc[...].astype(fea_ref.dtype)

        # Stacked 3x3 conv: one (9*OUT_PAD, mid) x (mid, hw_pad) matmul against
        # the UN-shifted edge_fea, then per-tap static lane rotation (XLU) and
        # 0/1 boundary mask (zero-padding semantics) on the 8-row f32 slices.
        taps = jnp.dot(w4s_ref[...], fea_ref[0],
                       preferred_element_type=jnp.float32)       # (72, hw_pad)
        hw_pad = taps.shape[1]
        acc = jnp.zeros(edge_ref.shape[1:], jnp.float32)
        t = 0
        for dy in (-1, 0, 1):
            for dx in (-1, 0, 1):
                # rolled[p] == tap_result[p + dy*w + dx]  (jnp.roll convention)
                shift = (-(dy * width + dx)) % hw_pad
                sl = taps[t * OUT_PAD:(t + 1) * OUT_PAD, :]
                rolled = sl if shift == 0 else pltpu.roll(sl, shift, axis=1)
                acc = acc + rolled * m_ref[t]
                t += 1
        edge_ref[0] = (acc + b4_ref[...]).astype(edge_ref.dtype)


def _tap_masks(h, w, hw_pad):
    """0/1 masks implementing the 3x3 conv's zero padding, one per tap (f32)."""
    p = jnp.arange(hw_pad)
    row, col = p // w, p % w
    in_img = p < h * w
    masks = []
    for dy in (-1, 0, 1):
        for dx in (-1, 0, 1):
            masks.append(in_img
                         & (row + dy >= 0) & (row + dy < h)
                         & (col + dx >= 0) & (col + dx < w))
    return jnp.stack(masks).astype(jnp.float32).reshape(9, 1, hw_pad)


def _branch_forward(x_nchw, w1t, scale, bias, w4s, b4, out_fea):
    """One edge branch.  Returns (edge_fea [bf16], edge [f32]), both NCHW."""
    n, cin, h, w = x_nchw.shape
    mid = w1t.shape[0]
    hw = h * w
    hw_pad = _ceil_to(hw, LANE)

    cap = _vmem_capacity_bytes()
    ck, kt = _choose_cin_tiling(cin, hw_pad, cap)
    cin_pad = ck * kt

    # bf16 input stream (halves the dominant HBM read); pad is done in bf16.
    x3d = x_nchw.reshape(n, cin, hw).astype(jnp.bfloat16)
    if hw_pad != hw or cin_pad != cin:
        x3d = jnp.pad(x3d, ((0, 0), (0, cin_pad - cin), (0, hw_pad - hw)))
    if cin_pad != cin:
        w1t = jnp.pad(w1t, ((0, 0), (0, cin_pad - cin)))

    masks = _tap_masks(h, w, hw_pad)

    est = (2 * ck * hw_pad * 2            # x blocks (bf16, double-buffered)
           + 2 * mid * ck * 2             # w1t blocks
           + 2 * mid * hw_pad * 2         # edge_fea output blocks (bf16)
           + 4 * OUT_PAD * hw_pad * 4     # edge output blocks + acc temp
           + mid * hw_pad * 4             # f32 accumulator scratch
           + 2 * 9 * hw_pad * 4           # boundary masks
           + 9 * OUT_PAD * hw_pad * 4     # stacked tap matmul result (f32 temp)
           + 2 * 9 * OUT_PAD * mid * 2)   # stacked conv4 weights
    vmem = _vmem_limit_bytes(est)

    fea, edge = pl.pallas_call(
        functools.partial(_branch_kernel, width=w),
        out_shape=(
            jax.ShapeDtypeStruct((n, mid, hw_pad), jnp.bfloat16),
            jax.ShapeDtypeStruct((n, OUT_PAD, hw_pad), jnp.float32),
        ),
        grid_spec=pltpu.PrefetchScalarGridSpec(
            num_scalar_prefetch=0,
            grid=(n, kt),
            in_specs=[
                pl.BlockSpec((1, ck, hw_pad), lambda i, k: (i, k, 0)),
                pl.BlockSpec((mid, ck), lambda i, k: (0, k)),
                pl.BlockSpec((mid, 1), lambda i, k: (0, 0)),
                pl.BlockSpec((mid, 1), lambda i, k: (0, 0)),
                pl.BlockSpec((9 * OUT_PAD, mid), lambda i, k: (0, 0)),
                pl.BlockSpec((OUT_PAD, 1), lambda i, k: (0, 0)),
                pl.BlockSpec((9, 1, hw_pad), lambda i, k: (0, 0, 0)),
            ],
            out_specs=[
                pl.BlockSpec((1, mid, hw_pad), lambda i, k: (i, 0, 0)),
                pl.BlockSpec((1, OUT_PAD, hw_pad), lambda i, k: (i, 0, 0)),
            ],
            scratch_shapes=[pltpu.VMEM((mid, hw_pad), jnp.float32)],
        ),
        compiler_params=pltpu.CompilerParams(
            dimension_semantics=("parallel", "arbitrary"),
            vmem_limit_bytes=vmem),
    )(x3d, w1t, scale, bias, w4s, b4, masks)

    fea = fea[:, :, :hw].reshape(n, mid, h, w)
    edge = edge[:, :out_fea, :hw].reshape(n, out_fea, h, w)
    return fea, edge


# ----------------------------------------------------------------------------
# conv5: 1x1 conv + bias in the same transposed, lane-dense layout (bf16 in).
# ----------------------------------------------------------------------------
def _pointwise_kernel(x_ref, wt_ref, b_ref, o_ref):
    y = jnp.dot(wt_ref[...], x_ref[0], preferred_element_type=jnp.float32)
    o_ref[0] = (y + b_ref[...]).astype(o_ref.dtype)


def _pointwise_conv_nchw(x_nchw, wt, bias_col, out_fea):
    n, cin, h, w = x_nchw.shape
    hw = h * w
    hw_pad = _ceil_to(hw, LANE)
    x3d = x_nchw.reshape(n, cin, hw).astype(jnp.bfloat16)
    if hw_pad != hw:
        x3d = jnp.pad(x3d, ((0, 0), (0, 0), (0, hw_pad - hw)))
    est = (2 * cin * hw_pad * 2 + 2 * OUT_PAD * hw_pad * 4
           + OUT_PAD * hw_pad * 4 + 2 * OUT_PAD * cin * 2)
    out = pl.pallas_call(
        _pointwise_kernel,
        out_shape=jax.ShapeDtypeStruct((n, OUT_PAD, hw_pad), jnp.float32),
        grid_spec=pltpu.PrefetchScalarGridSpec(
            num_scalar_prefetch=0,
            grid=(n,),
            in_specs=[
                pl.BlockSpec((1, cin, hw_pad), lambda i: (i, 0, 0)),
                pl.BlockSpec((OUT_PAD, cin), lambda i: (0, 0)),
                pl.BlockSpec((OUT_PAD, 1), lambda i: (0, 0)),
            ],
            out_specs=pl.BlockSpec((1, OUT_PAD, hw_pad), lambda i: (i, 0, 0)),
        ),
        compiler_params=pltpu.CompilerParams(
            dimension_semantics=("parallel",),
            vmem_limit_bytes=_vmem_limit_bytes(est)),
    )(x3d, wt, bias_col)
    return out[:, :out_fea, :hw].reshape(n, out_fea, h, w)


# ----------------------------------------------------------------------------
# Bilinear resize, align_corners=True (matches F.interpolate), NCHW layout,
# as two precomputed interpolation-matrix contractions (MXU, no gathers).
# ----------------------------------------------------------------------------
def _interp_matrix(out_s, in_s):
    if out_s > 1 and in_s > 1:
        src = jnp.arange(out_s, dtype=jnp.float32) * ((in_s - 1) / (out_s - 1))
    else:
        src = jnp.zeros((out_s,), jnp.float32)
    i0 = jnp.clip(jnp.floor(src).astype(jnp.int32), 0, in_s - 1)
    i1 = jnp.clip(i0 + 1, 0, in_s - 1)
    f = src - i0.astype(jnp.float32)
    rows = jnp.arange(out_s)
    m = jnp.zeros((out_s, in_s), jnp.float32)
    m = m.at[rows, i0].add(1.0 - f)
    m = m.at[rows, i1].add(f)
    return m


def _resize_bilinear_nchw(x, out_h, out_w):
    n, c, h, w = x.shape
    if (h, w) == (out_h, out_w):
        return x
    ry = _interp_matrix(out_h, h)                       # (out_h, h)
    rx = _interp_matrix(out_w, w)                       # (out_w, w)
    y = jnp.einsum("oh,nchw->ncow", ry, x)
    y = jnp.einsum("pw,ncow->ncop", rx, y)
    return y.astype(jnp.float32)


# ----------------------------------------------------------------------------
# Parameter init (deterministic; BN folded into scale/bias, eval-mode stats).
# Weights are stored pre-transposed (bf16) in the layouts the kernels use.
# ----------------------------------------------------------------------------
def init_params(key, in_fea, mid_fea, out_fea):
    keys = jax.random.split(key, 5)
    eps = 1e-5
    params = {}
    for idx, cin in enumerate(in_fea):
        w = jax.random.normal(keys[idx], (cin, mid_fea), jnp.float32) * 0.05
        gamma = 1.0 + 0.01 * jnp.arange(mid_fea, dtype=jnp.float32)
        beta = 0.02 * jnp.arange(mid_fea, dtype=jnp.float32)
        rmean = 0.01 * jnp.arange(mid_fea, dtype=jnp.float32)
        rvar = 1.0 + 0.03 * jnp.arange(mid_fea, dtype=jnp.float32)
        scale = gamma / jnp.sqrt(rvar + eps)
        bias = beta - rmean * scale
        params[f"conv{idx + 1}_wt"] = w.T.astype(jnp.bfloat16)      # (mid, cin)
        params[f"conv{idx + 1}_scale"] = scale.reshape(mid_fea, 1)
        params[f"conv{idx + 1}_bias"] = bias.reshape(mid_fea, 1)

    # conv4: 3x3, stacked as (9*OUT_PAD, mid); row = tap*OUT_PAD + out_channel,
    # tap t = 3*(dy+1) + (dx+1).
    w4 = jax.random.normal(keys[3], (3, 3, mid_fea, out_fea), jnp.float32) * 0.05
    w4t = jnp.transpose(w4, (0, 1, 3, 2)).reshape(9, out_fea, mid_fea)
    w4p = jnp.pad(w4t, ((0, 0), (0, OUT_PAD - out_fea), (0, 0)))
    params["conv4_wt"] = w4p.reshape(9 * OUT_PAD, mid_fea).astype(jnp.bfloat16)
    b4 = 0.01 * jnp.arange(out_fea, dtype=jnp.float32)
    params["conv4_b"] = jnp.pad(b4, (0, OUT_PAD - out_fea)).reshape(OUT_PAD, 1)

    # conv5: 1x1 over 3*out_fea channels, stored transposed (OUT_PAD, 3*out).
    w5 = jax.random.normal(keys[4], (out_fea * 3, out_fea), jnp.float32) * 0.05
    params["conv5_wt"] = jnp.pad(
        w5.T, ((0, OUT_PAD - out_fea), (0, 0))).astype(jnp.bfloat16)
    b5 = 0.01 * jnp.arange(out_fea, dtype=jnp.float32)
    params["conv5_b"] = jnp.pad(b5, (0, OUT_PAD - out_fea)).reshape(OUT_PAD, 1)
    return params


# ----------------------------------------------------------------------------
# Edge_Module forward (NCHW in / NCHW out, like the PyTorch module).
# ----------------------------------------------------------------------------
def edge_module_forward(params, x1, x2, x3, out_fea=2):
    _, _, h, w = x1.shape

    def branch(x, idx):
        return _branch_forward(
            x, params[f"conv{idx}_wt"], params[f"conv{idx}_scale"],
            params[f"conv{idx}_bias"], params["conv4_wt"], params["conv4_b"],
            out_fea)

    edge1_fea, edge1 = branch(x1, 1)
    edge2_fea, edge2 = branch(x2, 2)
    edge3_fea, edge3 = branch(x3, 3)

    edge2_fea = _resize_bilinear_nchw(edge2_fea, h, w)
    edge3_fea = _resize_bilinear_nchw(edge3_fea, h, w)
    edge2 = _resize_bilinear_nchw(edge2, h, w)
    edge3 = _resize_bilinear_nchw(edge3, h, w)

    edge = jnp.concatenate([edge1, edge2, edge3], axis=1)           # (n, 6, h, w)
    edge_fea = jnp.concatenate(
        [edge1_fea.astype(jnp.float32), edge2_fea, edge3_fea], axis=1)

    edge = _pointwise_conv_nchw(edge, params["conv5_wt"], params["conv5_b"],
                                out_fea)
    return edge, edge_fea


# ----------------------------------------------------------------------------
# Pure-JAX/XLA reference (f32 weights from the same params) for validation.
# ----------------------------------------------------------------------------
def _resize_bilinear_ref(x, out_h, out_w):
    n, c, h, w = x.shape
    if (h, w) == (out_h, out_w):
        return x.astype(jnp.float32)

    def coords(out_s, in_s):
        if out_s > 1 and in_s > 1:
            src = jnp.arange(out_s, dtype=jnp.float32) * (in_s - 1) / (out_s - 1)
        else:
            src = jnp.zeros((out_s,), jnp.float32)
        i0 = jnp.clip(jnp.floor(src).astype(jnp.int32), 0, in_s - 1)
        i1 = jnp.clip(i0 + 1, 0, in_s - 1)
        return i0, i1, src - i0.astype(jnp.float32)

    y0, y1, fy = coords(out_h, h)
    x0, x1, fx = coords(out_w, w)
    x = x.astype(jnp.float32)
    rows = (x[:, :, y0, :] * (1.0 - fy)[None, None, :, None]
            + x[:, :, y1, :] * fy[None, None, :, None])
    return (rows[:, :, :, x0] * (1.0 - fx)[None, None, None, :]
            + rows[:, :, :, x1] * fx[None, None, None, :])


def _reference_forward(params, x1, x2, x3, out_fea=2):
    _, _, h, w = x1.shape

    def branch(x, idx):
        w1t = params[f"conv{idx}_wt"].astype(jnp.float32)            # (mid, cin)
        s = params[f"conv{idx}_scale"].astype(jnp.float32)[:, 0]
        b = params[f"conv{idx}_bias"].astype(jnp.float32)[:, 0]
        fea = jnp.einsum("mc,nchw->nmhw", w1t, x)
        fea = fea * s[None, :, None, None] + b[None, :, None, None]
        mid = w1t.shape[0]
        w4 = params["conv4_wt"].astype(jnp.float32).reshape(3, 3, OUT_PAD, mid)
        w4 = jnp.transpose(w4[:, :, :out_fea, :], (2, 3, 0, 1))      # OIHW
        b4 = params["conv4_b"].astype(jnp.float32)[:out_fea, 0]
        edge = jax.lax.conv_general_dilated(
            fea, w4, window_strides=(1, 1), padding=((1, 1), (1, 1)),
            dimension_numbers=("NCHW", "OIHW", "NCHW"))
        edge = edge + b4[None, :, None, None]
        return fea, edge

    e1f, e1 = branch(x1, 1)
    e2f, e2 = branch(x2, 2)
    e3f, e3 = branch(x3, 3)
    e2f = _resize_bilinear_ref(e2f, h, w)
    e3f = _resize_bilinear_ref(e3f, h, w)
    e2 = _resize_bilinear_ref(e2, h, w)
    e3 = _resize_bilinear_ref(e3, h, w)
    edge = jnp.concatenate([e1, e2, e3], axis=1)
    fea = jnp.concatenate([e1f, e2f, e3f], axis=1)
    w5 = params["conv5_wt"].astype(jnp.float32)[:out_fea, :]
    b5 = params["conv5_b"].astype(jnp.float32)[:out_fea, 0]
    edge = jnp.einsum("oc,nchw->nohw", w5, edge) + b5[None, :, None, None]
    return edge, fea


if __name__ == "__main__":
    key = jax.random.PRNGKey(0)
    in_fea = [16, 32, 64]   # scaled-down version of [256, 512, 1024]
    mid_fea = 32            # scaled-down version of 256
    out_fea = 2

    kp, k1, k2, k3 = jax.random.split(key, 4)
    params = init_params(kp, in_fea, mid_fea, out_fea)

    x1 = jax.random.normal(k1, (2, in_fea[0], 16, 16), jnp.float32)
    x2 = jax.random.normal(k2, (2, in_fea[1], 8, 8), jnp.float32)
    x3 = jax.random.normal(k3, (2, in_fea[2], 4, 4), jnp.float32)

    fwd = jax.jit(edge_module_forward)
    edge, edge_fea = fwd(params, x1, x2, x3)
    jax.block_until_ready((edge, edge_fea))

    assert edge.shape == (2, out_fea, 16, 16), edge.shape
    assert edge_fea.shape == (2, 3 * mid_fea, 16, 16), edge_fea.shape

    # Numerical check vs. pure-JAX reference (validates roll direction / tap
    # mapping / mask; tolerance covers the intended bf16 operand casts).
    ref_edge, ref_fea = _reference_forward(params, x1, x2, x3, out_fea)

    def _close(name, got, want, tol):
        got = jnp.asarray(got, jnp.float32)
        want = jnp.asarray(want, jnp.float32)
        err = float(jnp.max(jnp.abs(got - want)))
        scale = float(jnp.max(jnp.abs(want))) + 1e-6
        assert err <= tol * scale, f"{name}: max|err|={err} scale={scale}"

    _close("edge", edge, ref_edge, 0.05)
    _close("edge_fea", edge_fea, ref_fea, 0.05)

    print("KERNEL_OK")
</pallas_src>

<mosaic_0001>
module attributes {stable_mosaic.version = 11 : i64} {
  func.func @_branch_kernel(%arg0: i32, %arg1: i32, %arg2: memref<1x64x128xbf16, #tpu.memory_space<vmem>>, %arg3: memref<32x64xbf16, #tpu.memory_space<vmem>>, %arg4: memref<32x1xf32, #tpu.memory_space<vmem>>, %arg5: memref<32x1xf32, #tpu.memory_space<vmem>>, %arg6: memref<72x32xbf16, #tpu.memory_space<vmem>>, %arg7: memref<8x1xf32, #tpu.memory_space<vmem>>, %arg8: memref<9x1x128xf32, #tpu.memory_space<vmem>>, %arg9: memref<1x32x128xbf16, #tpu.memory_space<vmem>>, %arg10: memref<1x8x128xf32, #tpu.memory_space<vmem>>, %arg11: memref<32x128xf32, #tpu.memory_space<vmem>>) attributes {dimension_semantics = [#tpu.dimension_semantics<parallel>, #tpu.dimension_semantics<arbitrary>], iteration_bounds = array<i64: 2, 1>, scalar_prefetch = 0 : i64, scratch_operands = 1 : i64, tpu.core_type = #tpu.core_type<tc>, window_params = [{transform_indices = @transform_0, window_bounds = array<i64: 1, 64, 128>}, {transform_indices = @transform_1, window_bounds = array<i64: 32, 64>}, {pipeline_mode = #tpu.pipeline_mode<synchronous>, transform_indices = @transform_2, window_bounds = array<i64: 32, 1>}, {pipeline_mode = #tpu.pipeline_mode<synchronous>, transform_indices = @transform_3, window_bounds = array<i64: 32, 1>}, {pipeline_mode = #tpu.pipeline_mode<synchronous>, transform_indices = @transform_4, window_bounds = array<i64: 72, 32>}, {pipeline_mode = #tpu.pipeline_mode<synchronous>, transform_indices = @transform_5, window_bounds = array<i64: 8, 1>}, {pipeline_mode = #tpu.pipeline_mode<synchronous>, transform_indices = @transform_6, window_bounds = array<i64: 9, 1, 128>}, {transform_indices = @transform_7, window_bounds = array<i64: 1, 32, 128>}, {transform_indices = @transform_8, window_bounds = array<i64: 1, 8, 128>}]} {
    %c0_i32 = arith.constant 0 : i32
    %0 = arith.cmpi eq, %arg1, %c0_i32 : i32
    %1 = arith.extui %0 : i1 to i32
    %c0_i32_0 = arith.constant 0 : i32
    %2 = arith.cmpi ne, %1, %c0_i32_0 : i32
    scf.if %2 {
      %cst_11 = arith.constant 0.000000e+00 : f32
      %13 = vector.broadcast %cst_11 : f32 to vector<32x128xf32>
      %c0_12 = arith.constant 0 : index
      %c0_13 = arith.constant 0 : index
      %14 = vector.load %arg11[%c0_12, %c0_13] : memref<32x128xf32, #tpu.memory_space<vmem>>, vector<32x128xf32>
      tpu.vector_store %arg11[%c0_12, %c0_13], %13 {strides = array<i32>} : memref<32x128xf32, #tpu.memory_space<vmem>>, vector<32x128xf32>,
    } else {
    }
    %c0 = arith.constant 0 : index
    %c0_1 = arith.constant 0 : index
    %3 = vector.load %arg11[%c0, %c0_1] : memref<32x128xf32, #tpu.memory_space<vmem>>, vector<32x128xf32>
    %c0_2 = arith.constant 0 : index
    %c0_3 = arith.constant 0 : index
    %4 = vector.load %arg3[%c0_2, %c0_3] : memref<32x64xbf16, #tpu.memory_space<vmem>>, vector<32x64xbf16>
    %c0_4 = arith.constant 0 : index
    %c0_5 = arith.constant 0 : index
    %c0_6 = arith.constant 0 : index
    %5 = vector.load %arg2[%c0_4, %c0_5, %c0_6] : memref<1x64x128xbf16, #tpu.memory_space<vmem>>, vector<1x64x128xbf16>
    %6 = vector.shape_cast %5 : vector<1x64x128xbf16> to vector<64x128xbf16>
    %cst = arith.constant dense<0.000000e+00> : vector<32x128xf32>
    %7 = tpu.matmul %4, %6, %cst {dimension_numbers = #tpu.dot_dimension_numbers<[1], [0], [0], [1], [0, 0, 1, 1], [], []>} : vector<32x64xbf16>, vector<64x128xbf16>, vector<32x128xf32> -> vector<32x128xf32>
    %8 = arith.addf %3, %7 : vector<32x128xf32>
    %c0_7 = arith.constant 0 : index
    %c0_8 = arith.constant 0 : index
    %9 = vector.load %arg11[%c0_7, %c0_8] : memref<32x128xf32, #tpu.memory_space<vmem>>, vector<32x128xf32>
    tpu.vector_store %arg11[%c0_7, %c0_8], %8 {strides = array<i32>} : memref<32x128xf32, #tpu.memory_space<vmem>>, vector<32x128xf32>,
    %c0_i32_9 = arith.constant 0 : i32
    %10 = arith.cmpi eq, %arg1, %c0_i32_9 : i32
    %11 = arith.extui %10 : i1 to i32
    %c0_i32_10 = arith.constant 0 : i32
    %12 = arith.cmpi ne, %11, %c0_i32_10 : i32
    scf.if %12 {
      %c0_11 = arith.constant 0 : index
      %c0_12 = arith.constant 0 : index
      %13 = vector.load %arg11[%c0_11, %c0_12] : memref<32x128xf32, #tpu.memory_space<vmem>>, vector<32x128xf32>
      %c0_13 = arith.constant 0 : index
      %c0_14 = arith.constant 0 : index
      %14 = vector.load %arg4[%c0_13, %c0_14] : memref<32x1xf32, #tpu.memory_space<vmem>>, vector<32x1xf32>
      %15 = vector.broadcast %14 : vector<32x1xf32> to vector<32x128xf32>
      %16 = arith.mulf %13, %15 : vector<32x128xf32>
      %c0_15 = arith.constant 0 : index
      %c0_16 = arith.constant 0 : index
      %17 = vector.load %arg5[%c0_15, %c0_16] : memref<32x1xf32, #tpu.memory_space<vmem>>, vector<32x1xf32>
      %18 = vector.broadcast %17 : vector<32x1xf32> to vector<32x128xf32>
      %19 = arith.addf %16, %18 : vector<32x128xf32>
      %c0_17 = arith.constant 0 : index
      %c0_18 = arith.constant 0 : index
      %20 = vector.load %arg11[%c0_17, %c0_18] : memref<32x128xf32, #tpu.memory_space<vmem>>, vector<32x128xf32>
      tpu.vector_store %arg11[%c0_17, %c0_18], %19 {strides = array<i32>} : memref<32x128xf32, #tpu.memory_space<vmem>>, vector<32x128xf32>,
      %c0_19 = arith.constant 0 : index
      %c0_20 = arith.constant 0 : index
      %21 = vector.load %arg11[%c0_19, %c0_20] : memref<32x128xf32, #tpu.memory_space<vmem>>, vector<32x128xf32>
      %22 = arith.truncf %21 : vector<32x128xf32> to vector<32x128xbf16>
      %c0_21 = arith.constant 0 : index
      %c0_22 = arith.constant 0 : index
      %c0_23 = arith.constant 0 : index
      %23 = vector.load %arg9[%c0_21, %c0_22, %c0_23] : memref<1x32x128xbf16, #tpu.memory_space<vmem>>, vector<1x32x128xbf16>
      %24 = vector.shape_cast %23 : vector<1x32x128xbf16> to vector<32x128xbf16>
      %25 = vector.shape_cast %22 : vector<32x128xbf16> to vector<1x32x128xbf16>
      tpu.vector_store %arg9[%c0_21, %c0_22, %c0_23], %25 {strides = array<i32>} : memref<1x32x128xbf16, #tpu.memory_space<vmem>>, vector<1x32x128xbf16>,
      %c0_24 = arith.constant 0 : index
      %c0_25 = arith.constant 0 : index
      %26 = vector.load %arg6[%c0_24, %c0_25] : memref<72x32xbf16, #tpu.memory_space<vmem>>, vector<72x32xbf16>
      %c0_26 = arith.constant 0 : index
      %c0_27 = arith.constant 0 : index
      %c0_28 = arith.constant 0 : index
      %27 = vector.load %arg9[%c0_26, %c0_27, %c0_28] : memref<1x32x128xbf16, #tpu.memory_space<vmem>>, vector<1x32x128xbf16>
      %28 = vector.shape_cast %27 : vector<1x32x128xbf16> to vector<32x128xbf16>
      %cst_29 = arith.constant dense<0.000000e+00> : vector<72x128xf32>
      %29 = tpu.matmul %26, %28, %cst_29 {dimension_numbers = #tpu.dot_dimension_numbers<[1], [0], [0], [1], [0, 0, 1, 1], [], []>} : vector<72x32xbf16>, vector<32x128xbf16>, vector<72x128xf32> -> vector<72x128xf32>
      %cst_30 = arith.constant 0.000000e+00 : f32
      %30 = vector.broadcast %cst_30 : f32 to vector<8x128xf32>
      %31 = vector.extract_strided_slice %29 {offsets = [0, 0], sizes = [8, 128], strides = [1, 1]} : vector<72x128xf32> to vector<8x128xf32>
      %c5_i32 = arith.constant 5 : i32
      %32 = tpu.dynamic_rotate %31 by %c5_i32 dim 1 : vector<8x128xf32>, i32 -> vector<8x128xf32>
      %c0_31 = arith.constant 0 : index
      %c0_32 = arith.constant 0 : index
      %c0_33 = arith.constant 0 : index
      %33 = vector.load %arg8[%c0_31, %c0_32, %c0_33] : memref<9x1x128xf32, #tpu.memory_space<vmem>>, vector<1x1x128xf32>
      %34 = vector.shape_cast %33 : vector<1x1x128xf32> to vector<1x128xf32>
      %35 = vector.broadcast %34 : vector<1x128xf32> to vector<8x128xf32>
      %36 = arith.mulf %32, %35 : vector<8x128xf32>
      %37 = arith.addf %30, %36 : vector<8x128xf32>
      %38 = vector.extract_strided_slice %29 {offsets = [8, 0], sizes = [8, 128], strides = [1, 1]} : vector<72x128xf32> to vector<8x128xf32>
      %c4_i32 = arith.constant 4 : i32
      %39 = tpu.dynamic_rotate %38 by %c4_i32 dim 1 : vector<8x128xf32>, i32 -> vector<8x128xf32>
      %c1 = arith.constant 1 : index
      %c0_34 = arith.constant 0 : index
      %c0_35 = arith.constant 0 : index
      %40 = vector.load %arg8[%c1, %c0_34, %c0_35] : memref<9x1x128xf32, #tpu.memory_space<vmem>>, vector<1x1x128xf32>
      %41 = vector.shape_cast %40 : vector<1x1x128xf32> to vector<1x128xf32>
      %42 = vector.broadcast %41 : vector<1x128xf32> to vector<8x128xf32>
      %43 = arith.mulf %39, %42 : vector<8x128xf32>
      %44 = arith.addf %37, %43 : vector<8x128xf32>
      %45 = vector.extract_strided_slice %29 {offsets = [16, 0], sizes = [8, 128], strides = [1, 1]} : vector<72x128xf32> to vector<8x128xf32>
      %c3_i32 = arith.constant 3 : i32
      %46 = tpu.dynamic_rotate %45 by %c3_i32 dim 1 : vector<8x128xf32>, i32 -> vector<8x128xf32>
      %c2 = arith.constant 2 : index
      %c0_36 = arith.constant 0 : index
      %c0_37 = arith.constant 0 : index
      %47 = vector.load %arg8[%c2, %c0_36, %c0_37] : memref<9x1x128xf32, #tpu.memory_space<vmem>>, vector<1x1x128xf32>
      %48 = vector.shape_cast %47 : vector<1x1x128xf32> to vector<1x128xf32>
      %49 = vector.broadcast %48 : vector<1x128xf32> to vector<8x128xf32>
      %50 = arith.mulf %46, %49 : vector<8x128xf32>
      %51 = arith.addf %44, %50 : vector<8x128xf32>
      %52 = vector.extract_strided_slice %29 {offsets = [24, 0], sizes = [8, 128], strides = [1, 1]} : vector<72x128xf32> to vector<8x128xf32>
      %c1_i32 = arith.constant 1 : i32
      %53 = tpu.dynamic_rotate %52 by %c1_i32 dim 1 : vector<8x128xf32>, i32 -> vector<8x128xf32>
      %c3 = arith.constant 3 : index
      %c0_38 = arith.constant 0 : index
      %c0_39 = arith.constant 0 : index
      %54 = vector.load %arg8[%c3, %c0_38, %c0_39] : memref<9x1x128xf32, #tpu.memory_space<vmem>>, vector<1x1x128xf32>
      %55 = vector.shape_cast %54 : vector<1x1x128xf32> to vector<1x128xf32>
      %56 = vector.broadcast %55 : vector<1x128xf32> to vector<8x128xf32>
      %57 = arith.mulf %53, %56 : vector<8x128xf32>
      %58 = arith.addf %51, %57 : vector<8x128xf32>
      %59 = vector.extract_strided_slice %29 {offsets = [32, 0], sizes = [8, 128], strides = [1, 1]} : vector<72x128xf32> to vector<8x128xf32>
      %c4 = arith.constant 4 : index
      %c0_40 = arith.constant 0 : index
      %c0_41 = arith.constant 0 : index
      %60 = vector.load %arg8[%c4, %c0_40, %c0_41] : memref<9x1x128xf32, #tpu.memory_space<vmem>>, vector<1x1x128xf32>
      %61 = vector.shape_cast %60 : vector<1x1x128xf32> to vector<1x128xf32>
      %62 = vector.broadcast %61 : vector<1x128xf32> to vector<8x128xf32>
      %63 = arith.mulf %59, %62 : vector<8x128xf32>
      %64 = arith.addf %58, %63 : vector<8x128xf32>
      %65 = vector.extract_strided_slice %29 {offsets = [40, 0], sizes = [8, 128], strides = [1, 1]} : vector<72x128xf32> to vector<8x128xf32>
      %c127_i32 = arith.constant 127 : i32
      %66 = tpu.dynamic_rotate %65 by %c127_i32 dim 1 : vector<8x128xf32>, i32 -> vector<8x128xf32>
      %c5 = arith.constant 5 : index
      %c0_42 = arith.constant 0 : index
      %c0_43 = arith.constant 0 : index
      %67 = vector.load %arg8[%c5, %c0_42, %c0_43] : memref<9x1x128xf32, #tpu.memory_space<vmem>>, vector<1x1x128xf32>
      %68 = vector.shape_cast %67 : vector<1x1x128xf32> to vector<1x128xf32>
      %69 = vector.broadcast %68 : vector<1x128xf32> to vector<8x128xf32>
      %70 = arith.mulf %66, %69 : vector<8x128xf32>
      %71 = arith.addf %64, %70 : vector<8x128xf32>
      %72 = vector.extract_strided_slice %29 {offsets = [48, 0], sizes = [8, 128], strides = [1, 1]} : vector<72x128xf32> to vector<8x128xf32>
      %c125_i32 = arith.constant 125 : i32
      %73 = tpu.dynamic_rotate %72 by %c125_i32 dim 1 : vector<8x128xf32>, i32 -> vector<8x128xf32>
      %c6 = arith.constant 6 : index
      %c0_44 = arith.constant 0 : index
      %c0_45 = arith.constant 0 : index
      %74 = vector.load %arg8[%c6, %c0_44, %c0_45] : memref<9x1x128xf32, #tpu.memory_space<vmem>>, vector<1x1x128xf32>
      %75 = vector.shape_cast %74 : vector<1x1x128xf32> to vector<1x128xf32>
      %76 = vector.broadcast %75 : vector<1x128xf32> to vector<8x128xf32>
      %77 = arith.mulf %73, %76 : vector<8x128xf32>
      %78 = arith.addf %71, %77 : vector<8x128xf32>
      %79 = vector.extract_strided_slice %29 {offsets = [56, 0], sizes = [8, 128], strides = [1, 1]} : vector<72x128xf32> to vector<8x128xf32>
      %c124_i32 = arith.constant 124 : i32
      %80 = tpu.dynamic_rotate %79 by %c124_i32 dim 1 : vector<8x128xf32>, i32 -> vector<8x128xf32>
      %c7 = arith.constant 7 : index
      %c0_46 = arith.constant 0 : index
      %c0_47 = arith.constant 0 : index
      %81 = vector.load %arg8[%c7, %c0_46, %c0_47] : memref<9x1x128xf32, #tpu.memory_space<vmem>>, vector<1x1x128xf32>
      %82 = vector.shape_cast %81 : vector<1x1x128xf32> to vector<1x128xf32>
      %83 = vector.broadcast %82 : vector<1x128xf32> to vector<8x128xf32>
      %84 = arith.mulf %80, %83 : vector<8x128xf32>
      %85 = arith.addf %78, %84 : vector<8x128xf32>
      %86 = vector.extract_strided_slice %29 {offsets = [64, 0], sizes = [8, 128], strides = [1, 1]} : vector<72x128xf32> to vector<8x128xf32>
      %c123_i32 = arith.constant 123 : i32
      %87 = tpu.dynamic_rotate %86 by %c123_i32 dim 1 : vector<8x128xf32>, i32 -> vector<8x128xf32>
      %c8 = arith.constant 8 : index
      %c0_48 = arith.constant 0 : index
      %c0_49 = arith.constant 0 : index
      %88 = vector.load %arg8[%c8, %c0_48, %c0_49] : memref<9x1x128xf32, #tpu.memory_space<vmem>>, vector<1x1x128xf32>
      %89 = vector.shape_cast %88 : vector<1x1x128xf32> to vector<1x128xf32>
      %90 = vector.broadcast %89 : vector<1x128xf32> to vector<8x128xf32>
      %91 = arith.mulf %87, %90 : vector<8x128xf32>
      %92 = arith.addf %85, %91 : vector<8x128xf32>
      %c0_50 = arith.constant 0 : index
      %c0_51 = arith.constant 0 : index
      %93 = vector.load %arg7[%c0_50, %c0_51] : memref<8x1xf32, #tpu.memory_space<vmem>>, vector<8x1xf32>
      %94 = vector.broadcast %93 : vector<8x1xf32> to vector<8x128xf32>
      %95 = arith.addf %92, %94 : vector<8x128xf32>
      %c0_52 = arith.constant 0 : index
      %c0_53 = arith.constant 0 : index
      %c0_54 = arith.constant 0 : index
      %96 = vector.load %arg10[%c0_52, %c0_53, %c0_54] : memref<1x8x128xf32, #tpu.memory_space<vmem>>, vector<1x8x128xf32>
      %97 = vector.shape_cast %96 : vector<1x8x128xf32> to vector<8x128xf32>
      %98 = vector.shape_cast %95 : vector<8x128xf32> to vector<1x8x128xf32>
      tpu.vector_store %arg10[%c0_52, %c0_53, %c0_54], %98 {strides = array<i32>} : memref<1x8x128xf32, #tpu.memory_space<vmem>>, vector<1x8x128xf32>,
    } else {
    }
    return
  }
  func.func @transform_0(%arg0: i32, %arg1: i32) -> (i32, i32, i32) {
    %c0_i32 = arith.constant 0 : i32
    %c0_i32_0 = arith.constant 0 : i32
    return %arg0, %arg1, %c0_i32 : i32, i32, i32
  }
  func.func @transform_1(%arg0: i32, %arg1: i32) -> (i32, i32) {
    %c0_i32 = arith.constant 0 : i32
    %c0_i32_0 = arith.constant 0 : i32
    return %c0_i32, %arg1 : i32, i32
  }
  func.func @transform_2(%arg0: i32, %arg1: i32) -> (i32, i32) {
    %c0_i32 = arith.constant 0 : i32
    %c0_i32_0 = arith.constant 0 : i32
    %c0_i32_1 = arith.constant 0 : i32
    return %c0_i32, %c0_i32_0 : i32, i32
  }
  func.func @transform_3(%arg0: i32, %arg1: i32) -> (i32, i32) {
    %c0_i32 = arith.constant 0 : i32
    %c0_i32_0 = arith.constant 0 : i32
    %c0_i32_1 = arith.constant 0 : i32
    return %c0_i32, %c0_i32_0 : i32, i32
  }
  func.func @transform_4(%arg0: i32, %arg1: i32) -> (i32, i32) {
    %c0_i32 = arith.constant 0 : i32
    %c0_i32_0 = arith.constant 0 : i32
    %c0_i32_1 = arith.constant 0 : i32
    return %c0_i32, %c0_i32_0 : i32, i32
  }
  func.func @transform_5(%arg0: i32, %arg1: i32) -> (i32, i32) {
    %c0_i32 = arith.constant 0 : i32
    %c0_i32_0 = arith.constant 0 : i32
    %c0_i32_1 = arith.constant 0 : i32
    return %c0_i32, %c0_i32_0 : i32, i32
  }
  func.func @transform_6(%arg0: i32, %arg1: i32) -> (i32, i32, i32) {
    %c0_i32 = arith.constant 0 : i32
    %c0_i32_0 = arith.constant 0 : i32
    %c0_i32_1 = arith.constant 0 : i32
    %c0_i32_2 = arith.constant 0 : i32
    return %c0_i32, %c0_i32_0, %c0_i32_1 : i32, i32, i32
  }
  func.func @transform_7(%arg0: i32, %arg1: i32) -> (i32, i32, i32) {
    %c0_i32 = arith.constant 0 : i32
    %c0_i32_0 = arith.constant 0 : i32
    %c0_i32_1 = arith.constant 0 : i32
    return %arg0, %c0_i32, %c0_i32_0 : i32, i32, i32
  }
  func.func @transform_8(%arg0: i32, %arg1: i32) -> (i32, i32, i32) {
    %c0_i32 = arith.constant 0 : i32
    %c0_i32_0 = arith.constant 0 : i32
    %c0_i32_1 = arith.constant 0 : i32
    return %arg0, %c0_i32, %c0_i32_0 : i32, i32, i32
  }
}

module attributes {stable_mosaic.version = 11 : i64} {
  func.func @_branch_kernel(%arg0: i32, %arg1: i32, %arg2: memref<1x32x128xbf16, #tpu.memory_space<vmem>>, %arg3: memref<32x32xbf16, #tpu.memory_space<vmem>>, %arg4: memref<32x1xf32, #tpu.memory_space<vmem>>, %arg5: memref<32x1xf32, #tpu.memory_space<vmem>>, %arg6: memref<72x32xbf16, #tpu.memory_space<vmem>>, %arg7: memref<8x1xf32, #tpu.memory_space<vmem>>, %arg8: memref<9x1x128xf32, #tpu.memory_space<vmem>>, %arg9: memref<1x32x128xbf16, #tpu.memory_space<vmem>>, %arg10: memref<1x8x128xf32, #tpu.memory_space<vmem>>, %arg11: memref<32x128xf32, #tpu.memory_space<vmem>>) attributes {dimension_semantics = [#tpu.dimension_semantics<parallel>, #tpu.dimension_semantics<arbitrary>], iteration_bounds = array<i64: 2, 1>, scalar_prefetch = 0 : i64, scratch_operands = 1 : i64, tpu.core_type = #tpu.core_type<tc>, window_params = [{transform_indices = @transform_0, window_bounds = array<i64: 1, 32, 128>}, {transform_indices = @transform_1, window_bounds = array<i64: 32, 32>}, {pipeline_mode = #tpu.pipeline_mode<synchronous>, transform_indices = @transform_2, window_bounds = array<i64: 32, 1>}, {pipeline_mode = #tpu.pipeline_mode<synchronous>, transform_indices = @transform_3, window_bounds = array<i64: 32, 1>}, {pipeline_mode = #tpu.pipeline_mode<synchronous>, transform_indices = @transform_4, window_bounds = array<i64: 72, 32>}, {pipeline_mode = #tpu.pipeline_mode<synchronous>, transform_indices = @transform_5, window_bounds = array<i64: 8, 1>}, {pipeline_mode = #tpu.pipeline_mode<synchronous>, transform_indices = @transform_6, window_bounds = array<i64: 9, 1, 128>}, {transform_indices = @transform_7, window_bounds = array<i64: 1, 32, 128>}, {transform_indices = @transform_8, window_bounds = array<i64: 1, 8, 128>}]} {
    %c0_i32 = arith.constant 0 : i32
    %0 = arith.cmpi eq, %arg1, %c0_i32 : i32
    %1 = arith.extui %0 : i1 to i32
    %c0_i32_0 = arith.constant 0 : i32
    %2 = arith.cmpi ne, %1, %c0_i32_0 : i32
    scf.if %2 {
      %cst_11 = arith.constant 0.000000e+00 : f32
      %13 = vector.broadcast %cst_11 : f32 to vector<32x128xf32>
      %c0_12 = arith.constant 0 : index
      %c0_13 = arith.constant 0 : index
      %14 = vector.load %arg11[%c0_12, %c0_13] : memref<32x128xf32, #tpu.memory_space<vmem>>, vector<32x128xf32>
      tpu.vector_store %arg11[%c0_12, %c0_13], %13 {strides = array<i32>} : memref<32x128xf32, #tpu.memory_space<vmem>>, vector<32x128xf32>,
    } else {
    }
    %c0 = arith.constant 0 : index
    %c0_1 = arith.constant 0 : index
    %3 = vector.load %arg11[%c0, %c0_1] : memref<32x128xf32, #tpu.memory_space<vmem>>, vector<32x128xf32>
    %c0_2 = arith.constant 0 : index
    %c0_3 = arith.constant 0 : index
    %4 = vector.load %arg3[%c0_2, %c0_3] : memref<32x32xbf16, #tpu.memory_space<vmem>>, vector<32x32xbf16>
    %c0_4 = arith.constant 0 : index
    %c0_5 = arith.constant 0 : index
    %c0_6 = arith.constant 0 : index
    %5 = vector.load %arg2[%c0_4, %c0_5, %c0_6] : memref<1x32x128xbf16, #tpu.memory_space<vmem>>, vector<1x32x128xbf16>
    %6 = vector.shape_cast %5 : vector<1x32x128xbf16> to vector<32x128xbf16>
    %cst = arith.constant dense<0.000000e+00> : vector<32x128xf32>
    %7 = tpu.matmul %4, %6, %cst {dimension_numbers = #tpu.dot_dimension_numbers<[1], [0], [0], [1], [0, 0, 1, 1], [], []>} : vector<32x32xbf16>, vector<32x128xbf16>, vector<32x128xf32> -> vector<32x128xf32>
    %8 = arith.addf %3, %7 : vector<32x128xf32>
    %c0_7 = arith.constant 0 : index
    %c0_8 = arith.constant 0 : index
    %9 = vector.load %arg11[%c0_7, %c0_8] : memref<32x128xf32, #tpu.memory_space<vmem>>, vector<32x128xf32>
    tpu.vector_store %arg11[%c0_7, %c0_8], %8 {strides = array<i32>} : memref<32x128xf32, #tpu.memory_space<vmem>>, vector<32x128xf32>,
    %c0_i32_9 = arith.constant 0 : i32
    %10 = arith.cmpi eq, %arg1, %c0_i32_9 : i32
    %11 = arith.extui %10 : i1 to i32
    %c0_i32_10 = arith.constant 0 : i32
    %12 = arith.cmpi ne, %11, %c0_i32_10 : i32
    scf.if %12 {
      %c0_11 = arith.constant 0 : index
      %c0_12 = arith.constant 0 : index
      %13 = vector.load %arg11[%c0_11, %c0_12] : memref<32x128xf32, #tpu.memory_space<vmem>>, vector<32x128xf32>
      %c0_13 = arith.constant 0 : index
      %c0_14 = arith.constant 0 : index
      %14 = vector.load %arg4[%c0_13, %c0_14] : memref<32x1xf32, #tpu.memory_space<vmem>>, vector<32x1xf32>
      %15 = vector.broadcast %14 : vector<32x1xf32> to vector<32x128xf32>
      %16 = arith.mulf %13, %15 : vector<32x128xf32>
      %c0_15 = arith.constant 0 : index
      %c0_16 = arith.constant 0 : index
      %17 = vector.load %arg5[%c0_15, %c0_16] : memref<32x1xf32, #tpu.memory_space<vmem>>, vector<32x1xf32>
      %18 = vector.broadcast %17 : vector<32x1xf32> to vector<32x128xf32>
      %19 = arith.addf %16, %18 : vector<32x128xf32>
      %c0_17 = arith.constant 0 : index
      %c0_18 = arith.constant 0 : index
      %20 = vector.load %arg11[%c0_17, %c0_18] : memref<32x128xf32, #tpu.memory_space<vmem>>, vector<32x128xf32>
      tpu.vector_store %arg11[%c0_17, %c0_18], %19 {strides = array<i32>} : memref<32x128xf32, #tpu.memory_space<vmem>>, vector<32x128xf32>,
      %c0_19 = arith.constant 0 : index
      %c0_20 = arith.constant 0 : index
      %21 = vector.load %arg11[%c0_19, %c0_20] : memref<32x128xf32, #tpu.memory_space<vmem>>, vector<32x128xf32>
      %22 = arith.truncf %21 : vector<32x128xf32> to vector<32x128xbf16>
      %c0_21 = arith.constant 0 : index
      %c0_22 = arith.constant 0 : index
      %c0_23 = arith.constant 0 : index
      %23 = vector.load %arg9[%c0_21, %c0_22, %c0_23] : memref<1x32x128xbf16, #tpu.memory_space<vmem>>, vector<1x32x128xbf16>
      %24 = vector.shape_cast %23 : vector<1x32x128xbf16> to vector<32x128xbf16>
      %25 = vector.shape_cast %22 : vector<32x128xbf16> to vector<1x32x128xbf16>
      tpu.vector_store %arg9[%c0_21, %c0_22, %c0_23], %25 {strides = array<i32>} : memref<1x32x128xbf16, #tpu.memory_space<vmem>>, vector<1x32x128xbf16>,
      %c0_24 = arith.constant 0 : index
      %c0_25 = arith.constant 0 : index
      %26 = vector.load %arg6[%c0_24, %c0_25] : memref<72x32xbf16, #tpu.memory_space<vmem>>, vector<72x32xbf16>
      %c0_26 = arith.constant 0 : index
      %c0_27 = arith.constant 0 : index
      %c0_28 = arith.constant 0 : index
      %27 = vector.load %arg9[%c0_26, %c0_27, %c0_28] : memref<1x32x128xbf16, #tpu.memory_space<vmem>>, vector<1x32x128xbf16>
      %28 = vector.shape_cast %27 : vector<1x32x128xbf16> to vector<32x128xbf16>
      %cst_29 = arith.constant dense<0.000000e+00> : vector<72x128xf32>
      %29 = tpu.matmul %26, %28, %cst_29 {dimension_numbers = #tpu.dot_dimension_numbers<[1], [0], [0], [1], [0, 0, 1, 1], [], []>} : vector<72x32xbf16>, vector<32x128xbf16>, vector<72x128xf32> -> vector<72x128xf32>
      %cst_30 = arith.constant 0.000000e+00 : f32
      %30 = vector.broadcast %cst_30 : f32 to vector<8x128xf32>
      %31 = vector.extract_strided_slice %29 {offsets = [0, 0], sizes = [8, 128], strides = [1, 1]} : vector<72x128xf32> to vector<8x128xf32>
      %c9_i32 = arith.constant 9 : i32
      %32 = tpu.dynamic_rotate %31 by %c9_i32 dim 1 : vector<8x128xf32>, i32 -> vector<8x128xf32>
      %c0_31 = arith.constant 0 : index
      %c0_32 = arith.constant 0 : index
      %c0_33 = arith.constant 0 : index
      %33 = vector.load %arg8[%c0_31, %c0_32, %c0_33] : memref<9x1x128xf32, #tpu.memory_space<vmem>>, vector<1x1x128xf32>
      %34 = vector.shape_cast %33 : vector<1x1x128xf32> to vector<1x128xf32>
      %35 = vector.broadcast %34 : vector<1x128xf32> to vector<8x128xf32>
      %36 = arith.mulf %32, %35 : vector<8x128xf32>
      %37 = arith.addf %30, %36 : vector<8x128xf32>
      %38 = vector.extract_strided_slice %29 {offsets = [8, 0], sizes = [8, 128], strides = [1, 1]} : vector<72x128xf32> to vector<8x128xf32>
      %c8_i32 = arith.constant 8 : i32
      %39 = tpu.dynamic_rotate %38 by %c8_i32 dim 1 : vector<8x128xf32>, i32 -> vector<8x128xf32>
      %c1 = arith.constant 1 : index
      %c0_34 = arith.constant 0 : index
      %c0_35 = arith.constant 0 : index
      %40 = vector.load %arg8[%c1, %c0_34, %c0_35] : memref<9x1x128xf32, #tpu.memory_space<vmem>>, vector<1x1x128xf32>
      %41 = vector.shape_cast %40 : vector<1x1x128xf32> to vector<1x128xf32>
      %42 = vector.broadcast %41 : vector<1x128xf32> to vector<8x128xf32>
      %43 = arith.mulf %39, %42 : vector<8x128xf32>
      %44 = arith.addf %37, %43 : vector<8x128xf32>
      %45 = vector.extract_strided_slice %29 {offsets = [16, 0], sizes = [8, 128], strides = [1, 1]} : vector<72x128xf32> to vector<8x128xf32>
      %c7_i32 = arith.constant 7 : i32
      %46 = tpu.dynamic_rotate %45 by %c7_i32 dim 1 : vector<8x128xf32>, i32 -> vector<8x128xf32>
      %c2 = arith.constant 2 : index
      %c0_36 = arith.constant 0 : index
      %c0_37 = arith.constant 0 : index
      %47 = vector.load %arg8[%c2, %c0_36, %c0_37] : memref<9x1x128xf32, #tpu.memory_space<vmem>>, vector<1x1x128xf32>
      %48 = vector.shape_cast %47 : vector<1x1x128xf32> to vector<1x128xf32>
      %49 = vector.broadcast %48 : vector<1x128xf32> to vector<8x128xf32>
      %50 = arith.mulf %46, %49 : vector<8x128xf32>
      %51 = arith.addf %44, %50 : vector<8x128xf32>
      %52 = vector.extract_strided_slice %29 {offsets = [24, 0], sizes = [8, 128], strides = [1, 1]} : vector<72x128xf32> to vector<8x128xf32>
      %c1_i32 = arith.constant 1 : i32
      %53 = tpu.dynamic_rotate %52 by %c1_i32 dim 1 : vector<8x128xf32>, i32 -> vector<8x128xf32>
      %c3 = arith.constant 3 : index
      %c0_38 = arith.constant 0 : index
      %c0_39 = arith.constant 0 : index
      %54 = vector.load %arg8[%c3, %c0_38, %c0_39] : memref<9x1x128xf32, #tpu.memory_space<vmem>>, vector<1x1x128xf32>
      %55 = vector.shape_cast %54 : vector<1x1x128xf32> to vector<1x128xf32>
      %56 = vector.broadcast %55 : vector<1x128xf32> to vector<8x128xf32>
      %57 = arith.mulf %53, %56 : vector<8x128xf32>
      %58 = arith.addf %51, %57 : vector<8x128xf32>
      %59 = vector.extract_strided_slice %29 {offsets = [32, 0], sizes = [8, 128], strides = [1, 1]} : vector<72x128xf32> to vector<8x128xf32>
      %c4 = arith.constant 4 : index
      %c0_40 = arith.constant 0 : index
      %c0_41 = arith.constant 0 : index
      %60 = vector.load %arg8[%c4, %c0_40, %c0_41] : memref<9x1x128xf32, #tpu.memory_space<vmem>>, vector<1x1x128xf32>
      %61 = vector.shape_cast %60 : vector<1x1x128xf32> to vector<1x128xf32>
      %62 = vector.broadcast %61 : vector<1x128xf32> to vector<8x128xf32>
      %63 = arith.mulf %59, %62 : vector<8x128xf32>
      %64 = arith.addf %58, %63 : vector<8x128xf32>
      %65 = vector.extract_strided_slice %29 {offsets = [40, 0], sizes = [8, 128], strides = [1, 1]} : vector<72x128xf32> to vector<8x128xf32>
      %c127_i32 = arith.constant 127 : i32
      %66 = tpu.dynamic_rotate %65 by %c127_i32 dim 1 : vector<8x128xf32>, i32 -> vector<8x128xf32>
      %c5 = arith.constant 5 : index
      %c0_42 = arith.constant 0 : index
      %c0_43 = arith.constant 0 : index
      %67 = vector.load %arg8[%c5, %c0_42, %c0_43] : memref<9x1x128xf32, #tpu.memory_space<vmem>>, vector<1x1x128xf32>
      %68 = vector.shape_cast %67 : vector<1x1x128xf32> to vector<1x128xf32>
      %69 = vector.broadcast %68 : vector<1x128xf32> to vector<8x128xf32>
      %70 = arith.mulf %66, %69 : vector<8x128xf32>
      %71 = arith.addf %64, %70 : vector<8x128xf32>
      %72 = vector.extract_strided_slice %29 {offsets = [48, 0], sizes = [8, 128], strides = [1, 1]} : vector<72x128xf32> to vector<8x128xf32>
      %c121_i32 = arith.constant 121 : i32
      %73 = tpu.dynamic_rotate %72 by %c121_i32 dim 1 : vector<8x128xf32>, i32 -> vector<8x128xf32>
      %c6 = arith.constant 6 : index
      %c0_44 = arith.constant 0 : index
      %c0_45 = arith.constant 0 : index
      %74 = vector.load %arg8[%c6, %c0_44, %c0_45] : memref<9x1x128xf32, #tpu.memory_space<vmem>>, vector<1x1x128xf32>
      %75 = vector.shape_cast %74 : vector<1x1x128xf32> to vector<1x128xf32>
      %76 = vector.broadcast %75 : vector<1x128xf32> to vector<8x128xf32>
      %77 = arith.mulf %73, %76 : vector<8x128xf32>
      %78 = arith.addf %71, %77 : vector<8x128xf32>
      %79 = vector.extract_strided_slice %29 {offsets = [56, 0], sizes = [8, 128], strides = [1, 1]} : vector<72x128xf32> to vector<8x128xf32>
      %c120_i32 = arith.constant 120 : i32
      %80 = tpu.dynamic_rotate %79 by %c120_i32 dim 1 : vector<8x128xf32>, i32 -> vector<8x128xf32>
      %c7 = arith.constant 7 : index
      %c0_46 = arith.constant 0 : index
      %c0_47 = arith.constant 0 : index
      %81 = vector.load %arg8[%c7, %c0_46, %c0_47] : memref<9x1x128xf32, #tpu.memory_space<vmem>>, vector<1x1x128xf32>
      %82 = vector.shape_cast %81 : vector<1x1x128xf32> to vector<1x128xf32>
      %83 = vector.broadcast %82 : vector<1x128xf32> to vector<8x128xf32>
      %84 = arith.mulf %80, %83 : vector<8x128xf32>
      %85 = arith.addf %78, %84 : vector<8x128xf32>
      %86 = vector.extract_strided_slice %29 {offsets = [64, 0], sizes = [8, 128], strides = [1, 1]} : vector<72x128xf32> to vector<8x128xf32>
      %c119_i32 = arith.constant 119 : i32
      %87 = tpu.dynamic_rotate %86 by %c119_i32 dim 1 : vector<8x128xf32>, i32 -> vector<8x128xf32>
      %c8 = arith.constant 8 : index
      %c0_48 = arith.constant 0 : index
      %c0_49 = arith.constant 0 : index
      %88 = vector.load %arg8[%c8, %c0_48, %c0_49] : memref<9x1x128xf32, #tpu.memory_space<vmem>>, vector<1x1x128xf32>
      %89 = vector.shape_cast %88 : vector<1x1x128xf32> to vector<1x128xf32>
      %90 = vector.broadcast %89 : vector<1x128xf32> to vector<8x128xf32>
      %91 = arith.mulf %87, %90 : vector<8x128xf32>
      %92 = arith.addf %85, %91 : vector<8x128xf32>
      %c0_50 = arith.constant 0 : index
      %c0_51 = arith.constant 0 : index
      %93 = vector.load %arg7[%c0_50, %c0_51] : memref<8x1xf32, #tpu.memory_space<vmem>>, vector<8x1xf32>
      %94 = vector.broadcast %93 : vector<8x1xf32> to vector<8x128xf32>
      %95 = arith.addf %92, %94 : vector<8x128xf32>
      %c0_52 = arith.constant 0 : index
      %c0_53 = arith.constant 0 : index
      %c0_54 = arith.constant 0 : index
      %96 = vector.load %arg10[%c0_52, %c0_53, %c0_54] : memref<1x8x128xf32, #tpu.memory_space<vmem>>, vector<1x8x128xf32>
      %97 = vector.shape_cast %96 : vector<1x8x128xf32> to vector<8x128xf32>
      %98 = vector.shape_cast %95 : vector<8x128xf32> to vector<1x8x128xf32>
      tpu.vector_store %arg10[%c0_52, %c0_53, %c0_54], %98 {strides = array<i32>} : memref<1x8x128xf32, #tpu.memory_space<vmem>>, vector<1x8x128xf32>,
    } else {
    }
    return
  }
  func.func @transform_0(%arg0: i32, %arg1: i32) -> (i32, i32, i32) {
    %c0_i32 = arith.constant 0 : i32
    %c0_i32_0 = arith.constant 0 : i32
    return %arg0, %arg1, %c0_i32 : i32, i32, i32
  }
  func.func @transform_1(%arg0: i32, %arg1: i32) -> (i32, i32) {
    %c0_i32 = arith.constant 0 : i32
    %c0_i32_0 = arith.constant 0 : i32
    return %c0_i32, %arg1 : i32, i32
  }
  func.func @transform_2(%arg0: i32, %arg1: i32) -> (i32, i32) {
    %c0_i32 = arith.constant 0 : i32
    %c0_i32_0 = arith.constant 0 : i32
    %c0_i32_1 = arith.constant 0 : i32
    return %c0_i32, %c0_i32_0 : i32, i32
  }
  func.func @transform_3(%arg0: i32, %arg1: i32) -> (i32, i32) {
    %c0_i32 = arith.constant 0 : i32
    %c0_i32_0 = arith.constant 0 : i32
    %c0_i32_1 = arith.constant 0 : i32
    return %c0_i32, %c0_i32_0 : i32, i32
  }
  func.func @transform_4(%arg0: i32, %arg1: i32) -> (i32, i32) {
    %c0_i32 = arith.constant 0 : i32
    %c0_i32_0 = arith.constant 0 : i32
    %c0_i32_1 = arith.constant 0 : i32
    return %c0_i32, %c0_i32_0 : i32, i32
  }
  func.func @transform_5(%arg0: i32, %arg1: i32) -> (i32, i32) {
    %c0_i32 = arith.constant 0 : i32
    %c0_i32_0 = arith.constant 0 : i32
    %c0_i32_1 = arith.constant 0 : i32
    return %c0_i32, %c0_i32_0 : i32, i32
  }
  func.func @transform_6(%arg0: i32, %arg1: i32) -> (i32, i32, i32) {
    %c0_i32 = arith.constant 0 : i32
    %c0_i32_0 = arith.constant 0 : i32
    %c0_i32_1 = arith.constant 0 : i32
    %c0_i32_2 = arith.constant 0 : i32
    return %c0_i32, %c0_i32_0, %c0_i32_1 : i32, i32, i32
  }
  func.func @transform_7(%arg0: i32, %arg1: i32) -> (i32, i32, i32) {
    %c0_i32 = arith.constant 0 : i32
    %c0_i32_0 = arith.constant 0 : i32
    %c0_i32_1 = arith.constant 0 : i32
    return %arg0, %c0_i32, %c0_i32_0 : i32, i32, i32
  }
  func.func @transform_8(%arg0: i32, %arg1: i32) -> (i32, i32, i32) {
    %c0_i32 = arith.constant 0 : i32
    %c0_i32_0 = arith.constant 0 : i32
    %c0_i32_1 = arith.constant 0 : i32
    return %arg0, %c0_i32, %c0_i32_0 : i32, i32, i32
  }
}

module attributes {stable_mosaic.version = 11 : i64} {
  func.func @_branch_kernel(%arg0: i32, %arg1: i32, %arg2: memref<1x16x256xbf16, #tpu.memory_space<vmem>>, %arg3: memref<32x16xbf16, #tpu.memory_space<vmem>>, %arg4: memref<32x1xf32, #tpu.memory_space<vmem>>, %arg5: memref<32x1xf32, #tpu.memory_space<vmem>>, %arg6: memref<72x32xbf16, #tpu.memory_space<vmem>>, %arg7: memref<8x1xf32, #tpu.memory_space<vmem>>, %arg8: memref<9x1x256xf32, #tpu.memory_space<vmem>>, %arg9: memref<1x32x256xbf16, #tpu.memory_space<vmem>>, %arg10: memref<1x8x256xf32, #tpu.memory_space<vmem>>, %arg11: memref<32x256xf32, #tpu.memory_space<vmem>>) attributes {dimension_semantics = [#tpu.dimension_semantics<parallel>, #tpu.dimension_semantics<arbitrary>], iteration_bounds = array<i64: 2, 1>, scalar_prefetch = 0 : i64, scratch_operands = 1 : i64, tpu.core_type = #tpu.core_type<tc>, window_params = [{transform_indices = @transform_0, window_bounds = array<i64: 1, 16, 256>}, {transform_indices = @transform_1, window_bounds = array<i64: 32, 16>}, {pipeline_mode = #tpu.pipeline_mode<synchronous>, transform_indices = @transform_2, window_bounds = array<i64: 32, 1>}, {pipeline_mode = #tpu.pipeline_mode<synchronous>, transform_indices = @transform_3, window_bounds = array<i64: 32, 1>}, {pipeline_mode = #tpu.pipeline_mode<synchronous>, transform_indices = @transform_4, window_bounds = array<i64: 72, 32>}, {pipeline_mode = #tpu.pipeline_mode<synchronous>, transform_indices = @transform_5, window_bounds = array<i64: 8, 1>}, {pipeline_mode = #tpu.pipeline_mode<synchronous>, transform_indices = @transform_6, window_bounds = array<i64: 9, 1, 256>}, {transform_indices = @transform_7, window_bounds = array<i64: 1, 32, 256>}, {transform_indices = @transform_8, window_bounds = array<i64: 1, 8, 256>}]} {
    %c0_i32 = arith.constant 0 : i32
    %0 = arith.cmpi eq, %arg1, %c0_i32 : i32
    %1 = arith.extui %0 : i1 to i32
    %c0_i32_0 = arith.constant 0 : i32
    %2 = arith.cmpi ne, %1, %c0_i32_0 : i32
    scf.if %2 {
      %cst_11 = arith.constant 0.000000e+00 : f32
      %13 = vector.broadcast %cst_11 : f32 to vector<32x256xf32>
      %c0_12 = arith.constant 0 : index
      %c0_13 = arith.constant 0 : index
      %14 = vector.load %arg11[%c0_12, %c0_13] : memref<32x256xf32, #tpu.memory_space<vmem>>, vector<32x256xf32>
      tpu.vector_store %arg11[%c0_12, %c0_13], %13 {strides = array<i32>} : memref<32x256xf32, #tpu.memory_space<vmem>>, vector<32x256xf32>,
    } else {
    }
    %c0 = arith.constant 0 : index
    %c0_1 = arith.constant 0 : index
    %3 = vector.load %arg11[%c0, %c0_1] : memref<32x256xf32, #tpu.memory_space<vmem>>, vector<32x256xf32>
    %c0_2 = arith.constant 0 : index
    %c0_3 = arith.constant 0 : index
    %4 = vector.load %arg3[%c0_2, %c0_3] : memref<32x16xbf16, #tpu.memory_space<vmem>>, vector<32x16xbf16>
    %c0_4 = arith.constant 0 : index
    %c0_5 = arith.constant 0 : index
    %c0_6 = arith.constant 0 : index
    %5 = vector.load %arg2[%c0_4, %c0_5, %c0_6] : memref<1x16x256xbf16, #tpu.memory_space<vmem>>, vector<1x16x256xbf16>
    %6 = vector.shape_cast %5 : vector<1x16x256xbf16> to vector<16x256xbf16>
    %cst = arith.constant dense<0.000000e+00> : vector<32x256xf32>
    %7 = tpu.matmul %4, %6, %cst {dimension_numbers = #tpu.dot_dimension_numbers<[1], [0], [0], [1], [0, 0, 1, 1], [], []>} : vector<32x16xbf16>, vector<16x256xbf16>, vector<32x256xf32> -> vector<32x256xf32>
    %8 = arith.addf %3, %7 : vector<32x256xf32>
    %c0_7 = arith.constant 0 : index
    %c0_8 = arith.constant 0 : index
    %9 = vector.load %arg11[%c0_7, %c0_8] : memref<32x256xf32, #tpu.memory_space<vmem>>, vector<32x256xf32>
    tpu.vector_store %arg11[%c0_7, %c0_8], %8 {strides = array<i32>} : memref<32x256xf32, #tpu.memory_space<vmem>>, vector<32x256xf32>,
    %c0_i32_9 = arith.constant 0 : i32
    %10 = arith.cmpi eq, %arg1, %c0_i32_9 : i32
    %11 = arith.extui %10 : i1 to i32
    %c0_i32_10 = arith.constant 0 : i32
    %12 = arith.cmpi ne, %11, %c0_i32_10 : i32
    scf.if %12 {
      %c0_11 = arith.constant 0 : index
      %c0_12 = arith.constant 0 : index
      %13 = vector.load %arg11[%c0_11, %c0_12] : memref<32x256xf32, #tpu.memory_space<vmem>>, vector<32x256xf32>
      %c0_13 = arith.constant 0 : index
      %c0_14 = arith.constant 0 : index
      %14 = vector.load %arg4[%c0_13, %c0_14] : memref<32x1xf32, #tpu.memory_space<vmem>>, vector<32x1xf32>
      %15 = vector.broadcast %14 : vector<32x1xf32> to vector<32x256xf32>
      %16 = arith.mulf %13, %15 : vector<32x256xf32>
      %c0_15 = arith.constant 0 : index
      %c0_16 = arith.constant 0 : index
      %17 = vector.load %arg5[%c0_15, %c0_16] : memref<32x1xf32, #tpu.memory_space<vmem>>, vector<32x1xf32>
      %18 = vector.broadcast %17 : vector<32x1xf32> to vector<32x256xf32>
      %19 = arith.addf %16, %18 : vector<32x256xf32>
      %c0_17 = arith.constant 0 : index
      %c0_18 = arith.constant 0 : index
      %20 = vector.load %arg11[%c0_17, %c0_18] : memref<32x256xf32, #tpu.memory_space<vmem>>, vector<32x256xf32>
      tpu.vector_store %arg11[%c0_17, %c0_18], %19 {strides = array<i32>} : memref<32x256xf32, #tpu.memory_space<vmem>>, vector<32x256xf32>,
      %c0_19 = arith.constant 0 : index
      %c0_20 = arith.constant 0 : index
      %21 = vector.load %arg11[%c0_19, %c0_20] : memref<32x256xf32, #tpu.memory_space<vmem>>, vector<32x256xf32>
      %22 = arith.truncf %21 : vector<32x256xf32> to vector<32x256xbf16>
      %c0_21 = arith.constant 0 : index
      %c0_22 = arith.constant 0 : index
      %c0_23 = arith.constant 0 : index
      %23 = vector.load %arg9[%c0_21, %c0_22, %c0_23] : memref<1x32x256xbf16, #tpu.memory_space<vmem>>, vector<1x32x256xbf16>
      %24 = vector.shape_cast %23 : vector<1x32x256xbf16> to vector<32x256xbf16>
      %25 = vector.shape_cast %22 : vector<32x256xbf16> to vector<1x32x256xbf16>
      tpu.vector_store %arg9[%c0_21, %c0_22, %c0_23], %25 {strides = array<i32>} : memref<1x32x256xbf16, #tpu.memory_space<vmem>>, vector<1x32x256xbf16>,
      %c0_24 = arith.constant 0 : index
      %c0_25 = arith.constant 0 : index
      %26 = vector.load %arg6[%c0_24, %c0_25] : memref<72x32xbf16, #tpu.memory_space<vmem>>, vector<72x32xbf16>
      %c0_26 = arith.constant 0 : index
      %c0_27 = arith.constant 0 : index
      %c0_28 = arith.constant 0 : index
      %27 = vector.load %arg9[%c0_26, %c0_27, %c0_28] : memref<1x32x256xbf16, #tpu.memory_space<vmem>>, vector<1x32x256xbf16>
      %28 = vector.shape_cast %27 : vector<1x32x256xbf16> to vector<32x256xbf16>
      %cst_29 = arith.constant dense<0.000000e+00> : vector<72x256xf32>
      %29 = tpu.matmul %26, %28, %cst_29 {dimension_numbers = #tpu.dot_dimension_numbers<[1], [0], [0], [1], [0, 0, 1, 1], [], []>} : vector<72x32xbf16>, vector<32x256xbf16>, vector<72x256xf32> -> vector<72x256xf32>
      %cst_30 = arith.constant 0.000000e+00 : f32
      %30 = vector.broadcast %cst_30 : f32 to vector<8x256xf32>
      %31 = vector.extract_strided_slice %29 {offsets = [0, 0], sizes = [8, 256], strides = [1, 1]} : vector<72x256xf32> to vector<8x256xf32>
      %c17_i32 = arith.constant 17 : i32
      %32 = tpu.dynamic_rotate %31 by %c17_i32 dim 1 : vector<8x256xf32>, i32 -> vector<8x256xf32>
      %c0_31 = arith.constant 0 : index
      %c0_32 = arith.constant 0 : index
      %c0_33 = arith.constant 0 : index
      %33 = vector.load %arg8[%c0_31, %c0_32, %c0_33] : memref<9x1x256xf32, #tpu.memory_space<vmem>>, vector<1x1x256xf32>
      %34 = vector.shape_cast %33 : vector<1x1x256xf32> to vector<1x256xf32>
      %35 = vector.broadcast %34 : vector<1x256xf32> to vector<8x256xf32>
      %36 = arith.mulf %32, %35 : vector<8x256xf32>
      %37 = arith.addf %30, %36 : vector<8x256xf32>
      %38 = vector.extract_strided_slice %29 {offsets = [8, 0], sizes = [8, 256], strides = [1, 1]} : vector<72x256xf32> to vector<8x256xf32>
      %c16_i32 = arith.constant 16 : i32
      %39 = tpu.dynamic_rotate %38 by %c16_i32 dim 1 : vector<8x256xf32>, i32 -> vector<8x256xf32>
      %c1 = arith.constant 1 : index
      %c0_34 = arith.constant 0 : index
      %c0_35 = arith.constant 0 : index
      %40 = vector.load %arg8[%c1, %c0_34, %c0_35] : memref<9x1x256xf32, #tpu.memory_space<vmem>>, vector<1x1x256xf32>
      %41 = vector.shape_cast %40 : vector<1x1x256xf32> to vector<1x256xf32>
      %42 = vector.broadcast %41 : vector<1x256xf32> to vector<8x256xf32>
      %43 = arith.mulf %39, %42 : vector<8x256xf32>
      %44 = arith.addf %37, %43 : vector<8x256xf32>
      %45 = vector.extract_strided_slice %29 {offsets = [16, 0], sizes = [8, 256], strides = [1, 1]} : vector<72x256xf32> to vector<8x256xf32>
      %c15_i32 = arith.constant 15 : i32
      %46 = tpu.dynamic_rotate %45 by %c15_i32 dim 1 : vector<8x256xf32>, i32 -> vector<8x256xf32>
      %c2 = arith.constant 2 : index
      %c0_36 = arith.constant 0 : index
      %c0_37 = arith.constant 0 : index
      %47 = vector.load %arg8[%c2, %c0_36, %c0_37] : memref<9x1x256xf32, #tpu.memory_space<vmem>>, vector<1x1x256xf32>
      %48 = vector.shape_cast %47 : vector<1x1x256xf32> to vector<1x256xf32>
      %49 = vector.broadcast %48 : vector<1x256xf32> to vector<8x256xf32>
      %50 = arith.mulf %46, %49 : vector<8x256xf32>
      %51 = arith.addf %44, %50 : vector<8x256xf32>
      %52 = vector.extract_strided_slice %29 {offsets = [24, 0], sizes = [8, 256], strides = [1, 1]} : vector<72x256xf32> to vector<8x256xf32>
      %c1_i32 = arith.constant 1 : i32
      %53 = tpu.dynamic_rotate %52 by %c1_i32 dim 1 : vector<8x256xf32>, i32 -> vector<8x256xf32>
      %c3 = arith.constant 3 : index
      %c0_38 = arith.constant 0 : index
      %c0_39 = arith.constant 0 : index
      %54 = vector.load %arg8[%c3, %c0_38, %c0_39] : memref<9x1x256xf32, #tpu.memory_space<vmem>>, vector<1x1x256xf32>
      %55 = vector.shape_cast %54 : vector<1x1x256xf32> to vector<1x256xf32>
      %56 = vector.broadcast %55 : vector<1x256xf32> to vector<8x256xf32>
      %57 = arith.mulf %53, %56 : vector<8x256xf32>
      %58 = arith.addf %51, %57 : vector<8x256xf32>
      %59 = vector.extract_strided_slice %29 {offsets = [32, 0], sizes = [8, 256], strides = [1, 1]} : vector<72x256xf32> to vector<8x256xf32>
      %c4 = arith.constant 4 : index
      %c0_40 = arith.constant 0 : index
      %c0_41 = arith.constant 0 : index
      %60 = vector.load %arg8[%c4, %c0_40, %c0_41] : memref<9x1x256xf32, #tpu.memory_space<vmem>>, vector<1x1x256xf32>
      %61 = vector.shape_cast %60 : vector<1x1x256xf32> to vector<1x256xf32>
      %62 = vector.broadcast %61 : vector<1x256xf32> to vector<8x256xf32>
      %63 = arith.mulf %59, %62 : vector<8x256xf32>
      %64 = arith.addf %58, %63 : vector<8x256xf32>
      %65 = vector.extract_strided_slice %29 {offsets = [40, 0], sizes = [8, 256], strides = [1, 1]} : vector<72x256xf32> to vector<8x256xf32>
      %c255_i32 = arith.constant 255 : i32
      %66 = tpu.dynamic_rotate %65 by %c255_i32 dim 1 : vector<8x256xf32>, i32 -> vector<8x256xf32>
      %c5 = arith.constant 5 : index
      %c0_42 = arith.constant 0 : index
      %c0_43 = arith.constant 0 : index
      %67 = vector.load %arg8[%c5, %c0_42, %c0_43] : memref<9x1x256xf32, #tpu.memory_space<vmem>>, vector<1x1x256xf32>
      %68 = vector.shape_cast %67 : vector<1x1x256xf32> to vector<1x256xf32>
      %69 = vector.broadcast %68 : vector<1x256xf32> to vector<8x256xf32>
      %70 = arith.mulf %66, %69 : vector<8x256xf32>
      %71 = arith.addf %64, %70 : vector<8x256xf32>
      %72 = vector.extract_strided_slice %29 {offsets = [48, 0], sizes = [8, 256], strides = [1, 1]} : vector<72x256xf32> to vector<8x256xf32>
      %c241_i32 = arith.constant 241 : i32
      %73 = tpu.dynamic_rotate %72 by %c241_i32 dim 1 : vector<8x256xf32>, i32 -> vector<8x256xf32>
      %c6 = arith.constant 6 : index
      %c0_44 = arith.constant 0 : index
      %c0_45 = arith.constant 0 : index
      %74 = vector.load %arg8[%c6, %c0_44, %c0_45] : memref<9x1x256xf32, #tpu.memory_space<vmem>>, vector<1x1x256xf32>
      %75 = vector.shape_cast %74 : vector<1x1x256xf32> to vector<1x256xf32>
      %76 = vector.broadcast %75 : vector<1x256xf32> to vector<8x256xf32>
      %77 = arith.mulf %73, %76 : vector<8x256xf32>
      %78 = arith.addf %71, %77 : vector<8x256xf32>
      %79 = vector.extract_strided_slice %29 {offsets = [56, 0], sizes = [8, 256], strides = [1, 1]} : vector<72x256xf32> to vector<8x256xf32>
      %c240_i32 = arith.constant 240 : i32
      %80 = tpu.dynamic_rotate %79 by %c240_i32 dim 1 : vector<8x256xf32>, i32 -> vector<8x256xf32>
      %c7 = arith.constant 7 : index
      %c0_46 = arith.constant 0 : index
      %c0_47 = arith.constant 0 : index
      %81 = vector.load %arg8[%c7, %c0_46, %c0_47] : memref<9x1x256xf32, #tpu.memory_space<vmem>>, vector<1x1x256xf32>
      %82 = vector.shape_cast %81 : vector<1x1x256xf32> to vector<1x256xf32>
      %83 = vector.broadcast %82 : vector<1x256xf32> to vector<8x256xf32>
      %84 = arith.mulf %80, %83 : vector<8x256xf32>
      %85 = arith.addf %78, %84 : vector<8x256xf32>
      %86 = vector.extract_strided_slice %29 {offsets = [64, 0], sizes = [8, 256], strides = [1, 1]} : vector<72x256xf32> to vector<8x256xf32>
      %c239_i32 = arith.constant 239 : i32
      %87 = tpu.dynamic_rotate %86 by %c239_i32 dim 1 : vector<8x256xf32>, i32 -> vector<8x256xf32>
      %c8 = arith.constant 8 : index
      %c0_48 = arith.constant 0 : index
      %c0_49 = arith.constant 0 : index
      %88 = vector.load %arg8[%c8, %c0_48, %c0_49] : memref<9x1x256xf32, #tpu.memory_space<vmem>>, vector<1x1x256xf32>
      %89 = vector.shape_cast %88 : vector<1x1x256xf32> to vector<1x256xf32>
      %90 = vector.broadcast %89 : vector<1x256xf32> to vector<8x256xf32>
      %91 = arith.mulf %87, %90 : vector<8x256xf32>
      %92 = arith.addf %85, %91 : vector<8x256xf32>
      %c0_50 = arith.constant 0 : index
      %c0_51 = arith.constant 0 : index
      %93 = vector.load %arg7[%c0_50, %c0_51] : memref<8x1xf32, #tpu.memory_space<vmem>>, vector<8x1xf32>
      %94 = vector.broadcast %93 : vector<8x1xf32> to vector<8x256xf32>
      %95 = arith.addf %92, %94 : vector<8x256xf32>
      %c0_52 = arith.constant 0 : index
      %c0_53 = arith.constant 0 : index
      %c0_54 = arith.constant 0 : index
      %96 = vector.load %arg10[%c0_52, %c0_53, %c0_54] : memref<1x8x256xf32, #tpu.memory_space<vmem>>, vector<1x8x256xf32>
      %97 = vector.shape_cast %96 : vector<1x8x256xf32> to vector<8x256xf32>
      %98 = vector.shape_cast %95 : vector<8x256xf32> to vector<1x8x256xf32>
      tpu.vector_store %arg10[%c0_52, %c0_53, %c0_54], %98 {strides = array<i32>} : memref<1x8x256xf32, #tpu.memory_space<vmem>>, vector<1x8x256xf32>,
    } else {
    }
    return
  }
  func.func @transform_0(%arg0: i32, %arg1: i32) -> (i32, i32, i32) {
    %c0_i32 = arith.constant 0 : i32
    %c0_i32_0 = arith.constant 0 : i32
    return %arg0, %arg1, %c0_i32 : i32, i32, i32
  }
  func.func @transform_1(%arg0: i32, %arg1: i32) -> (i32, i32) {
    %c0_i32 = arith.constant 0 : i32
    %c0_i32_0 = arith.constant 0 : i32
    return %c0_i32, %arg1 : i32, i32
  }
  func.func @transform_2(%arg0: i32, %arg1: i32) -> (i32, i32) {
    %c0_i32 = arith.constant 0 : i32
    %c0_i32_0 = arith.constant 0 : i32
    %c0_i32_1 = arith.constant 0 : i32
    return %c0_i32, %c0_i32_0 : i32, i32
  }
  func.func @transform_3(%arg0: i32, %arg1: i32) -> (i32, i32) {
    %c0_i32 = arith.constant 0 : i32
    %c0_i32_0 = arith.constant 0 : i32
    %c0_i32_1 = arith.constant 0 : i32
    return %c0_i32, %c0_i32_0 : i32, i32
  }
  func.func @transform_4(%arg0: i32, %arg1: i32) -> (i32, i32) {
    %c0_i32 = arith.constant 0 : i32
    %c0_i32_0 = arith.constant 0 : i32
    %c0_i32_1 = arith.constant 0 : i32
    return %c0_i32, %c0_i32_0 : i32, i32
  }
  func.func @transform_5(%arg0: i32, %arg1: i32) -> (i32, i32) {
    %c0_i32 = arith.constant 0 : i32
    %c0_i32_0 = arith.constant 0 : i32
    %c0_i32_1 = arith.constant 0 : i32
    return %c0_i32, %c0_i32_0 : i32, i32
  }
  func.func @transform_6(%arg0: i32, %arg1: i32) -> (i32, i32, i32) {
    %c0_i32 = arith.constant 0 : i32
    %c0_i32_0 = arith.constant 0 : i32
    %c0_i32_1 = arith.constant 0 : i32
    %c0_i32_2 = arith.constant 0 : i32
    return %c0_i32, %c0_i32_0, %c0_i32_1 : i32, i32, i32
  }
  func.func @transform_7(%arg0: i32, %arg1: i32) -> (i32, i32, i32) {
    %c0_i32 = arith.constant 0 : i32
    %c0_i32_0 = arith.constant 0 : i32
    %c0_i32_1 = arith.constant 0 : i32
    return %arg0, %c0_i32, %c0_i32_0 : i32, i32, i32
  }
  func.func @transform_8(%arg0: i32, %arg1: i32) -> (i32, i32, i32) {
    %c0_i32 = arith.constant 0 : i32
    %c0_i32_0 = arith.constant 0 : i32
    %c0_i32_1 = arith.constant 0 : i32
    return %arg0, %c0_i32, %c0_i32_0 : i32, i32, i32
  }
}

module attributes {stable_mosaic.version = 11 : i64} {
  func.func @_pointwise_kernel(%arg0: i32, %arg1: memref<1x6x256xbf16, #tpu.memory_space<vmem>>, %arg2: memref<8x6xbf16, #tpu.memory_space<vmem>>, %arg3: memref<8x1xf32, #tpu.memory_space<vmem>>, %arg4: memref<1x8x256xf32, #tpu.memory_space<vmem>>) attributes {dimension_semantics = [#tpu.dimension_semantics<parallel>], iteration_bounds = array<i64: 2>, scalar_prefetch = 0 : i64, scratch_operands = 0 : i64, tpu.core_type = #tpu.core_type<tc>, window_params = [{transform_indices = @transform_0, window_bounds = array<i64: 1, 6, 256>}, {pipeline_mode = #tpu.pipeline_mode<synchronous>, transform_indices = @transform_1, window_bounds = array<i64: 8, 6>}, {pipeline_mode = #tpu.pipeline_mode<synchronous>, transform_indices = @transform_2, window_bounds = array<i64: 8, 1>}, {transform_indices = @transform_3, window_bounds = array<i64: 1, 8, 256>}]} {
    %c0 = arith.constant 0 : index
    %c0_0 = arith.constant 0 : index
    %0 = vector.load %arg2[%c0, %c0_0] : memref<8x6xbf16, #tpu.memory_space<vmem>>, vector<8x6xbf16>
    %c0_1 = arith.constant 0 : index
    %c0_2 = arith.constant 0 : index
    %c0_3 = arith.constant 0 : index
    %1 = vector.load %arg1[%c0_1, %c0_2, %c0_3] : memref<1x6x256xbf16, #tpu.memory_space<vmem>>, vector<1x6x256xbf16>
    %2 = vector.shape_cast %1 : vector<1x6x256xbf16> to vector<6x256xbf16>
    %cst = arith.constant dense<0.000000e+00> : vector<8x256xf32>
    %3 = tpu.matmul %0, %2, %cst {dimension_numbers = #tpu.dot_dimension_numbers<[1], [0], [0], [1], [0, 0, 1, 1], [], []>} : vector<8x6xbf16>, vector<6x256xbf16>, vector<8x256xf32> -> vector<8x256xf32>
    %c0_4 = arith.constant 0 : index
    %c0_5 = arith.constant 0 : index
    %4 = vector.load %arg3[%c0_4, %c0_5] : memref<8x1xf32, #tpu.memory_space<vmem>>, vector<8x1xf32>
    %5 = vector.broadcast %4 : vector<8x1xf32> to vector<8x256xf32>
    %6 = arith.addf %3, %5 : vector<8x256xf32>
    %c0_6 = arith.constant 0 : index
    %c0_7 = arith.constant 0 : index
    %c0_8 = arith.constant 0 : index
    %7 = vector.load %arg4[%c0_6, %c0_7, %c0_8] : memref<1x8x256xf32, #tpu.memory_space<vmem>>, vector<1x8x256xf32>
    %8 = vector.shape_cast %7 : vector<1x8x256xf32> to vector<8x256xf32>
    %9 = vector.shape_cast %6 : vector<8x256xf32> to vector<1x8x256xf32>
    tpu.vector_store %arg4[%c0_6, %c0_7, %c0_8], %9 {strides = array<i32>} : memref<1x8x256xf32, #tpu.memory_space<vmem>>, vector<1x8x256xf32>,
    return
  }
  func.func @transform_0(%arg0: i32) -> (i32, i32, i32) {
    %c0_i32 = arith.constant 0 : i32
    %c0_i32_0 = arith.constant 0 : i32
    %c0_i32_1 = arith.constant 0 : i32
    return %arg0, %c0_i32, %c0_i32_0 : i32, i32, i32
  }
  func.func @transform_1(%arg0: i32) -> (i32, i32) {
    %c0_i32 = arith.constant 0 : i32
    %c0_i32_0 = arith.constant 0 : i32
    %c0_i32_1 = arith.constant 0 : i32
    return %c0_i32, %c0_i32_0 : i32, i32
  }
  func.func @transform_2(%arg0: i32) -> (i32, i32) {
    %c0_i32 = arith.constant 0 : i32
    %c0_i32_0 = arith.constant 0 : i32
    %c0_i32_1 = arith.constant 0 : i32
    return %c0_i32, %c0_i32_0 : i32, i32
  }
  func.func @transform_3(%arg0: i32) -> (i32, i32, i32) {
    %c0_i32 = arith.constant 0 : i32
    %c0_i32_0 = arith.constant 0 : i32
    %c0_i32_1 = arith.constant 0 : i32
    return %arg0, %c0_i32, %c0_i32_0 : i32, i32, i32
  }
}

</mosaic_0001>

<llo_original>
// kernel: edge_module_forward.6
$region0: #{edge_module_forward.6}
  #allocation0 [shape = 'u32[]', space=smem, size = 0x4, offset = 0x4, fixed_abs, tag = 'smem constant byte address 0x4 - core index']
  #allocation1 [shape = 'u32[72,128]{1,0:T(1,128)}', space=vmem, size = 0x9000, scoped, tag = 'internal scratch']
  #allocation2 [shape = 'f32[32,128]{1,0:T(8,128)}', space=vmem, size = 0x4000, scoped, tag = 'scratch operand']
  %s0 = inlined_call_operand.vmem [shape: bf16[2,64,128], index: 0, kind: input, shape index: {}]
  %s1 = inlined_call_operand.vmem [shape: bf16[32,64], index: 1, kind: input, shape index: {}]
  %s2 = inlined_call_operand.vmem [shape: f32[32,1], index: 2, kind: input, shape index: {}]
  %s3 = inlined_call_operand.vmem [shape: f32[32,1], index: 3, kind: input, shape index: {}]
  %s4 = inlined_call_operand.vmem [shape: bf16[72,32], index: 4, kind: input, shape index: {}]
  %s5 = inlined_call_operand.vmem [shape: f32[8,1], index: 5, kind: input, shape index: {}]
  %s6 = inlined_call_operand.vmem [shape: f32[9,1,128], index: 6, kind: input, shape index: {}]
  %s7 = inlined_call_operand.vmem [shape: bf16[2,32,128], index: 7, kind: output, shape index: {0}]
  %s8 = inlined_call_operand.vmem [shape: f32[2,8,128], index: 8, kind: output, shape index: {1}]
  %9 = xla_tuple %s7, %s8
  %s10 = sld [smem:[#allocation0]]
  $region77: #{edge_module_forward.6} parent=0
    _
  %s12 = ssub.s32 1, %s10
  %s13 = scalar_select 0, %s12, %s10
  loop: start=0, step=1, limit=4
  $region2: #{edge_module_forward.6} parent=0 // loop_pre_header
    _
  $region3: #{edge_module_forward.6} parent=0 // loop_header
    %s15 = sphi 0, %s19
    %p16 = scmp.ge.s32.totalorder %s15, 4
    %s22 = sphi 0, %s34
    %s23 = sphi 0, %s30
    %s24 = sphi 0, %s22
    %s25 = sphi 0, %s23
    %s26 = sphi 0, %s24
    %s27 = sphi 0, %s25
    %s39 = sphi 0, %s41
    %s42 = sphi 0, %s39
    %s43 = sphi 0, %s42
    %s59 = sphi 0, %s43
    %s65 = sphi 0, %s67
    %s68 = sphi 0, %s65
    %s69 = sphi 0, %s68
    %s85 = sphi 0, %s69
    %s89 = sphi 0, %s89
    %s91 = sphi 0, %s89
    %s92 = sphi 0, %s91
    %s106 = sphi 0, %s92
    %s110 = sphi 0, %s110
    %s112 = sphi 0, %s110
    %s113 = sphi 0, %s112
    %s127 = sphi 0, %s113
    %s131 = sphi 0, %s131
    %s133 = sphi 0, %s131
    %s134 = sphi 0, %s133
    %s148 = sphi 0, %s134
    %s152 = sphi 0, %s152
    %s154 = sphi 0, %s152
    %s155 = sphi 0, %s154
    %s169 = sphi 0, %s155
    %s173 = sphi 0, %s173
    %s175 = sphi 0, %s173
    %s176 = sphi 0, %s175
    %s190 = sphi 0, %s176
    %s196 = sphi 0, %s198
    %s199 = sphi 0, %s196
    %s200 = sphi 0, %s199
    %s216 = sphi 0, %s200
    %s222 = sphi 0, %s224
    %s225 = sphi 0, %s222
    %s226 = sphi 0, %s225
    %s242 = sphi 0, %s226
  $region4: #{edge_module_forward.6} parent=0 // loop_header_branch
    %18 = sbr.rel (%p16) target = $region8
  $region5: #{edge_module_forward.6} parent=0 // loop_body
    %s20 = ssub.s32 %s15, 1
    %s21 = ssub.s32 %s15, 2
    %s28 = sadd.s32 1, %s23
    %p29 = scmp.ge.s32.totalorder %s28, 1
    %s30 = scalar_select %p29, 0, %s28
    %s31 = sadd.s32 1, %s22
    %s32 = scalar_select %p29, %s31, %s22
    %p33 = scmp.ge.s32.totalorder %s32, 2
    %s34 = scalar_select %p33, 0, %s32
    %s35 = ssub.s32 %s22, %s34
    %s36 = ssub.s32 %s23, %s30
    %s37 = sor.u32 %s35, %s36
    %p38 = scmp.eq.s32.totalorder %s37, 0
    %s40 = sadd.s32 %s39, 1
    %s41 = scalar_select %p38, %s39, %s40
    %p44 = pneg %p38
    %p45 = scmp.eq.s32.totalorder %s15, 1
    %p46 = por %p44, %p45
    %p47 = scmp.ne.s32.totalorder %s39, %s42
    %p48 = scmp.eq.s32.totalorder %s15, 0
    %p49 = por %p47, %p48
    %p50 = scmp.ne.s32.totalorder %s39, %s42
    %p51 = scmp.eq.s32.totalorder %s20, 1
    %p52 = por %p50, %p51
    %p53 = scmp.ne.s32.totalorder %s42, %s43
    %p54 = scmp.eq.s32.totalorder %s20, 0
    %p55 = por %p53, %p54
    %p56 = scmp.ne.s32.totalorder %s42, %s43
    %p57 = scmp.eq.s32.totalorder %s21, 1
    %p58 = por %p56, %p57
    %p60 = scmp.ne.s32.totalorder %s43, %s59
    %p61 = scmp.eq.s32.totalorder %s21, 0
    %p62 = por %p60, %p61
    %s63 = ssub.s32 %s23, %s30
    %p64 = scmp.eq.s32.totalorder %s63, 0
    %s66 = sadd.s32 %s65, 1
    %s67 = scalar_select %p64, %s65, %s66
    %p70 = pneg %p64
    %p71 = scmp.eq.s32.totalorder %s15, 1
    %p72 = por %p70, %p71
    %p73 = scmp.ne.s32.totalorder %s65, %s68
    %p74 = scmp.eq.s32.totalorder %s15, 0
    %p75 = por %p73, %p74
    %p76 = scmp.ne.s32.totalorder %s65, %s68
    %p77 = scmp.eq.s32.totalorder %s20, 1
    %p78 = por %p76, %p77
    %p79 = scmp.ne.s32.totalorder %s68, %s69
    %p80 = scmp.eq.s32.totalorder %s20, 0
    %p81 = por %p79, %p80
    %p82 = scmp.ne.s32.totalorder %s68, %s69
    %p83 = scmp.eq.s32.totalorder %s21, 1
    %p84 = por %p82, %p83
    %p86 = scmp.ne.s32.totalorder %s69, %s85
    %p87 = scmp.eq.s32.totalorder %s21, 0
    %p88 = por %p86, %p87
    %s90 = sadd.s32 %s89, 1
    %p93 = scmp.eq.s32.totalorder %s15, 1
    %p94 = scmp.ne.s32.totalorder %s89, %s91
    %p95 = scmp.eq.s32.totalorder %s15, 0
    %p96 = por %p94, %p95
    %p97 = scmp.ne.s32.totalorder %s89, %s91
    %p98 = scmp.eq.s32.totalorder %s20, 1
    %p99 = por %p97, %p98
    %p100 = scmp.ne.s32.totalorder %s91, %s92
    %p101 = scmp.eq.s32.totalorder %s20, 0
    %p102 = por %p100, %p101
    %p103 = scmp.ne.s32.totalorder %s91, %s92
    %p104 = scmp.eq.s32.totalorder %s21, 1
    %p105 = por %p103, %p104
    %p107 = scmp.ne.s32.totalorder %s92, %s106
    %p108 = scmp.eq.s32.totalorder %s21, 0
    %p109 = por %p107, %p108
    %s111 = sadd.s32 %s110, 1
    %p114 = scmp.eq.s32.totalorder %s15, 1
    %p115 = scmp.ne.s32.totalorder %s110, %s112
    %p116 = scmp.eq.s32.totalorder %s15, 0
    %p117 = por %p115, %p116
    %p118 = scmp.ne.s32.totalorder %s110, %s112
    %p119 = scmp.eq.s32.totalorder %s20, 1
    %p120 = por %p118, %p119
    %p121 = scmp.ne.s32.totalorder %s112, %s113
    %p122 = scmp.eq.s32.totalorder %s20, 0
    %p123 = por %p121, %p122
    %p124 = scmp.ne.s32.totalorder %s112, %s113
    %p125 = scmp.eq.s32.totalorder %s21, 1
    %p126 = por %p124, %p125
    %p128 = scmp.ne.s32.totalorder %s113, %s127
    %p129 = scmp.eq.s32.totalorder %s21, 0
    %p130 = por %p128, %p129
    %s132 = sadd.s32 %s131, 1
    %p135 = scmp.eq.s32.totalorder %s15, 1
    %p136 = scmp.ne.s32.totalorder %s131, %s133
    %p137 = scmp.eq.s32.totalorder %s15, 0
    %p138 = por %p136, %p137
    %p139 = scmp.ne.s32.totalorder %s131, %s133
    %p140 = scmp.eq.s32.totalorder %s20, 1
    %p141 = por %p139, %p140
    %p142 = scmp.ne.s32.totalorder %s133, %s134
    %p143 = scmp.eq.s32.totalorder %s20, 0
    %p144 = por %p142, %p143
    %p145 = scmp.ne.s32.totalorder %s133, %s134
    %p146 = scmp.eq.s32.totalorder %s21, 1
    %p147 = por %p145, %p146
    %p149 = scmp.ne.s32.totalorder %s134, %s148
    %p150 = scmp.eq.s32.totalorder %s21, 0
    %p151 = por %p149, %p150
    %s153 = sadd.s32 %s152, 1
    %p156 = scmp.eq.s32.totalorder %s15, 1
    %p157 = scmp.ne.s32.totalorder %s152, %s154
    %p158 = scmp.eq.s32.totalorder %s15, 0
    %p159 = por %p157, %p158
    %p160 = scmp.ne.s32.totalorder %s152, %s154
    %p161 = scmp.eq.s32.totalorder %s20, 1
    %p162 = por %p160, %p161
    %p163 = scmp.ne.s32.totalorder %s154, %s155
    %p164 = scmp.eq.s32.totalorder %s20, 0
    %p165 = por %p163, %p164
    %p166 = scmp.ne.s32.totalorder %s154, %s155
    %p167 = scmp.eq.s32.totalorder %s21, 1
    %p168 = por %p166, %p167
    %p170 = scmp.ne.s32.totalorder %s155, %s169
    %p171 = scmp.eq.s32.totalorder %s21, 0
    %p172 = por %p170, %p171
    %s174 = sadd.s32 %s173, 1
    %p177 = scmp.eq.s32.totalorder %s15, 1
    %p178 = scmp.ne.s32.totalorder %s173, %s175
    %p179 = scmp.eq.s32.totalorder %s15, 0
    %p180 = por %p178, %p179
    %p181 = scmp.ne.s32.totalorder %s173, %s175
    %p182 = scmp.eq.s32.totalorder %s20, 1
    %p183 = por %p181, %p182
    %p184 = scmp.ne.s32.totalorder %s175, %s176
    %p185 = scmp.eq.s32.totalorder %s20, 0
    %p186 = por %p184, %p185
    %p187 = scmp.ne.s32.totalorder %s175, %s176
    %p188 = scmp.eq.s32.totalorder %s21, 1
    %p189 = por %p187, %p188
    %p191 = scmp.ne.s32.totalorder %s176, %s190
    %p192 = scmp.eq.s32.totalorder %s21, 0
    %p193 = por %p191, %p192
    %s194 = ssub.s32 %s22, %s34
    %p195 = scmp.eq.s32.totalorder %s194, 0
    %s197 = sadd.s32 %s196, 1
    %s198 = scalar_select %p195, %s196, %s197
    %p201 = pneg %p195
    %p202 = scmp.eq.s32.totalorder %s15, 1
    %p203 = por %p201, %p202
    %p204 = scmp.ne.s32.totalorder %s196, %s199
    %p205 = scmp.eq.s32.totalorder %s15, 0
    %p206 = por %p204, %p205
    %p207 = scmp.ne.s32.totalorder %s196, %s199
    %p208 = scmp.eq.s32.totalorder %s20, 1
    %p209 = por %p207, %p208
    %p210 = scmp.ne.s32.totalorder %s199, %s200
    %p211 = scmp.eq.s32.totalorder %s20, 0
    %p212 = por %p210, %p211
    %p213 = scmp.ne.s32.totalorder %s199, %s200
    %p214 = scmp.eq.s32.totalorder %s21, 1
    %p215 = por %p213, %p214
    %p217 = scmp.ne.s32.totalorder %s200, %s216
    %p218 = scmp.eq.s32.totalorder %s21, 0
    %p219 = por %p217, %p218
    %s220 = ssub.s32 %s22, %s34
    %p221 = scmp.eq.s32.totalorder %s220, 0
    %s223 = sadd.s32 %s222, 1
    %s224 = scalar_select %p221, %s222, %s223
    %p227 = pneg %p221
    %p228 = scmp.eq.s32.totalorder %s15, 1
    %p229 = por %p227, %p228
    %p230 = scmp.ne.s32.totalorder %s222, %s225
    %p231 = scmp.eq.s32.totalorder %s15, 0
    %p232 = por %p230, %p231
    %p233 = scmp.ne.s32.totalorder %s222, %s225
    %p234 = scmp.eq.s32.totalorder %s20, 1
    %p235 = por %p233, %p234
    %p236 = scmp.ne.s32.totalorder %s225, %s226
    %p237 = scmp.eq.s32.totalorder %s20, 0
    %p238 = por %p236, %p237
    %p239 = scmp.ne.s32.totalorder %s225, %s226
    %p240 = scmp.eq.s32.totalorder %s21, 1
    %p241 = por %p239, %p240
    %p243 = scmp.ne.s32.totalorder %s226, %s242
    %p244 = scmp.eq.s32.totalorder %s21, 0
    %p245 = por %p243, %p244
    %p246 = scmp.le.s32.totalorder 1, %s15
    %p247 = scmp.lt.s32.totalorder %s15, 3
    %p248 = pnand %p246, %p247
    %p249 = pneg %p248
    // Predicated region
    $region9: #{edge_module_forward.6} parent=5 // pred_check
      _
    $region10: #{edge_module_forward.6} parent=5 // pred_check_branch
      %251 = sbr.rel (%p248) target = $region12
    $region11: #{edge_module_forward.6} parent=5 // pred_region
      %s252 = ssub.s32 %s15, 1
      // Predicated region
      $region13: #{edge_module_forward.6} parent=11 // pred_check
        %p253 = pneg %p81
      $region14: #{edge_module_forward.6} parent=11 // pred_check_branch
        %255 = sbr.rel (%p253) target = $region16
      $region15: #{edge_module_forward.6} parent=11 // pred_region
        %p256 = scmp.lt.s32.totalorder %s25, 0
        %s257 = scalar_select %p256, %s25, 0
        %s258 = smul.addr %s257, 4
        %s259 = scalar_lea.vmem %s1, %s258
      $region16: #{edge_module_forward.6} parent=11 // pred_fallthru
        _
      // Predicated region
      $region17: #{edge_module_forward.6} parent=11 // pred_check
        %p260 = pneg %p102
      $region18: #{edge_module_forward.6} parent=11 // pred_check_branch
        %262 = sbr.rel (%p260) target = $region20
      $region19: #{edge_module_forward.6} parent=11 // pred_region
        _
      $region20: #{edge_module_forward.6} parent=11 // pred_fallthru
        _
      // Predicated region
      $region21: #{edge_module_forward.6} parent=11 // pred_check
        %p263 = pneg %p123
      $region22: #{edge_module_forward.6} parent=11 // pred_check_branch
        %265 = sbr.rel (%p263) target = $region24
      $region23: #{edge_module_forward.6} parent=11 // pred_region
        _
      $region24: #{edge_module_forward.6} parent=11 // pred_fallthru
        _
      // Predicated region
      $region25: #{edge_module_forward.6} parent=11 // pred_check
        %p266 = pneg %p144
      $region26: #{edge_module_forward.6} parent=11 // pred_check_branch
        %268 = sbr.rel (%p266) target = $region28
      $region27: #{edge_module_forward.6} parent=11 // pred_region
        _
      $region28: #{edge_module_forward.6} parent=11 // pred_fallthru
        _
      // Predicated region
      $region29: #{edge_module_forward.6} parent=11 // pred_check
        %p269 = pneg %p165
      $region30: #{edge_module_forward.6} parent=11 // pred_check_branch
        %271 = sbr.rel (%p269) target = $region32
      $region31: #{edge_module_forward.6} parent=11 // pred_region
        _
      $region32: #{edge_module_forward.6} parent=11 // pred_fallthru
        _
      // Predicated region
      $region33: #{edge_module_forward.6} parent=11 // pred_check
        %p272 = pneg %p186
      $region34: #{edge_module_forward.6} parent=11 // pred_check_branch
        %274 = sbr.rel (%p272) target = $region36
      $region35: #{edge_module_forward.6} parent=11 // pred_region
        _
      $region36: #{edge_module_forward.6} parent=11 // pred_fallthru
        _
    $region12: #{edge_module_forward.6} parent=5 // pred_fallthru
      _
    %p275 = scmp.lt.s32.totalorder %s15, 2
    // Predicated region
    $region37: #{edge_module_forward.6} parent=5 // pred_check
      %p276 = pneg %p275
    $region38: #{edge_module_forward.6} parent=5 // pred_check_branch
      %278 = sbr.rel (%p276) target = $region40
    $region39: #{edge_module_forward.6} parent=5 // pred_region
      // Predicated region
      $region41: #{edge_module_forward.6} parent=39 // pred_check
        %p279 = pneg %p49
      $region42: #{edge_module_forward.6} parent=39 // pred_check_branch
        %281 = sbr.rel (%p279) target = $region44
      $region43: #{edge_module_forward.6} parent=39 // pred_region
        %s282 = smul.u32 8, %s23
        %p283 = scmp.lt.s32.totalorder %s22, 1
        %s284 = scalar_select %p283, %s22, 1
        %p285 = scmp.lt.s32.totalorder %s282, 7
        %s286 = scalar_select %p285, %s282, 7
        %s287 = smul.addr %s284, 8
        %s288 = sadd.s32 %s286, %s287
        %s289 = smul.addr %s288, 4
        %s290 = scalar_lea.vmem %s0, %s289
        %s291 = smul.u32 8, %s23
      $region44: #{edge_module_forward.6} parent=39 // pred_fallthru
        _
    $region40: #{edge_module_forward.6} parent=5 // pred_fallthru
      _
    %p292 = scmp.le.s32.totalorder 1, %s15
    %p293 = scmp.lt.s32.totalorder %s15, 3
    %p294 = pnand %p292, %p293
    %p295 = pneg %p294
    // Predicated region
    $region45: #{edge_module_forward.6} parent=5 // pred_check
      _
    $region46: #{edge_module_forward.6} parent=5 // pred_check_branch
      %297 = sbr.rel (%p294) target = $region48
    $region47: #{edge_module_forward.6} parent=5 // pred_region
      %s298 = ssub.s32 %s15, 1
      %s299 = smul.u32 8, %s25
      %p300 = scmp.lt.s32.totalorder %s24, 1
      %s301 = scalar_select %p300, %s24, 1
      %p302 = scmp.lt.s32.totalorder %s299, 7
      %s303 = scalar_select %p302, %s299, 7
      %s304 = smul.addr %s301, 8
      %s305 = sadd.s32 %s303, %s304
      %s306 = smul.addr %s305, 4
      %s307 = scalar_lea.vmem %s0, %s306
      %p308 = pneg %p55
      %p309 = pneg %p52
      %p310 = scmp.lt.s32.totalorder %s25, 0
      %s311 = scalar_select %p310, %s25, 0
      %s312 = smul.addr %s311, 4
      %s313 = scalar_lea.vmem %s1, %s312
      %p314 = pneg %p81
      %p315 = pneg %p78
      %p316 = pneg %p102
      %p317 = pneg %p99
      %p318 = pneg %p123
      %p319 = pneg %p120
      %p320 = pneg %p144
      %p321 = pneg %p141
      %p322 = pneg %p165
      %p323 = pneg %p162
      %p324 = pneg %p186
      %p325 = pneg %p183
      %p326 = pneg %p212
      %p327 = pneg %p209
      %p328 = scmp.lt.s32.totalorder %s24, 1
      %s329 = scalar_select %p328, %s24, 1
      %s330 = smul.addr %s329, 4
      %s331 = smul.addr %s330, 4
      %s332 = scalar_lea.vmem %s7, %s331
      %p333 = pneg %p238
      %p334 = pneg %p235
      %p335 = scmp.lt.s32.totalorder %s24, 1
      %s336 = scalar_select %p335, %s24, 1
      %s337 = smul.addr %s336, 8
      %s338 = scalar_lea.vmem %s8, %s337
      %s339 = smul.u32 8, %s25
      %p340 = scmp.lt.s32.totalorder %s24, 1
      %s341 = scalar_select %p340, %s24, 1
      %p342 = scmp.lt.s32.totalorder %s339, 7
      %s343 = scalar_select %p342, %s339, 7
      %s344 = smul.addr %s341, 8
      %s345 = sadd.s32 %s343, %s344
      %s346 = smul.addr %s345, 4
      %s347 = scalar_lea.vmem %s0, %s346
      %s348 = smul.u32 8, %s25
      %p349 = scmp.lt.s32.totalorder %s25, 0
      %s350 = scalar_select %p349, %s25, 0
      %s351 = smul.addr %s350, 4
      %s352 = scalar_lea.vmem %s1, %s351
      %p353 = scmp.lt.s32.totalorder %s24, 1
      %s354 = scalar_select %p353, %s24, 1
      %s355 = smul.addr %s354, 4
      %s356 = smul.addr %s355, 4
      %s357 = scalar_lea.vmem %s7, %s356
      %p358 = scmp.lt.s32.totalorder %s24, 1
      %s359 = scalar_select %p358, %s24, 1
      %s360 = smul.addr %s359, 8
      %s361 = scalar_lea.vmem %s8, %s360
      %p363 = scmp.eq.s32.totalorder %s25, 0
      // Predicated region
      $region49: #{edge_module_forward.6} parent=47 // pred_check
        %p364 = pneg %p363
      $region50: #{edge_module_forward.6} parent=47 // pred_check_branch
        %366 = sbr.rel (%p364) target = $region52
      $region51: #{edge_module_forward.6} parent=47 // pred_region
        %367 = vst [vmem:[#allocation2] sm:$0xff] 0.0
        %368 = vst [vmem:[#allocation2 + $0x8] sm:$0xff] 0.0
        %369 = vst [vmem:[#allocation2 + $0x10] sm:$0xff] 0.0
        %370 = vst [vmem:[#allocation2 + $0x18] sm:$0xff] 0.0
      $region52: #{edge_module_forward.6} parent=47 // pred_fallthru
        _
      %v371 = vld [vmem:[#allocation2] sm:$0xff]
      %v372 = vld [vmem:[#allocation2 + $0x8] sm:$0xff]
      %v373 = vld [vmem:[#allocation2 + $0x10] sm:$0xff]
      %v374 = vld [vmem:[#allocation2 + $0x18] sm:$0xff]
      %v375 = vld [vmem:[%s352] sm:$0xf]
      %v376 = vld [vmem:[%s352 + $0x4] sm:$0xf]
      %v377 = vld [vmem:[%s352 + $0x8] sm:$0xf]
      %v378 = vld [vmem:[%s352 + $0xc] sm:$0xf]
      %v379 = vld [vmem:[%s347] sm:$0xf]
      %v380 = vld [vmem:[%s347 + $0x4] sm:$0xf]
      %v381 = vld [vmem:[%s347 + $0x8] sm:$0xf]
      %v382 = vld [vmem:[%s347 + $0xc] sm:$0xf]
      %v383 = vld [vmem:[%s347 + $0x10] sm:$0xf]
      %v384 = vld [vmem:[%s347 + $0x14] sm:$0xf]
      %v385 = vld [vmem:[%s347 + $0x18] sm:$0xf]
      %v386 = vld [vmem:[%s347 + $0x1c] sm:$0xf]
      %v391 = vunpack.c.l.b16 %v375
      %v392 = vunpack.c.l.b16 %v376
      %v393 = vunpack.c.l.b16 %v377
      %v394 = vunpack.c.l.b16 %v378
      %v395 = vpack.c.b16 %v392, %v391
      %v396 = vpack.c.b16 %v394, %v393
      %v405 = vunpack.c.l.b16 %v379
      %v406 = vunpack.c.l.b16 %v380
      %v407 = vunpack.c.l.b16 %v381
      %v408 = vunpack.c.l.b16 %v382
      %v409 = vunpack.c.l.b16 %v383
      %v410 = vunpack.c.l.b16 %v384
      %v411 = vunpack.c.l.b16 %v385
      %v412 = vunpack.c.l.b16 %v386
      %v413 = vpack.c.b16 %v406, %v405
      %v414 = vpack.c.b16 %v408, %v407
      %v415 = vpack.c.b16 %v410, %v409
      %v416 = vpack.c.b16 %v412, %v411
      %vm421 = vcmask 523264
      %v423 = vsel %vm421, %v395, 0
      %v426 = vsel %vm421, %v396, 0
      %428 = vmatpush.bf16.msra.mxu0 0
      %429 = vmatpush.bf16.msra.mxu0 0
      %430 = vmatpush.bf16.msra.mxu0 0
      %431 = vmatpush.bf16.msra.mxu0 0
      %432 = vmatpush.bf16.msra.mxu0 %v416
      %433 = vmatpush.bf16.msra.mxu0 %v415
      %434 = vmatpush.bf16.msra.mxu0 %v414
      %435 = vmatpush.bf16.msra.mxu0 %v413
      %436 = vmatmul.bf16.gmra.mxu0 %v423
      %v437 = vpop.f32.mrf.mxu0
      %v438 = vadd.f32 0.0, %v437
      %v439 = vpop.f32.mrf.mxu0
      %v440 = vadd.f32 0.0, %v439
      %441 = vmatmul.bf16.gmra.mxu0 %v426
      %v442 = vpop.f32.mrf.mxu0
      %v443 = vadd.f32 0.0, %v442
      %v444 = vpop.f32.mrf.mxu0
      %v445 = vadd.f32 0.0, %v444
      %446 = vdwg.mxu0
      %v447 = vadd.f32 %v371, %v438
      %v448 = vadd.f32 %v372, %v440
      %v449 = vadd.f32 %v373, %v443
      %v450 = vadd.f32 %v374, %v445
      %451 = vst [vmem:[#allocation2] sm:$0xff] %v447
      %452 = vst [vmem:[#allocation2 + $0x8] sm:$0xff] %v448
      %453 = vst [vmem:[#allocation2 + $0x10] sm:$0xff] %v449
      %454 = vst [vmem:[#allocation2 + $0x18] sm:$0xff] %v450
      // Predicated region
      $region53: #{edge_module_forward.6} parent=47 // pred_check
        %p455 = pneg %p363
      $region54: #{edge_module_forward.6} parent=47 // pred_check_branch
        %457 = sbr.rel (%p455) target = $region56
      $region55: #{edge_module_forward.6} parent=47 // pred_region
        %v458 = vld [vmem:[#allocation2] sm:$0xff]
        %v459 = vld [vmem:[#allocation2 + $0x8] sm:$0xff]
        %v460 = vld [vmem:[#allocation2 + $0x10] sm:$0xff]
        %v461 = vld [vmem:[#allocation2 + $0x18] sm:$0xff]
        %v462 = vld [vmem:[%s2] sm:$0xff]
        %v463 = vld [vmem:[%s2 + $0x8] sm:$0xff]
        %v464 = vld [vmem:[%s2 + $0x10] sm:$0xff]
        %v465 = vld [vmem:[%s2 + $0x18] sm:$0xff]
        %467 = vset.pattern.permute.xlu0 0
        %468 = vperm.xlu0 %467, %v462
        %v469 = vpop.permute.xlu0 %468
        %472 = vset.pattern.permute.xlu0 0
        %473 = vperm.xlu0 %472, %v463
        %v474 = vpop.permute.xlu0 %473
        %477 = vset.pattern.permute.xlu0 0
        %478 = vperm.xlu0 %477, %v464
        %v479 = vpop.permute.xlu0 %478
        %482 = vset.pattern.permute.xlu0 0
        %483 = vperm.xlu0 %482, %v465
        %v484 = vpop.permute.xlu0 %483
        %v486 = vmul.f32 %v458, %v469
        %v487 = vmul.f32 %v459, %v474
        %v488 = vmul.f32 %v460, %v479
        %v489 = vmul.f32 %v461, %v484
        %v490 = vld [vmem:[%s3] sm:$0xff]
        %v491 = vld [vmem:[%s3 + $0x8] sm:$0xff]
        %v492 = vld [vmem:[%s3 + $0x10] sm:$0xff]
        %v493 = vld [vmem:[%s3 + $0x18] sm:$0xff]
        %495 = vset.pattern.permute.xlu0 0
        %496 = vperm.xlu0 %495, %v490
        %v497 = vpop.permute.xlu0 %496
        %500 = vset.pattern.permute.xlu0 0
        %501 = vperm.xlu0 %500, %v491
        %v502 = vpop.permute.xlu0 %501
        %505 = vset.pattern.permute.xlu0 0
        %506 = vperm.xlu0 %505, %v492
        %v507 = vpop.permute.xlu0 %506
        %510 = vset.pattern.permute.xlu0 0
        %511 = vperm.xlu0 %510, %v493
        %v512 = vpop.permute.xlu0 %511
        %v514 = vadd.f32 %v486, %v497
        %v515 = vadd.f32 %v487, %v502
        %v516 = vadd.f32 %v488, %v507
        %v517 = vadd.f32 %v489, %v512
        %518 = vst [vmem:[#allocation2] sm:$0xff] %v514
        %519 = vst [vmem:[#allocation2 + $0x8] sm:$0xff] %v515
        %520 = vst [vmem:[#allocation2 + $0x10] sm:$0xff] %v516
        %521 = vst [vmem:[#allocation2 + $0x18] sm:$0xff] %v517
        %v522 = vld [vmem:[#allocation2] sm:$0xff]
        %v523 = vld [vmem:[#allocation2 + $0x8] sm:$0xff]
        %v524 = vld [vmem:[#allocation2 + $0x10] sm:$0xff]
        %v525 = vld [vmem:[#allocation2 + $0x18] sm:$0xff]
        %v526 = vpack.c.bf16 %v522, %v522
        %v527 = vpack.c.bf16 %v523, %v523
        %v528 = vpack.c.bf16 %v524, %v524
        %v529 = vpack.c.bf16 %v525, %v525
        %530 = vst [vmem:[%s357] sm:$0xf] %v526
        %531 = vst [vmem:[%s357 + $0x4] sm:$0xf] %v527
        %532 = vst [vmem:[%s357 + $0x8] sm:$0xf] %v528
        %533 = vst [vmem:[%s357 + $0xc] sm:$0xf] %v529
        %v534 = vld [vmem:[%s4] sm:$0xf]
        %v535 = vld [vmem:[%s4 + $0x4] sm:$0xf]
        %v536 = vld [vmem:[%s4 + $0x8] sm:$0xf]
        %v537 = vld [vmem:[%s4 + $0xc] sm:$0xf]
        %v538 = vld [vmem:[%s4 + $0x10] sm:$0xf]
        %v539 = vld [vmem:[%s4 + $0x14] sm:$0xf]
        %v540 = vld [vmem:[%s4 + $0x18] sm:$0xf]
        %v541 = vld [vmem:[%s4 + $0x1c] sm:$0xf]
        %v542 = vld [vmem:[%s4 + $0x20] sm:$0xf]
        %v543 = vld [vmem:[%s357] sm:$0xf]
        %v544 = vld [vmem:[%s357 + $0x4] sm:$0xf]
        %v545 = vld [vmem:[%s357 + $0x8] sm:$0xf]
        %v546 = vld [vmem:[%s357 + $0xc] sm:$0xf]
        %v556 = vunpack.c.l.b16 %v534
        %v557 = vunpack.c.l.b16 %v535
        %v558 = vunpack.c.l.b16 %v536
        %v559 = vunpack.c.l.b16 %v537
        %v560 = vunpack.c.l.b16 %v538
        %v561 = vunpack.c.l.b16 %v539
        %v562 = vunpack.c.l.b16 %v540
        %v563 = vunpack.c.l.b16 %v541
        %v564 = vunpack.c.l.b16 %v542
        %v565 = vpack.c.b16 %v557, %v556
        %v566 = vpack.c.b16 %v559, %v558
        %v567 = vpack.c.b16 %v561, %v560
        %v568 = vpack.c.b16 %v563, %v562
        %v569 = vpack.c.b16 %v564, %v564
        %v574 = vunpack.c.l.b16 %v543
        %v575 = vunpack.c.l.b16 %v544
        %v576 = vunpack.c.l.b16 %v545
        %v577 = vunpack.c.l.b16 %v546
        %v578 = vpack.c.b16 %v575, %v574
        %v579 = vpack.c.b16 %v577, %v576
        %vm582 = vcmask 261120
        %v584 = vsel %vm582, %v565, 0
        %v587 = vsel %vm582, %v566, 0
        %v590 = vsel %vm582, %v567, 0
        %v593 = vsel %vm582, %v568, 0
        %v596 = vsel %vm582, %v569, 0
        %598 = vmatpush.bf16.msra.mxu0 0
        %599 = vmatpush.bf16.msra.mxu0 0
        %600 = vmatpush.bf16.msra.mxu0 0
        %601 = vmatpush.bf16.msra.mxu0 0
        %602 = vmatpush.bf16.msra.mxu0 0
        %603 = vmatpush.bf16.msra.mxu0 0
        %604 = vmatpush.bf16.msra.mxu0 %v579
        %605 = vmatpush.bf16.msra.mxu0 %v578
        %606 = vmatmul.bf16.gmra.mxu0 %v584
        %v607 = vpop.f32.mrf.mxu0
        %v608 = vadd.f32 0.0, %v607
        %v609 = vpop.f32.mrf.mxu0
        %v610 = vadd.f32 0.0, %v609
        %611 = vmatmul.bf16.gmra.mxu0 %v587
        %v612 = vpop.f32.mrf.mxu0
        %v613 = vadd.f32 0.0, %v612
        %v614 = vpop.f32.mrf.mxu0
        %v615 = vadd.f32 0.0, %v614
        %616 = vmatmul.bf16.gmra.mxu0 %v590
        %v617 = vpop.f32.mrf.mxu0
        %v618 = vadd.f32 0.0, %v617
        %v619 = vpop.f32.mrf.mxu0
        %v620 = vadd.f32 0.0, %v619
        %621 = vmatmul.bf16.gmra.mxu0 %v593
        %v622 = vpop.f32.mrf.mxu0
        %v623 = vadd.f32 0.0, %v622
        %v624 = vpop.f32.mrf.mxu0
        %v625 = vadd.f32 0.0, %v624
        %626 = vmatmul.bf16.gmra.mxu0 %v596
        %v627 = vpop.f32.mrf.mxu0
        %v628 = vadd.f32 0.0, %v627
        %v629 = vpop.f32.mrf.mxu0
        %630 = vdwg.mxu0
        %631 = vrot.lane.b32.xlu0 %v608, 5
        %v632 = vpop.permute.xlu0 %631
        %v633 = vld [vmem:[%s6] sm:$0x1]
        %v635 = vperm.slane %v633, 0
        %v637 = vmul.f32 %v632, %v635
        %v638 = vadd.f32 %v637, 0.0
        %639 = vrot.lane.b32.xlu0 %v610, 4
        %v640 = vpop.permute.xlu0 %639
        %s641 = scalar_lea.vmem %s6, 1
        %v642 = vld [vmem:[%s641] sm:$0x1]
        %v644 = vperm.slane %v642, 0
        %v646 = vmul.f32 %v640, %v644
        %v647 = vadd.f32 %v638, %v646
        %648 = vrot.lane.b32.xlu0 %v613, 3
        %v649 = vpop.permute.xlu0 %648
        %s650 = scalar_lea.vmem %s6, 2
        %v651 = vld [vmem:[%s650] sm:$0x1]
        %v653 = vperm.slane %v651, 0
        %v655 = vmul.f32 %v649, %v653
        %v656 = vadd.f32 %v647, %v655
        %657 = vrot.lane.b32.xlu0 %v615, 1
        %v658 = vpop.permute.xlu0 %657
        %s659 = scalar_lea.vmem %s6, 3
        %v660 = vld [vmem:[%s659] sm:$0x1]
        %v662 = vperm.slane %v660, 0
        %v664 = vmul.f32 %v658, %v662
        %v665 = vadd.f32 %v656, %v664
        %s666 = scalar_lea.vmem %s6, 4
        %v667 = vld [vmem:[%s666] sm:$0x1]
        %v669 = vperm.slane %v667, 0
        %v671 = vmul.f32 %v618, %v669
        %v672 = vadd.f32 %v665, %v671
        %673 = vrot.lane.b32.xlu0 %v620, 127
        %v674 = vpop.permute.xlu0 %673
        %s675 = scalar_lea.vmem %s6, 5
        %v676 = vld [vmem:[%s675] sm:$0x1]
        %v678 = vperm.slane %v676, 0
        %v680 = vmul.f32 %v674, %v678
        %v681 = vadd.f32 %v672, %v680
        %682 = vrot.lane.b32.xlu0 %v623, 125
        %v683 = vpop.permute.xlu0 %682
        %s684 = scalar_lea.vmem %s6, 6
        %v685 = vld [vmem:[%s684] sm:$0x1]
        %v687 = vperm.slane %v685, 0
        %v689 = vmul.f32 %v683, %v687
        %v690 = vadd.f32 %v681, %v689
        %691 = vrot.lane.b32.xlu0 %v625, 124
        %v692 = vpop.permute.xlu0 %691
        %s693 = scalar_lea.vmem %s6, 7
        %v694 = vld [vmem:[%s693] sm:$0x1]
        %v696 = vperm.slane %v694, 0
        %v698 = vmul.f32 %v692, %v696
        %v699 = vadd.f32 %v690, %v698
        %700 = vrot.lane.b32.xlu0 %v628, 123
        %v701 = vpop.permute.xlu0 %700
        %s702 = scalar_lea.vmem %s6, 8
        %v703 = vld [vmem:[%s702] sm:$0x1]
        %v705 = vperm.slane %v703, 0
        %v707 = vmul.f32 %v701, %v705
        %v708 = vadd.f32 %v699, %v707
        %v709 = vld [vmem:[%s5] sm:$0xff]
        %711 = vset.pattern.permute.xlu0 0
        %712 = vperm.xlu0 %711, %v709
        %v713 = vpop.permute.xlu0 %712
        %v715 = vadd.f32 %v708, %v713
        %716 = vst [vmem:[%s361] sm:$0xff] %v715
      $region56: #{edge_module_forward.6} parent=47 // pred_fallthru
        _
      %p717 = scmp.lt.s32.totalorder %s24, 1
      %s718 = scalar_select %p717, %s24, 1
      %s719 = smul.addr %s718, 4
      %s720 = smul.addr %s719, 4
      %s721 = scalar_lea.vmem %s7, %s720
      %p722 = scmp.lt.s32.totalorder %s24, 1
      %s723 = scalar_select %p722, %s24, 1
      %s724 = smul.addr %s723, 8
      %s725 = scalar_lea.vmem %s8, %s724
      // Predicated region
      $region57: #{edge_module_forward.6} parent=47 // pred_check
        %p726 = pneg %p209
      $region58: #{edge_module_forward.6} parent=47 // pred_check_branch
        %728 = sbr.rel (%p726) target = $region60
      $region59: #{edge_module_forward.6} parent=47 // pred_region
        _
      $region60: #{edge_module_forward.6} parent=47 // pred_fallthru
        _
      // Predicated region
      $region61: #{edge_module_forward.6} parent=47 // pred_check
        %p729 = pneg %p235
      $region62: #{edge_module_forward.6} parent=47 // pred_check_branch
        %731 = sbr.rel (%p729) target = $region64
      $region63: #{edge_module_forward.6} parent=47 // pred_region
        _
      $region64: #{edge_module_forward.6} parent=47 // pred_fallthru
        _
    $region48: #{edge_module_forward.6} parent=5 // pred_fallthru
      _
    %p732 = scmp.le.s32.totalorder 2, %s15
    // Predicated region
    $region65: #{edge_module_forward.6} parent=5 // pred_check
      %p733 = pneg %p732
    $region66: #{edge_module_forward.6} parent=5 // pred_check_branch
      %735 = sbr.rel (%p733) target = $region68
    $region67: #{edge_module_forward.6} parent=5 // pred_region
      %s736 = ssub.s32 %s15, 2
      // Predicated region
      $region69: #{edge_module_forward.6} parent=67 // pred_check
        %p737 = pneg %p215
      $region70: #{edge_module_forward.6} parent=67 // pred_check_branch
        %739 = sbr.rel (%p737) target = $region72
      $region71: #{edge_module_forward.6} parent=67 // pred_region
        %p740 = scmp.lt.s32.totalorder %s26, 1
        %s741 = scalar_select %p740, %s26, 1
        %s742 = smul.addr %s741, 4
        %s743 = smul.addr %s742, 4
        %s744 = scalar_lea.vmem %s7, %s743
      $region72: #{edge_module_forward.6} parent=67 // pred_fallthru
        _
      // Predicated region
      $region73: #{edge_module_forward.6} parent=67 // pred_check
        %p745 = pneg %p241
      $region74: #{edge_module_forward.6} parent=67 // pred_check_branch
        %747 = sbr.rel (%p745) target = $region76
      $region75: #{edge_module_forward.6} parent=67 // pred_region
        %p748 = scmp.lt.s32.totalorder %s26, 1
        %s749 = scalar_select %p748, %s26, 1
        %s750 = smul.addr %s749, 8
        %s751 = scalar_lea.vmem %s8, %s750
      $region76: #{edge_module_forward.6} parent=67 // pred_fallthru
        _
    $region68: #{edge_module_forward.6} parent=5 // pred_fallthru
      _
  $region6: #{edge_module_forward.6} parent=0 // loop_footer
    %s19 = sadd.s32 1, %s15
  $region7: #{edge_module_forward.6} parent=0 // loop_footer_branch
    %14 = sbr.rel target = $region3
  $region8: #{edge_module_forward.6} parent=0 // loop_exit
    _

// kernel: edge_module_forward.5
$region0: #{edge_module_forward.5}
  #allocation0 [shape = 'u32[]', space=smem, size = 0x4, offset = 0x4, fixed_abs, tag = 'smem constant byte address 0x4 - core index']
  #allocation1 [shape = 'u32[72,128]{1,0:T(1,128)}', space=vmem, size = 0x9000, scoped, tag = 'internal scratch']
  #allocation2 [shape = 'f32[32,128]{1,0:T(8,128)}', space=vmem, size = 0x4000, scoped, tag = 'scratch operand']
  %s0 = inlined_call_operand.vmem [shape: bf16[2,32,128], index: 0, kind: input, shape index: {}]
  %s1 = inlined_call_operand.vmem [shape: bf16[32,32], index: 1, kind: input, shape index: {}]
  %s2 = inlined_call_operand.vmem [shape: f32[32,1], index: 2, kind: input, shape index: {}]
  %s3 = inlined_call_operand.vmem [shape: f32[32,1], index: 3, kind: input, shape index: {}]
  %s4 = inlined_call_operand.vmem [shape: bf16[72,32], index: 4, kind: input, shape index: {}]
  %s5 = inlined_call_operand.vmem [shape: f32[8,1], index: 5, kind: input, shape index: {}]
  %s6 = inlined_call_operand.vmem [shape: f32[9,1,128], index: 6, kind: input, shape index: {}]
  %s7 = inlined_call_operand.vmem [shape: bf16[2,32,128], index: 7, kind: output, shape index: {0}]
  %s8 = inlined_call_operand.vmem [shape: f32[2,8,128], index: 8, kind: output, shape index: {1}]
  %9 = xla_tuple %s7, %s8
  %s10 = sld [smem:[#allocation0]]
  $region77: #{edge_module_forward.5} parent=0
    _
  %s12 = ssub.s32 1, %s10
  %s13 = scalar_select 0, %s12, %s10
  loop: start=0, step=1, limit=4
  $region2: #{edge_module_forward.5} parent=0 // loop_pre_header
    _
  $region3: #{edge_module_forward.5} parent=0 // loop_header
    %s15 = sphi 0, %s19
    %p16 = scmp.ge.s32.totalorder %s15, 4
    %s22 = sphi 0, %s34
    %s23 = sphi 0, %s30
    %s24 = sphi 0, %s22
    %s25 = sphi 0, %s23
    %s26 = sphi 0, %s24
    %s27 = sphi 0, %s25
    %s39 = sphi 0, %s41
    %s42 = sphi 0, %s39
    %s43 = sphi 0, %s42
    %s59 = sphi 0, %s43
    %s65 = sphi 0, %s67
    %s68 = sphi 0, %s65
    %s69 = sphi 0, %s68
    %s85 = sphi 0, %s69
    %s89 = sphi 0, %s89
    %s91 = sphi 0, %s89
    %s92 = sphi 0, %s91
    %s106 = sphi 0, %s92
    %s110 = sphi 0, %s110
    %s112 = sphi 0, %s110
    %s113 = sphi 0, %s112
    %s127 = sphi 0, %s113
    %s131 = sphi 0, %s131
    %s133 = sphi 0, %s131
    %s134 = sphi 0, %s133
    %s148 = sphi 0, %s134
    %s152 = sphi 0, %s152
    %s154 = sphi 0, %s152
    %s155 = sphi 0, %s154
    %s169 = sphi 0, %s155
    %s173 = sphi 0, %s173
    %s175 = sphi 0, %s173
    %s176 = sphi 0, %s175
    %s190 = sphi 0, %s176
    %s196 = sphi 0, %s198
    %s199 = sphi 0, %s196
    %s200 = sphi 0, %s199
    %s216 = sphi 0, %s200
    %s222 = sphi 0, %s224
    %s225 = sphi 0, %s222
    %s226 = sphi 0, %s225
    %s242 = sphi 0, %s226
  $region4: #{edge_module_forward.5} parent=0 // loop_header_branch
    %18 = sbr.rel (%p16) target = $region8
  $region5: #{edge_module_forward.5} parent=0 // loop_body
    %s20 = ssub.s32 %s15, 1
    %s21 = ssub.s32 %s15, 2
    %s28 = sadd.s32 1, %s23
    %p29 = scmp.ge.s32.totalorder %s28, 1
    %s30 = scalar_select %p29, 0, %s28
    %s31 = sadd.s32 1, %s22
    %s32 = scalar_select %p29, %s31, %s22
    %p33 = scmp.ge.s32.totalorder %s32, 2
    %s34 = scalar_select %p33, 0, %s32
    %s35 = ssub.s32 %s22, %s34
    %s36 = ssub.s32 %s23, %s30
    %s37 = sor.u32 %s35, %s36
    %p38 = scmp.eq.s32.totalorder %s37, 0
    %s40 = sadd.s32 %s39, 1
    %s41 = scalar_select %p38, %s39, %s40
    %p44 = pneg %p38
    %p45 = scmp.eq.s32.totalorder %s15, 1
    %p46 = por %p44, %p45
    %p47 = scmp.ne.s32.totalorder %s39, %s42
    %p48 = scmp.eq.s32.totalorder %s15, 0
    %p49 = por %p47, %p48
    %p50 = scmp.ne.s32.totalorder %s39, %s42
    %p51 = scmp.eq.s32.totalorder %s20, 1
    %p52 = por %p50, %p51
    %p53 = scmp.ne.s32.totalorder %s42, %s43
    %p54 = scmp.eq.s32.totalorder %s20, 0
    %p55 = por %p53, %p54
    %p56 = scmp.ne.s32.totalorder %s42, %s43
    %p57 = scmp.eq.s32.totalorder %s21, 1
    %p58 = por %p56, %p57
    %p60 = scmp.ne.s32.totalorder %s43, %s59
    %p61 = scmp.eq.s32.totalorder %s21, 0
    %p62 = por %p60, %p61
    %s63 = ssub.s32 %s23, %s30
    %p64 = scmp.eq.s32.totalorder %s63, 0
    %s66 = sadd.s32 %s65, 1
    %s67 = scalar_select %p64, %s65, %s66
    %p70 = pneg %p64
    %p71 = scmp.eq.s32.totalorder %s15, 1
    %p72 = por %p70, %p71
    %p73 = scmp.ne.s32.totalorder %s65, %s68
    %p74 = scmp.eq.s32.totalorder %s15, 0
    %p75 = por %p73, %p74
    %p76 = scmp.ne.s32.totalorder %s65, %s68
    %p77 = scmp.eq.s32.totalorder %s20, 1
    %p78 = por %p76, %p77
    %p79 = scmp.ne.s32.totalorder %s68, %s69
    %p80 = scmp.eq.s32.totalorder %s20, 0
    %p81 = por %p79, %p80
    %p82 = scmp.ne.s32.totalorder %s68, %s69
    %p83 = scmp.eq.s32.totalorder %s21, 1
    %p84 = por %p82, %p83
    %p86 = scmp.ne.s32.totalorder %s69, %s85
    %p87 = scmp.eq.s32.totalorder %s21, 0
    %p88 = por %p86, %p87
    %s90 = sadd.s32 %s89, 1
    %p93 = scmp.eq.s32.totalorder %s15, 1
    %p94 = scmp.ne.s32.totalorder %s89, %s91
    %p95 = scmp.eq.s32.totalorder %s15, 0
    %p96 = por %p94, %p95
    %p97 = scmp.ne.s32.totalorder %s89, %s91
    %p98 = scmp.eq.s32.totalorder %s20, 1
    %p99 = por %p97, %p98
    %p100 = scmp.ne.s32.totalorder %s91, %s92
    %p101 = scmp.eq.s32.totalorder %s20, 0
    %p102 = por %p100, %p101
    %p103 = scmp.ne.s32.totalorder %s91, %s92
    %p104 = scmp.eq.s32.totalorder %s21, 1
    %p105 = por %p103, %p104
    %p107 = scmp.ne.s32.totalorder %s92, %s106
    %p108 = scmp.eq.s32.totalorder %s21, 0
    %p109 = por %p107, %p108
    %s111 = sadd.s32 %s110, 1
    %p114 = scmp.eq.s32.totalorder %s15, 1
    %p115 = scmp.ne.s32.totalorder %s110, %s112
    %p116 = scmp.eq.s32.totalorder %s15, 0
    %p117 = por %p115, %p116
    %p118 = scmp.ne.s32.totalorder %s110, %s112
    %p119 = scmp.eq.s32.totalorder %s20, 1
    %p120 = por %p118, %p119
    %p121 = scmp.ne.s32.totalorder %s112, %s113
    %p122 = scmp.eq.s32.totalorder %s20, 0
    %p123 = por %p121, %p122
    %p124 = scmp.ne.s32.totalorder %s112, %s113
    %p125 = scmp.eq.s32.totalorder %s21, 1
    %p126 = por %p124, %p125
    %p128 = scmp.ne.s32.totalorder %s113, %s127
    %p129 = scmp.eq.s32.totalorder %s21, 0
    %p130 = por %p128, %p129
    %s132 = sadd.s32 %s131, 1
    %p135 = scmp.eq.s32.totalorder %s15, 1
    %p136 = scmp.ne.s32.totalorder %s131, %s133
    %p137 = scmp.eq.s32.totalorder %s15, 0
    %p138 = por %p136, %p137
    %p139 = scmp.ne.s32.totalorder %s131, %s133
    %p140 = scmp.eq.s32.totalorder %s20, 1
    %p141 = por %p139, %p140
    %p142 = scmp.ne.s32.totalorder %s133, %s134
    %p143 = scmp.eq.s32.totalorder %s20, 0
    %p144 = por %p142, %p143
    %p145 = scmp.ne.s32.totalorder %s133, %s134
    %p146 = scmp.eq.s32.totalorder %s21, 1
    %p147 = por %p145, %p146
    %p149 = scmp.ne.s32.totalorder %s134, %s148
    %p150 = scmp.eq.s32.totalorder %s21, 0
    %p151 = por %p149, %p150
    %s153 = sadd.s32 %s152, 1
    %p156 = scmp.eq.s32.totalorder %s15, 1
    %p157 = scmp.ne.s32.totalorder %s152, %s154
    %p158 = scmp.eq.s32.totalorder %s15, 0
    %p159 = por %p157, %p158
    %p160 = scmp.ne.s32.totalorder %s152, %s154
    %p161 = scmp.eq.s32.totalorder %s20, 1
    %p162 = por %p160, %p161
    %p163 = scmp.ne.s32.totalorder %s154, %s155
    %p164 = scmp.eq.s32.totalorder %s20, 0
    %p165 = por %p163, %p164
    %p166 = scmp.ne.s32.totalorder %s154, %s155
    %p167 = scmp.eq.s32.totalorder %s21, 1
    %p168 = por %p166, %p167
    %p170 = scmp.ne.s32.totalorder %s155, %s169
    %p171 = scmp.eq.s32.totalorder %s21, 0
    %p172 = por %p170, %p171
    %s174 = sadd.s32 %s173, 1
    %p177 = scmp.eq.s32.totalorder %s15, 1
    %p178 = scmp.ne.s32.totalorder %s173, %s175
    %p179 = scmp.eq.s32.totalorder %s15, 0
    %p180 = por %p178, %p179
    %p181 = scmp.ne.s32.totalorder %s173, %s175
    %p182 = scmp.eq.s32.totalorder %s20, 1
    %p183 = por %p181, %p182
    %p184 = scmp.ne.s32.totalorder %s175, %s176
    %p185 = scmp.eq.s32.totalorder %s20, 0
    %p186 = por %p184, %p185
    %p187 = scmp.ne.s32.totalorder %s175, %s176
    %p188 = scmp.eq.s32.totalorder %s21, 1
    %p189 = por %p187, %p188
    %p191 = scmp.ne.s32.totalorder %s176, %s190
    %p192 = scmp.eq.s32.totalorder %s21, 0
    %p193 = por %p191, %p192
    %s194 = ssub.s32 %s22, %s34
    %p195 = scmp.eq.s32.totalorder %s194, 0
    %s197 = sadd.s32 %s196, 1
    %s198 = scalar_select %p195, %s196, %s197
    %p201 = pneg %p195
    %p202 = scmp.eq.s32.totalorder %s15, 1
    %p203 = por %p201, %p202
    %p204 = scmp.ne.s32.totalorder %s196, %s199
    %p205 = scmp.eq.s32.totalorder %s15, 0
    %p206 = por %p204, %p205
    %p207 = scmp.ne.s32.totalorder %s196, %s199
    %p208 = scmp.eq.s32.totalorder %s20, 1
    %p209 = por %p207, %p208
    %p210 = scmp.ne.s32.totalorder %s199, %s200
    %p211 = scmp.eq.s32.totalorder %s20, 0
    %p212 = por %p210, %p211
    %p213 = scmp.ne.s32.totalorder %s199, %s200
    %p214 = scmp.eq.s32.totalorder %s21, 1
    %p215 = por %p213, %p214
    %p217 = scmp.ne.s32.totalorder %s200, %s216
    %p218 = scmp.eq.s32.totalorder %s21, 0
    %p219 = por %p217, %p218
    %s220 = ssub.s32 %s22, %s34
    %p221 = scmp.eq.s32.totalorder %s220, 0
    %s223 = sadd.s32 %s222, 1
    %s224 = scalar_select %p221, %s222, %s223
    %p227 = pneg %p221
    %p228 = scmp.eq.s32.totalorder %s15, 1
    %p229 = por %p227, %p228
    %p230 = scmp.ne.s32.totalorder %s222, %s225
    %p231 = scmp.eq.s32.totalorder %s15, 0
    %p232 = por %p230, %p231
    %p233 = scmp.ne.s32.totalorder %s222, %s225
    %p234 = scmp.eq.s32.totalorder %s20, 1
    %p235 = por %p233, %p234
    %p236 = scmp.ne.s32.totalorder %s225, %s226
    %p237 = scmp.eq.s32.totalorder %s20, 0
    %p238 = por %p236, %p237
    %p239 = scmp.ne.s32.totalorder %s225, %s226
    %p240 = scmp.eq.s32.totalorder %s21, 1
    %p241 = por %p239, %p240
    %p243 = scmp.ne.s32.totalorder %s226, %s242
    %p244 = scmp.eq.s32.totalorder %s21, 0
    %p245 = por %p243, %p244
    %p246 = scmp.le.s32.totalorder 1, %s15
    %p247 = scmp.lt.s32.totalorder %s15, 3
    %p248 = pnand %p246, %p247
    %p249 = pneg %p248
    // Predicated region
    $region9: #{edge_module_forward.5} parent=5 // pred_check
      _
    $region10: #{edge_module_forward.5} parent=5 // pred_check_branch
      %251 = sbr.rel (%p248) target = $region12
    $region11: #{edge_module_forward.5} parent=5 // pred_region
      %s252 = ssub.s32 %s15, 1
      // Predicated region
      $region13: #{edge_module_forward.5} parent=11 // pred_check
        %p253 = pneg %p81
      $region14: #{edge_module_forward.5} parent=11 // pred_check_branch
        %255 = sbr.rel (%p253) target = $region16
      $region15: #{edge_module_forward.5} parent=11 // pred_region
        %p256 = scmp.lt.s32.totalorder %s25, 0
        %s257 = scalar_select %p256, %s25, 0
        %s258 = smul.addr %s257, 4
        %s259 = scalar_lea.vmem %s1, %s258
      $region16: #{edge_module_forward.5} parent=11 // pred_fallthru
        _
      // Predicated region
      $region17: #{edge_module_forward.5} parent=11 // pred_check
        %p260 = pneg %p102
      $region18: #{edge_module_forward.5} parent=11 // pred_check_branch
        %262 = sbr.rel (%p260) target = $region20
      $region19: #{edge_module_forward.5} parent=11 // pred_region
        _
      $region20: #{edge_module_forward.5} parent=11 // pred_fallthru
        _
      // Predicated region
      $region21: #{edge_module_forward.5} parent=11 // pred_check
        %p263 = pneg %p123
      $region22: #{edge_module_forward.5} parent=11 // pred_check_branch
        %265 = sbr.rel (%p263) target = $region24
      $region23: #{edge_module_forward.5} parent=11 // pred_region
        _
      $region24: #{edge_module_forward.5} parent=11 // pred_fallthru
        _
      // Predicated region
      $region25: #{edge_module_forward.5} parent=11 // pred_check
        %p266 = pneg %p144
      $region26: #{edge_module_forward.5} parent=11 // pred_check_branch
        %268 = sbr.rel (%p266) target = $region28
      $region27: #{edge_module_forward.5} parent=11 // pred_region
        _
      $region28: #{edge_module_forward.5} parent=11 // pred_fallthru
        _
      // Predicated region
      $region29: #{edge_module_forward.5} parent=11 // pred_check
        %p269 = pneg %p165
      $region30: #{edge_module_forward.5} parent=11 // pred_check_branch
        %271 = sbr.rel (%p269) target = $region32
      $region31: #{edge_module_forward.5} parent=11 // pred_region
        _
      $region32: #{edge_module_forward.5} parent=11 // pred_fallthru
        _
      // Predicated region
      $region33: #{edge_module_forward.5} parent=11 // pred_check
        %p272 = pneg %p186
      $region34: #{edge_module_forward.5} parent=11 // pred_check_branch
        %274 = sbr.rel (%p272) target = $region36
      $region35: #{edge_module_forward.5} parent=11 // pred_region
        _
      $region36: #{edge_module_forward.5} parent=11 // pred_fallthru
        _
    $region12: #{edge_module_forward.5} parent=5 // pred_fallthru
      _
    %p275 = scmp.lt.s32.totalorder %s15, 2
    // Predicated region
    $region37: #{edge_module_forward.5} parent=5 // pred_check
      %p276 = pneg %p275
    $region38: #{edge_module_forward.5} parent=5 // pred_check_branch
      %278 = sbr.rel (%p276) target = $region40
    $region39: #{edge_module_forward.5} parent=5 // pred_region
      // Predicated region
      $region41: #{edge_module_forward.5} parent=39 // pred_check
        %p279 = pneg %p49
      $region42: #{edge_module_forward.5} parent=39 // pred_check_branch
        %281 = sbr.rel (%p279) target = $region44
      $region43: #{edge_module_forward.5} parent=39 // pred_region
        %s282 = smul.u32 4, %s23
        %p283 = scmp.lt.s32.totalorder %s22, 1
        %s284 = scalar_select %p283, %s22, 1
        %p285 = scmp.lt.s32.totalorder %s282, 3
        %s286 = scalar_select %p285, %s282, 3
        %s287 = smul.addr %s284, 4
        %s288 = sadd.s32 %s286, %s287
        %s289 = smul.addr %s288, 4
        %s290 = scalar_lea.vmem %s0, %s289
        %s291 = smul.u32 4, %s23
      $region44: #{edge_module_forward.5} parent=39 // pred_fallthru
        _
    $region40: #{edge_module_forward.5} parent=5 // pred_fallthru
      _
    %p292 = scmp.le.s32.totalorder 1, %s15
    %p293 = scmp.lt.s32.totalorder %s15, 3
    %p294 = pnand %p292, %p293
    %p295 = pneg %p294
    // Predicated region
    $region45: #{edge_module_forward.5} parent=5 // pred_check
      _
    $region46: #{edge_module_forward.5} parent=5 // pred_check_branch
      %297 = sbr.rel (%p294) target = $region48
    $region47: #{edge_module_forward.5} parent=5 // pred_region
      %s298 = ssub.s32 %s15, 1
      %s299 = smul.u32 4, %s25
      %p300 = scmp.lt.s32.totalorder %s24, 1
      %s301 = scalar_select %p300, %s24, 1
      %p302 = scmp.lt.s32.totalorder %s299, 3
      %s303 = scalar_select %p302, %s299, 3
      %s304 = smul.addr %s301, 4
      %s305 = sadd.s32 %s303, %s304
      %s306 = smul.addr %s305, 4
      %s307 = scalar_lea.vmem %s0, %s306
      %p308 = pneg %p55
      %p309 = pneg %p52
      %p310 = scmp.lt.s32.totalorder %s25, 0
      %s311 = scalar_select %p310, %s25, 0
      %s312 = smul.addr %s311, 4
      %s313 = scalar_lea.vmem %s1, %s312
      %p314 = pneg %p81
      %p315 = pneg %p78
      %p316 = pneg %p102
      %p317 = pneg %p99
      %p318 = pneg %p123
      %p319 = pneg %p120
      %p320 = pneg %p144
      %p321 = pneg %p141
      %p322 = pneg %p165
      %p323 = pneg %p162
      %p324 = pneg %p186
      %p325 = pneg %p183
      %p326 = pneg %p212
      %p327 = pneg %p209
      %p328 = scmp.lt.s32.totalorder %s24, 1
      %s329 = scalar_select %p328, %s24, 1
      %s330 = smul.addr %s329, 4
      %s331 = smul.addr %s330, 4
      %s332 = scalar_lea.vmem %s7, %s331
      %p333 = pneg %p238
      %p334 = pneg %p235
      %p335 = scmp.lt.s32.totalorder %s24, 1
      %s336 = scalar_select %p335, %s24, 1
      %s337 = smul.addr %s336, 8
      %s338 = scalar_lea.vmem %s8, %s337
      %s339 = smul.u32 4, %s25
      %p340 = scmp.lt.s32.totalorder %s24, 1
      %s341 = scalar_select %p340, %s24, 1
      %p342 = scmp.lt.s32.totalorder %s339, 3
      %s343 = scalar_select %p342, %s339, 3
      %s344 = smul.addr %s341, 4
      %s345 = sadd.s32 %s343, %s344
      %s346 = smul.addr %s345, 4
      %s347 = scalar_lea.vmem %s0, %s346
      %s348 = smul.u32 4, %s25
      %p349 = scmp.lt.s32.totalorder %s25, 0
      %s350 = scalar_select %p349, %s25, 0
      %s351 = smul.addr %s350, 4
      %s352 = scalar_lea.vmem %s1, %s351
      %p353 = scmp.lt.s32.totalorder %s24, 1
      %s354 = scalar_select %p353, %s24, 1
      %s355 = smul.addr %s354, 4
      %s356 = smul.addr %s355, 4
      %s357 = scalar_lea.vmem %s7, %s356
      %p358 = scmp.lt.s32.totalorder %s24, 1
      %s359 = scalar_select %p358, %s24, 1
      %s360 = smul.addr %s359, 8
      %s361 = scalar_lea.vmem %s8, %s360
      %p363 = scmp.eq.s32.totalorder %s25, 0
      // Predicated region
      $region49: #{edge_module_forward.5} parent=47 // pred_check
        %p364 = pneg %p363
      $region50: #{edge_module_forward.5} parent=47 // pred_check_branch
        %366 = sbr.rel (%p364) target = $region52
      $region51: #{edge_module_forward.5} parent=47 // pred_region
        %367 = vst [vmem:[#allocation2] sm:$0xff] 0.0
        %368 = vst [vmem:[#allocation2 + $0x8] sm:$0xff] 0.0
        %369 = vst [vmem:[#allocation2 + $0x10] sm:$0xff] 0.0
        %370 = vst [vmem:[#allocation2 + $0x18] sm:$0xff] 0.0
      $region52: #{edge_module_forward.5} parent=47 // pred_fallthru
        _
      %v371 = vld [vmem:[#allocation2] sm:$0xff]
      %v372 = vld [vmem:[#allocation2 + $0x8] sm:$0xff]
      %v373 = vld [vmem:[#allocation2 + $0x10] sm:$0xff]
      %v374 = vld [vmem:[#allocation2 + $0x18] sm:$0xff]
      %v375 = vld [vmem:[%s352] sm:$0xf]
      %v376 = vld [vmem:[%s352 + $0x4] sm:$0xf]
      %v377 = vld [vmem:[%s352 + $0x8] sm:$0xf]
      %v378 = vld [vmem:[%s352 + $0xc] sm:$0xf]
      %v379 = vld [vmem:[%s347] sm:$0xf]
      %v380 = vld [vmem:[%s347 + $0x4] sm:$0xf]
      %v381 = vld [vmem:[%s347 + $0x8] sm:$0xf]
      %v382 = vld [vmem:[%s347 + $0xc] sm:$0xf]
      %v387 = vunpack.c.l.b16 %v375
      %v388 = vunpack.c.l.b16 %v376
      %v389 = vunpack.c.l.b16 %v377
      %v390 = vunpack.c.l.b16 %v378
      %v391 = vpack.c.b16 %v388, %v387
      %v392 = vpack.c.b16 %v390, %v389
      %v397 = vunpack.c.l.b16 %v379
      %v398 = vunpack.c.l.b16 %v380
      %v399 = vunpack.c.l.b16 %v381
      %v400 = vunpack.c.l.b16 %v382
      %v401 = vpack.c.b16 %v398, %v397
      %v402 = vpack.c.b16 %v400, %v399
      %vm405 = vcmask 261120
      %v407 = vsel %vm405, %v391, 0
      %v410 = vsel %vm405, %v392, 0
      %412 = vmatpush.bf16.msra.mxu0 0
      %413 = vmatpush.bf16.msra.mxu0 0
      %414 = vmatpush.bf16.msra.mxu0 0
      %415 = vmatpush.bf16.msra.mxu0 0
      %416 = vmatpush.bf16.msra.mxu0 0
      %417 = vmatpush.bf16.msra.mxu0 0
      %418 = vmatpush.bf16.msra.mxu0 %v402
      %419 = vmatpush.bf16.msra.mxu0 %v401
      %420 = vmatmul.bf16.gmra.mxu0 %v407
      %v421 = vpop.f32.mrf.mxu0
      %v422 = vadd.f32 0.0, %v421
      %v423 = vpop.f32.mrf.mxu0
      %v424 = vadd.f32 0.0, %v423
      %425 = vmatmul.bf16.gmra.mxu0 %v410
      %v426 = vpop.f32.mrf.mxu0
      %v427 = vadd.f32 0.0, %v426
      %v428 = vpop.f32.mrf.mxu0
      %v429 = vadd.f32 0.0, %v428
      %430 = vdwg.mxu0
      %v431 = vadd.f32 %v371, %v422
      %v432 = vadd.f32 %v372, %v424
      %v433 = vadd.f32 %v373, %v427
      %v434 = vadd.f32 %v374, %v429
      %435 = vst [vmem:[#allocation2] sm:$0xff] %v431
      %436 = vst [vmem:[#allocation2 + $0x8] sm:$0xff] %v432
      %437 = vst [vmem:[#allocation2 + $0x10] sm:$0xff] %v433
      %438 = vst [vmem:[#allocation2 + $0x18] sm:$0xff] %v434
      // Predicated region
      $region53: #{edge_module_forward.5} parent=47 // pred_check
        %p439 = pneg %p363
      $region54: #{edge_module_forward.5} parent=47 // pred_check_branch
        %441 = sbr.rel (%p439) target = $region56
      $region55: #{edge_module_forward.5} parent=47 // pred_region
        %v442 = vld [vmem:[#allocation2] sm:$0xff]
        %v443 = vld [vmem:[#allocation2 + $0x8] sm:$0xff]
        %v444 = vld [vmem:[#allocation2 + $0x10] sm:$0xff]
        %v445 = vld [vmem:[#allocation2 + $0x18] sm:$0xff]
        %v446 = vld [vmem:[%s2] sm:$0xff]
        %v447 = vld [vmem:[%s2 + $0x8] sm:$0xff]
        %v448 = vld [vmem:[%s2 + $0x10] sm:$0xff]
        %v449 = vld [vmem:[%s2 + $0x18] sm:$0xff]
        %451 = vset.pattern.permute.xlu0 0
        %452 = vperm.xlu0 %451, %v446
        %v453 = vpop.permute.xlu0 %452
        %456 = vset.pattern.permute.xlu0 0
        %457 = vperm.xlu0 %456, %v447
        %v458 = vpop.permute.xlu0 %457
        %461 = vset.pattern.permute.xlu0 0
        %462 = vperm.xlu0 %461, %v448
        %v463 = vpop.permute.xlu0 %462
        %466 = vset.pattern.permute.xlu0 0
        %467 = vperm.xlu0 %466, %v449
        %v468 = vpop.permute.xlu0 %467
        %v470 = vmul.f32 %v442, %v453
        %v471 = vmul.f32 %v443, %v458
        %v472 = vmul.f32 %v444, %v463
        %v473 = vmul.f32 %v445, %v468
        %v474 = vld [vmem:[%s3] sm:$0xff]
        %v475 = vld [vmem:[%s3 + $0x8] sm:$0xff]
        %v476 = vld [vmem:[%s3 + $0x10] sm:$0xff]
        %v477 = vld [vmem:[%s3 + $0x18] sm:$0xff]
        %479 = vset.pattern.permute.xlu0 0
        %480 = vperm.xlu0 %479, %v474
        %v481 = vpop.permute.xlu0 %480
        %484 = vset.pattern.permute.xlu0 0
        %485 = vperm.xlu0 %484, %v475
        %v486 = vpop.permute.xlu0 %485
        %489 = vset.pattern.permute.xlu0 0
        %490 = vperm.xlu0 %489, %v476
        %v491 = vpop.permute.xlu0 %490
        %494 = vset.pattern.permute.xlu0 0
        %495 = vperm.xlu0 %494, %v477
        %v496 = vpop.permute.xlu0 %495
        %v498 = vadd.f32 %v470, %v481
        %v499 = vadd.f32 %v471, %v486
        %v500 = vadd.f32 %v472, %v491
        %v501 = vadd.f32 %v473, %v496
        %502 = vst [vmem:[#allocation2] sm:$0xff] %v498
        %503 = vst [vmem:[#allocation2 + $0x8] sm:$0xff] %v499
        %504 = vst [vmem:[#allocation2 + $0x10] sm:$0xff] %v500
        %505 = vst [vmem:[#allocation2 + $0x18] sm:$0xff] %v501
        %v506 = vld [vmem:[#allocation2] sm:$0xff]
        %v507 = vld [vmem:[#allocation2 + $0x8] sm:$0xff]
        %v508 = vld [vmem:[#allocation2 + $0x10] sm:$0xff]
        %v509 = vld [vmem:[#allocation2 + $0x18] sm:$0xff]
        %v510 = vpack.c.bf16 %v506, %v506
        %v511 = vpack.c.bf16 %v507, %v507
        %v512 = vpack.c.bf16 %v508, %v508
        %v513 = vpack.c.bf16 %v509, %v509
        %514 = vst [vmem:[%s357] sm:$0xf] %v510
        %515 = vst [vmem:[%s357 + $0x4] sm:$0xf] %v511
        %516 = vst [vmem:[%s357 + $0x8] sm:$0xf] %v512
        %517 = vst [vmem:[%s357 + $0xc] sm:$0xf] %v513
        %v518 = vld [vmem:[%s4] sm:$0xf]
        %v519 = vld [vmem:[%s4 + $0x4] sm:$0xf]
        %v520 = vld [vmem:[%s4 + $0x8] sm:$0xf]
        %v521 = vld [vmem:[%s4 + $0xc] sm:$0xf]
        %v522 = vld [vmem:[%s4 + $0x10] sm:$0xf]
        %v523 = vld [vmem:[%s4 + $0x14] sm:$0xf]
        %v524 = vld [vmem:[%s4 + $0x18] sm:$0xf]
        %v525 = vld [vmem:[%s4 + $0x1c] sm:$0xf]
        %v526 = vld [vmem:[%s4 + $0x20] sm:$0xf]
        %v527 = vld [vmem:[%s357] sm:$0xf]
        %v528 = vld [vmem:[%s357 + $0x4] sm:$0xf]
        %v529 = vld [vmem:[%s357 + $0x8] sm:$0xf]
        %v530 = vld [vmem:[%s357 + $0xc] sm:$0xf]
        %v540 = vunpack.c.l.b16 %v518
        %v541 = vunpack.c.l.b16 %v519
        %v542 = vunpack.c.l.b16 %v520
        %v543 = vunpack.c.l.b16 %v521
        %v544 = vunpack.c.l.b16 %v522
        %v545 = vunpack.c.l.b16 %v523
        %v546 = vunpack.c.l.b16 %v524
        %v547 = vunpack.c.l.b16 %v525
        %v548 = vunpack.c.l.b16 %v526
        %v549 = vpack.c.b16 %v541, %v540
        %v550 = vpack.c.b16 %v543, %v542
        %v551 = vpack.c.b16 %v545, %v544
        %v552 = vpack.c.b16 %v547, %v546
        %v553 = vpack.c.b16 %v548, %v548
        %v558 = vunpack.c.l.b16 %v527
        %v559 = vunpack.c.l.b16 %v528
        %v560 = vunpack.c.l.b16 %v529
        %v561 = vunpack.c.l.b16 %v530
        %v562 = vpack.c.b16 %v559, %v558
        %v563 = vpack.c.b16 %v561, %v560
        %v567 = vsel %vm405, %v549, 0
        %v570 = vsel %vm405, %v550, 0
        %v573 = vsel %vm405, %v551, 0
        %v576 = vsel %vm405, %v552, 0
        %v579 = vsel %vm405, %v553, 0
        %581 = vmatpush.bf16.msra.mxu0 0
        %582 = vmatpush.bf16.msra.mxu0 0
        %583 = vmatpush.bf16.msra.mxu0 0
        %584 = vmatpush.bf16.msra.mxu0 0
        %585 = vmatpush.bf16.msra.mxu0 0
        %586 = vmatpush.bf16.msra.mxu0 0
        %587 = vmatpush.bf16.msra.mxu0 %v563
        %588 = vmatpush.bf16.msra.mxu0 %v562
        %589 = vmatmul.bf16.gmra.mxu0 %v567
        %v590 = vpop.f32.mrf.mxu0
        %v591 = vadd.f32 0.0, %v590
        %v592 = vpop.f32.mrf.mxu0
        %v593 = vadd.f32 0.0, %v592
        %594 = vmatmul.bf16.gmra.mxu0 %v570
        %v595 = vpop.f32.mrf.mxu0
        %v596 = vadd.f32 0.0, %v595
        %v597 = vpop.f32.mrf.mxu0
        %v598 = vadd.f32 0.0, %v597
        %599 = vmatmul.bf16.gmra.mxu0 %v573
        %v600 = vpop.f32.mrf.mxu0
        %v601 = vadd.f32 0.0, %v600
        %v602 = vpop.f32.mrf.mxu0
        %v603 = vadd.f32 0.0, %v602
        %604 = vmatmul.bf16.gmra.mxu0 %v576
        %v605 = vpop.f32.mrf.mxu0
        %v606 = vadd.f32 0.0, %v605
        %v607 = vpop.f32.mrf.mxu0
        %v608 = vadd.f32 0.0, %v607
        %609 = vmatmul.bf16.gmra.mxu0 %v579
        %v610 = vpop.f32.mrf.mxu0
        %v611 = vadd.f32 0.0, %v610
        %v612 = vpop.f32.mrf.mxu0
        %613 = vdwg.mxu0
        %614 = vrot.lane.b32.xlu0 %v591, 9
        %v615 = vpop.permute.xlu0 %614
        %v616 = vld [vmem:[%s6] sm:$0x1]
        %v618 = vperm.slane %v616, 0
        %v620 = vmul.f32 %v615, %v618
        %v621 = vadd.f32 %v620, 0.0
        %622 = vrot.lane.b32.xlu0 %v593, 8
        %v623 = vpop.permute.xlu0 %622
        %s624 = scalar_lea.vmem %s6, 1
        %v625 = vld [vmem:[%s624] sm:$0x1]
        %v627 = vperm.slane %v625, 0
        %v629 = vmul.f32 %v623, %v627
        %v630 = vadd.f32 %v621, %v629
        %631 = vrot.lane.b32.xlu0 %v596, 7
        %v632 = vpop.permute.xlu0 %631
        %s633 = scalar_lea.vmem %s6, 2
        %v634 = vld [vmem:[%s633] sm:$0x1]
        %v636 = vperm.slane %v634, 0
        %v638 = vmul.f32 %v632, %v636
        %v639 = vadd.f32 %v630, %v638
        %640 = vrot.lane.b32.xlu0 %v598, 1
        %v641 = vpop.permute.xlu0 %640
        %s642 = scalar_lea.vmem %s6, 3
        %v643 = vld [vmem:[%s642] sm:$0x1]
        %v645 = vperm.slane %v643, 0
        %v647 = vmul.f32 %v641, %v645
        %v648 = vadd.f32 %v639, %v647
        %s649 = scalar_lea.vmem %s6, 4
        %v650 = vld [vmem:[%s649] sm:$0x1]
        %v652 = vperm.slane %v650, 0
        %v654 = vmul.f32 %v601, %v652
        %v655 = vadd.f32 %v648, %v654
        %656 = vrot.lane.b32.xlu0 %v603, 127
        %v657 = vpop.permute.xlu0 %656
        %s658 = scalar_lea.vmem %s6, 5
        %v659 = vld [vmem:[%s658] sm:$0x1]
        %v661 = vperm.slane %v659, 0
        %v663 = vmul.f32 %v657, %v661
        %v664 = vadd.f32 %v655, %v663
        %665 = vrot.lane.b32.xlu0 %v606, 121
        %v666 = vpop.permute.xlu0 %665
        %s667 = scalar_lea.vmem %s6, 6
        %v668 = vld [vmem:[%s667] sm:$0x1]
        %v670 = vperm.slane %v668, 0
        %v672 = vmul.f32 %v666, %v670
        %v673 = vadd.f32 %v664, %v672
        %674 = vrot.lane.b32.xlu0 %v608, 120
        %v675 = vpop.permute.xlu0 %674
        %s676 = scalar_lea.vmem %s6, 7
        %v677 = vld [vmem:[%s676] sm:$0x1]
        %v679 = vperm.slane %v677, 0
        %v681 = vmul.f32 %v675, %v679
        %v682 = vadd.f32 %v673, %v681
        %683 = vrot.lane.b32.xlu0 %v611, 119
        %v684 = vpop.permute.xlu0 %683
        %s685 = scalar_lea.vmem %s6, 8
        %v686 = vld [vmem:[%s685] sm:$0x1]
        %v688 = vperm.slane %v686, 0
        %v690 = vmul.f32 %v684, %v688
        %v691 = vadd.f32 %v682, %v690
        %v692 = vld [vmem:[%s5] sm:$0xff]
        %694 = vset.pattern.permute.xlu0 0
        %695 = vperm.xlu0 %694, %v692
        %v696 = vpop.permute.xlu0 %695
        %v698 = vadd.f32 %v691, %v696
        %699 = vst [vmem:[%s361] sm:$0xff] %v698
      $region56: #{edge_module_forward.5} parent=47 // pred_fallthru
        _
      %p700 = scmp.lt.s32.totalorder %s24, 1
      %s701 = scalar_select %p700, %s24, 1
      %s702 = smul.addr %s701, 4
      %s703 = smul.addr %s702, 4
      %s704 = scalar_lea.vmem %s7, %s703
      %p705 = scmp.lt.s32.totalorder %s24, 1
      %s706 = scalar_select %p705, %s24, 1
      %s707 = smul.addr %s706, 8
      %s708 = scalar_lea.vmem %s8, %s707
      // Predicated region
      $region57: #{edge_module_forward.5} parent=47 // pred_check
        %p709 = pneg %p209
      $region58: #{edge_module_forward.5} parent=47 // pred_check_branch
        %711 = sbr.rel (%p709) target = $region60
      $region59: #{edge_module_forward.5} parent=47 // pred_region
        _
      $region60: #{edge_module_forward.5} parent=47 // pred_fallthru
        _
      // Predicated region
      $region61: #{edge_module_forward.5} parent=47 // pred_check
        %p712 = pneg %p235
      $region62: #{edge_module_forward.5} parent=47 // pred_check_branch
        %714 = sbr.rel (%p712) target = $region64
      $region63: #{edge_module_forward.5} parent=47 // pred_region
        _
      $region64: #{edge_module_forward.5} parent=47 // pred_fallthru
        _
    $region48: #{edge_module_forward.5} parent=5 // pred_fallthru
      _
    %p715 = scmp.le.s32.totalorder 2, %s15
    // Predicated region
    $region65: #{edge_module_forward.5} parent=5 // pred_check
      %p716 = pneg %p715
    $region66: #{edge_module_forward.5} parent=5 // pred_check_branch
      %718 = sbr.rel (%p716) target = $region68
    $region67: #{edge_module_forward.5} parent=5 // pred_region
      %s719 = ssub.s32 %s15, 2
      // Predicated region
      $region69: #{edge_module_forward.5} parent=67 // pred_check
        %p720 = pneg %p215
      $region70: #{edge_module_forward.5} parent=67 // pred_check_branch
        %722 = sbr.rel (%p720) target = $region72
      $region71: #{edge_module_forward.5} parent=67 // pred_region
        %p723 = scmp.lt.s32.totalorder %s26, 1
        %s724 = scalar_select %p723, %s26, 1
        %s725 = smul.addr %s724, 4
        %s726 = smul.addr %s725, 4
        %s727 = scalar_lea.vmem %s7, %s726
      $region72: #{edge_module_forward.5} parent=67 // pred_fallthru
        _
      // Predicated region
      $region73: #{edge_module_forward.5} parent=67 // pred_check
        %p728 = pneg %p241
      $region74: #{edge_module_forward.5} parent=67 // pred_check_branch
        %730 = sbr.rel (%p728) target = $region76
      $region75: #{edge_module_forward.5} parent=67 // pred_region
        %p731 = scmp.lt.s32.totalorder %s26, 1
        %s732 = scalar_select %p731, %s26, 1
        %s733 = smul.addr %s732, 8
        %s734 = scalar_lea.vmem %s8, %s733
      $region76: #{edge_module_forward.5} parent=67 // pred_fallthru
        _
    $region68: #{edge_module_forward.5} parent=5 // pred_fallthru
      _
  $region6: #{edge_module_forward.5} parent=0 // loop_footer
    %s19 = sadd.s32 1, %s15
  $region7: #{edge_module_forward.5} parent=0 // loop_footer_branch
    %14 = sbr.rel target = $region3
  $region8: #{edge_module_forward.5} parent=0 // loop_exit
    _

// kernel: edge_module_forward.7
$region0: #{edge_module_forward.7}
  #allocation0 [shape = 'u32[]', space=smem, size = 0x4, offset = 0x4, fixed_abs, tag = 'smem constant byte address 0x4 - core index']
  #allocation1 [shape = 'u32[72,128]{1,0:T(1,128)}', space=vmem, size = 0x9000, scoped, tag = 'internal scratch']
  %s0 = inlined_call_operand.vmem [shape: bf16[2,6,256], index: 0, kind: input, shape index: {}]
  %s1 = inlined_call_operand.vmem [shape: bf16[8,6], index: 1, kind: input, shape index: {}]
  %s2 = inlined_call_operand.vmem [shape: f32[8,1], index: 2, kind: input, shape index: {}]
  %s3 = inlined_call_operand.vmem [shape: f32[2,8,256], index: 3, kind: output, shape index: {}]
  %s4 = sld [smem:[#allocation0]]
  $region45: #{edge_module_forward.7} parent=0
    _
  %s6 = ssub.s32 1, %s4
  %s7 = scalar_select 0, %s6, %s4
  loop: start=0, step=1, limit=4
  $region2: #{edge_module_forward.7} parent=0 // loop_pre_header
    _
  $region3: #{edge_module_forward.7} parent=0 // loop_header
    %s9 = sphi 0, %s13
    %p10 = scmp.ge.s32.totalorder %s9, 4
    %s19 = sphi 0, %s21
    %s22 = sphi 0, %s19
    %s23 = sphi 0, %s22
    %s39 = sphi 0, %s23
    %s43 = sphi 0, %s43
    %s45 = sphi 0, %s43
    %s46 = sphi 0, %s45
    %s60 = sphi 0, %s46
    %s64 = sphi 0, %s64
    %s66 = sphi 0, %s64
    %s67 = sphi 0, %s66
    %s81 = sphi 0, %s67
    %s87 = sphi 0, %s89
    %s90 = sphi 0, %s87
    %s91 = sphi 0, %s90
    %s107 = sphi 0, %s91
  $region4: #{edge_module_forward.7} parent=0 // loop_header_branch
    %12 = sbr.rel (%p10) target = $region8
  $region5: #{edge_module_forward.7} parent=0 // loop_body
    %s14 = ssub.s32 %s9, 1
    %s15 = ssub.s32 %s9, 2
    %s16 = sadd.s32 %s9, 1
    %s17 = ssub.s32 %s9, %s16
    %p18 = scmp.eq.s32.totalorder %s17, 0
    %s20 = sadd.s32 %s19, 1
    %s21 = scalar_select %p18, %s19, %s20
    %p24 = pneg %p18
    %p25 = scmp.eq.s32.totalorder %s9, 1
    %p26 = por %p24, %p25
    %p27 = scmp.ne.s32.totalorder %s19, %s22
    %p28 = scmp.eq.s32.totalorder %s9, 0
    %p29 = por %p27, %p28
    %p30 = scmp.ne.s32.totalorder %s19, %s22
    %p31 = scmp.eq.s32.totalorder %s14, 1
    %p32 = por %p30, %p31
    %p33 = scmp.ne.s32.totalorder %s22, %s23
    %p34 = scmp.eq.s32.totalorder %s14, 0
    %p35 = por %p33, %p34
    %p36 = scmp.ne.s32.totalorder %s22, %s23
    %p37 = scmp.eq.s32.totalorder %s15, 1
    %p38 = por %p36, %p37
    %p40 = scmp.ne.s32.totalorder %s23, %s39
    %p41 = scmp.eq.s32.totalorder %s15, 0
    %p42 = por %p40, %p41
    %s44 = sadd.s32 %s43, 1
    %p47 = scmp.eq.s32.totalorder %s9, 1
    %p48 = scmp.ne.s32.totalorder %s43, %s45
    %p49 = scmp.eq.s32.totalorder %s9, 0
    %p50 = por %p48, %p49
    %p51 = scmp.ne.s32.totalorder %s43, %s45
    %p52 = scmp.eq.s32.totalorder %s14, 1
    %p53 = por %p51, %p52
    %p54 = scmp.ne.s32.totalorder %s45, %s46
    %p55 = scmp.eq.s32.totalorder %s14, 0
    %p56 = por %p54, %p55
    %p57 = scmp.ne.s32.totalorder %s45, %s46
    %p58 = scmp.eq.s32.totalorder %s15, 1
    %p59 = por %p57, %p58
    %p61 = scmp.ne.s32.totalorder %s46, %s60
    %p62 = scmp.eq.s32.totalorder %s15, 0
    %p63 = por %p61, %p62
    %s65 = sadd.s32 %s64, 1
    %p68 = scmp.eq.s32.totalorder %s9, 1
    %p69 = scmp.ne.s32.totalorder %s64, %s66
    %p70 = scmp.eq.s32.totalorder %s9, 0
    %p71 = por %p69, %p70
    %p72 = scmp.ne.s32.totalorder %s64, %s66
    %p73 = scmp.eq.s32.totalorder %s14, 1
    %p74 = por %p72, %p73
    %p75 = scmp.ne.s32.totalorder %s66, %s67
    %p76 = scmp.eq.s32.totalorder %s14, 0
    %p77 = por %p75, %p76
    %p78 = scmp.ne.s32.totalorder %s66, %s67
    %p79 = scmp.eq.s32.totalorder %s15, 1
    %p80 = por %p78, %p79
    %p82 = scmp.ne.s32.totalorder %s67, %s81
    %p83 = scmp.eq.s32.totalorder %s15, 0
    %p84 = por %p82, %p83
    %s85 = ssub.s32 %s9, %s16
    %p86 = scmp.eq.s32.totalorder %s85, 0
    %s88 = sadd.s32 %s87, 1
    %s89 = scalar_select %p86, %s87, %s88
    %p92 = pneg %p86
    %p93 = scmp.eq.s32.totalorder %s9, 1
    %p94 = por %p92, %p93
    %p95 = scmp.ne.s32.totalorder %s87, %s90
    %p96 = scmp.eq.s32.totalorder %s9, 0
    %p97 = por %p95, %p96
    %p98 = scmp.ne.s32.totalorder %s87, %s90
    %p99 = scmp.eq.s32.totalorder %s14, 1
    %p100 = por %p98, %p99
    %p101 = scmp.ne.s32.totalorder %s90, %s91
    %p102 = scmp.eq.s32.totalorder %s14, 0
    %p103 = por %p101, %p102
    %p104 = scmp.ne.s32.totalorder %s90, %s91
    %p105 = scmp.eq.s32.totalorder %s15, 1
    %p106 = por %p104, %p105
    %p108 = scmp.ne.s32.totalorder %s91, %s107
    %p109 = scmp.eq.s32.totalorder %s15, 0
    %p110 = por %p108, %p109
    %p111 = scmp.le.s32.totalorder 1, %s9
    %p112 = scmp.lt.s32.totalorder %s9, 3
    %p113 = pnand %p111, %p112
    %p114 = pneg %p113
    // Predicated region
    $region9: #{edge_module_forward.7} parent=5 // pred_check
      _
    $region10: #{edge_module_forward.7} parent=5 // pred_check_branch
      %116 = sbr.rel (%p113) target = $region12
    $region11: #{edge_module_forward.7} parent=5 // pred_region
      %s117 = ssub.s32 %s9, 1
      // Predicated region
      $region13: #{edge_module_forward.7} parent=11 // pred_check
        %p118 = pneg %p56
      $region14: #{edge_module_forward.7} parent=11 // pred_check_branch
        %120 = sbr.rel (%p118) target = $region16
      $region15: #{edge_module_forward.7} parent=11 // pred_region
        _
      $region16: #{edge_module_forward.7} parent=11 // pred_fallthru
        _
      // Predicated region
      $region17: #{edge_module_forward.7} parent=11 // pred_check
        %p121 = pneg %p77
      $region18: #{edge_module_forward.7} parent=11 // pred_check_branch
        %123 = sbr.rel (%p121) target = $region20
      $region19: #{edge_module_forward.7} parent=11 // pred_region
        _
      $region20: #{edge_module_forward.7} parent=11 // pred_fallthru
        _
    $region12: #{edge_module_forward.7} parent=5 // pred_fallthru
      _
    %p124 = scmp.lt.s32.totalorder %s9, 2
    // Predicated region
    $region21: #{edge_module_forward.7} parent=5 // pred_check
      %p125 = pneg %p124
    $region22: #{edge_module_forward.7} parent=5 // pred_check_branch
      %127 = sbr.rel (%p125) target = $region24
    $region23: #{edge_module_forward.7} parent=5 // pred_region
      // Predicated region
      $region25: #{edge_module_forward.7} parent=23 // pred_check
        %p128 = pneg %p29
      $region26: #{edge_module_forward.7} parent=23 // pred_check_branch
        %130 = sbr.rel (%p128) target = $region28
      $region27: #{edge_module_forward.7} parent=23 // pred_region
        %p131 = scmp.lt.s32.totalorder %s9, 1
        %s132 = scalar_select %p131, %s9, 1
        %s133 = smul.addr %s132, 2
        %s134 = smul.addr %s133, 4
        %s135 = scalar_lea.vmem %s0, %s134
      $region28: #{edge_module_forward.7} parent=23 // pred_fallthru
        _
    $region24: #{edge_module_forward.7} parent=5 // pred_fallthru
      _
    %p136 = scmp.le.s32.totalorder 1, %s9
    %p137 = scmp.lt.s32.totalorder %s9, 3
    %p138 = pnand %p136, %p137
    %p139 = pneg %p138
    // Predicated region
    $region29: #{edge_module_forward.7} parent=5 // pred_check
      _
    $region30: #{edge_module_forward.7} parent=5 // pred_check_branch
      %141 = sbr.rel (%p138) target = $region32
    $region31: #{edge_module_forward.7} parent=5 // pred_region
      %s142 = ssub.s32 %s9, 1
      %p143 = scmp.lt.s32.totalorder %s14, 1
      %s144 = scalar_select %p143, %s14, 1
      %s145 = smul.addr %s144, 2
      %s146 = smul.addr %s145, 4
      %s147 = scalar_lea.vmem %s0, %s146
      %p148 = pneg %p35
      %p149 = pneg %p32
      %p150 = pneg %p56
      %p151 = pneg %p53
      %p152 = pneg %p77
      %p153 = pneg %p74
      %p154 = pneg %p103
      %p155 = pneg %p100
      %p156 = scmp.lt.s32.totalorder %s14, 1
      %s157 = scalar_select %p156, %s14, 1
      %s158 = smul.addr %s157, 2
      %s159 = smul.addr %s158, 8
      %s160 = scalar_lea.vmem %s3, %s159
      %p161 = scmp.lt.s32.totalorder %s14, 1
      %s162 = scalar_select %p161, %s14, 1
      %s163 = smul.addr %s162, 2
      %s164 = smul.addr %s163, 4
      %s165 = scalar_lea.vmem %s0, %s164
      %p166 = scmp.lt.s32.totalorder %s14, 1
      %s167 = scalar_select %p166, %s14, 1
      %s168 = smul.addr %s167, 2
      %s169 = smul.addr %s168, 8
      %s170 = scalar_lea.vmem %s3, %s169
      %v172 = vld [vmem:[%s1] sm:$0xf]
      %v173 = vld [vmem:[%s165] sm:$0x77]
      %v174 = vld [vmem:[%s2] sm:$0xff]
      %176 = vset.pattern.permute.xlu0 0
      %177 = vperm.xlu0 %176, %v174
      %v178 = vpop.permute.xlu0 %177
      %v181 = vunpack.c.l.b16 %v173
      %v182 = vunpack.c.h.b16 %v173
      %v183 = vpack.c.b16 %v181, %v181
      %v184 = vpack.c.b16 %v182, %v182
      %vm185 = vcmask 48128
      %v187 = vsel %vm185, %v172, 0
      %vm189 = vcmask 1042432
      %v191 = vsel %vm189, %v183, 0
      %v194 = vsel %vm189, %v184, 0
      %196 = vmatpush.bf16.msra.mxu0 0
      %197 = vmatpush.bf16.msra.mxu0 0
      %198 = vmatpush.bf16.msra.mxu0 0
      %199 = vmatpush.bf16.msra.mxu0 0
      %200 = vmatpush.bf16.msra.mxu0 0
      %201 = vmatpush.bf16.msra.mxu0 0
      %202 = vmatpush.bf16.msra.mxu0 0
      %203 = vmatpush.bf16.msra.mxu0 %v191
      %204 = vmatmul.bf16.gmra.mxu0 %v187
      %v205 = vpop.f32.mrf.mxu0
      %v206 = vadd.f32 %v178, %v205
      %v207 = vpop.f32.mrf.mxu0
      %208 = vdwg.mxu0
      %209 = vmatpush.bf16.msra.mxu0 0
      %210 = vmatpush.bf16.msra.mxu0 0
      %211 = vmatpush.bf16.msra.mxu0 0
      %212 = vmatpush.bf16.msra.mxu0 0
      %213 = vmatpush.bf16.msra.mxu0 0
      %214 = vmatpush.bf16.msra.mxu0 0
      %215 = vmatpush.bf16.msra.mxu0 0
      %216 = vmatpush.bf16.msra.mxu0 %v194
      %217 = vmatmul.bf16.gmra.mxu0 %v187
      %v218 = vpop.f32.mrf.mxu0
      %v219 = vadd.f32 %v178, %v218
      %v220 = vpop.f32.mrf.mxu0
      %221 = vdwg.mxu0
      %222 = vst [vmem:[%s170] sm:$0xff] %v206
      %223 = vst [vmem:[%s170 + $0x8] sm:$0xff] %v219
      %p224 = scmp.lt.s32.totalorder %s14, 1
      %s225 = scalar_select %p224, %s14, 1
      %s226 = smul.addr %s225, 2
      %s227 = smul.addr %s226, 8
      %s228 = scalar_lea.vmem %s3, %s227
      // Predicated region
      $region33: #{edge_module_forward.7} parent=31 // pred_check
        %p229 = pneg %p100
      $region34: #{edge_module_forward.7} parent=31 // pred_check_branch
        %231 = sbr.rel (%p229) target = $region36
      $region35: #{edge_module_forward.7} parent=31 // pred_region
        _
      $region36: #{edge_module_forward.7} parent=31 // pred_fallthru
        _
    $region32: #{edge_module_forward.7} parent=5 // pred_fallthru
      _
    %p232 = scmp.le.s32.totalorder 2, %s9
    // Predicated region
    $region37: #{edge_module_forward.7} parent=5 // pred_check
      %p233 = pneg %p232
    $region38: #{edge_module_forward.7} parent=5 // pred_check_branch
      %235 = sbr.rel (%p233) target = $region40
    $region39: #{edge_module_forward.7} parent=5 // pred_region
      %s236 = ssub.s32 %s9, 2
      // Predicated region
      $region41: #{edge_module_forward.7} parent=39 // pred_check
        %p237 = pneg %p106
      $region42: #{edge_module_forward.7} parent=39 // pred_check_branch
        %239 = sbr.rel (%p237) target = $region44
      $region43: #{edge_module_forward.7} parent=39 // pred_region
        %p240 = scmp.lt.s32.totalorder %s15, 1
        %s241 = scalar_select %p240, %s15, 1
        %s242 = smul.addr %s241, 2
        %s243 = smul.addr %s242, 8
        %s244 = scalar_lea.vmem %s3, %s243
      $region44: #{edge_module_forward.7} parent=39 // pred_fallthru
        _
    $region40: #{edge_module_forward.7} parent=5 // pred_fallthru
      _
  $region6: #{edge_module_forward.7} parent=0 // loop_footer
    %s13 = sadd.s32 1, %s9
  $region7: #{edge_module_forward.7} parent=0 // loop_footer_branch
    %8 = sbr.rel target = $region3
  $region8: #{edge_module_forward.7} parent=0 // loop_exit
    _

// kernel: edge_module_forward.4
$region0: #{edge_module_forward.4}
  #allocation0 [shape = 'u32[]', space=smem, size = 0x4, offset = 0x4, fixed_abs, tag = 'smem constant byte address 0x4 - core index']
  #allocation1 [shape = 'u32[72,128]{1,0:T(1,128)}', space=vmem, size = 0x9000, scoped, tag = 'internal scratch']
  #allocation2 [shape = 'f32[32,256]{1,0:T(8,128)}', space=vmem, size = 0x8000, scoped, tag = 'scratch operand']
  %s0 = inlined_call_operand.vmem [shape: bf16[2,16,256], index: 0, kind: input, shape index: {}]
  %s1 = inlined_call_operand.vmem [shape: bf16[32,16], index: 1, kind: input, shape index: {}]
  %s2 = inlined_call_operand.vmem [shape: f32[32,1], index: 2, kind: input, shape index: {}]
  %s3 = inlined_call_operand.vmem [shape: f32[32,1], index: 3, kind: input, shape index: {}]
  %s4 = inlined_call_operand.vmem [shape: bf16[72,32], index: 4, kind: input, shape index: {}]
  %s5 = inlined_call_operand.vmem [shape: f32[8,1], index: 5, kind: input, shape index: {}]
  %s6 = inlined_call_operand.vmem [shape: f32[9,1,256], index: 6, kind: input, shape index: {}]
  %s7 = inlined_call_operand.vmem [shape: bf16[2,32,256], index: 7, kind: output, shape index: {0}]
  %s8 = inlined_call_operand.vmem [shape: f32[2,8,256], index: 8, kind: output, shape index: {1}]
  %9 = xla_tuple %s7, %s8
  %s10 = sld [smem:[#allocation0]]
  $region77: #{edge_module_forward.4} parent=0
    _
  %s12 = ssub.s32 1, %s10
  %s13 = scalar_select 0, %s12, %s10
  loop: start=0, step=1, limit=4
  $region2: #{edge_module_forward.4} parent=0 // loop_pre_header
    _
  $region3: #{edge_module_forward.4} parent=0 // loop_header
    %s15 = sphi 0, %s19
    %p16 = scmp.ge.s32.totalorder %s15, 4
    %s22 = sphi 0, %s34
    %s23 = sphi 0, %s30
    %s24 = sphi 0, %s22
    %s25 = sphi 0, %s23
    %s26 = sphi 0, %s24
    %s27 = sphi 0, %s25
    %s39 = sphi 0, %s41
    %s42 = sphi 0, %s39
    %s43 = sphi 0, %s42
    %s59 = sphi 0, %s43
    %s65 = sphi 0, %s67
    %s68 = sphi 0, %s65
    %s69 = sphi 0, %s68
    %s85 = sphi 0, %s69
    %s89 = sphi 0, %s89
    %s91 = sphi 0, %s89
    %s92 = sphi 0, %s91
    %s106 = sphi 0, %s92
    %s110 = sphi 0, %s110
    %s112 = sphi 0, %s110
    %s113 = sphi 0, %s112
    %s127 = sphi 0, %s113
    %s131 = sphi 0, %s131
    %s133 = sphi 0, %s131
    %s134 = sphi 0, %s133
    %s148 = sphi 0, %s134
    %s152 = sphi 0, %s152
    %s154 = sphi 0, %s152
    %s155 = sphi 0, %s154
    %s169 = sphi 0, %s155
    %s173 = sphi 0, %s173
    %s175 = sphi 0, %s173
    %s176 = sphi 0, %s175
    %s190 = sphi 0, %s176
    %s196 = sphi 0, %s198
    %s199 = sphi 0, %s196
    %s200 = sphi 0, %s199
    %s216 = sphi 0, %s200
    %s222 = sphi 0, %s224
    %s225 = sphi 0, %s222
    %s226 = sphi 0, %s225
    %s242 = sphi 0, %s226
  $region4: #{edge_module_forward.4} parent=0 // loop_header_branch
    %18 = sbr.rel (%p16) target = $region8
  $region5: #{edge_module_forward.4} parent=0 // loop_body
    %s20 = ssub.s32 %s15, 1
    %s21 = ssub.s32 %s15, 2
    %s28 = sadd.s32 1, %s23
    %p29 = scmp.ge.s32.totalorder %s28, 1
    %s30 = scalar_select %p29, 0, %s28
    %s31 = sadd.s32 1, %s22
    %s32 = scalar_select %p29, %s31, %s22
    %p33 = scmp.ge.s32.totalorder %s32, 2
    %s34 = scalar_select %p33, 0, %s32
    %s35 = ssub.s32 %s22, %s34
    %s36 = ssub.s32 %s23, %s30
    %s37 = sor.u32 %s35, %s36
    %p38 = scmp.eq.s32.totalorder %s37, 0
    %s40 = sadd.s32 %s39, 1
    %s41 = scalar_select %p38, %s39, %s40
    %p44 = pneg %p38
    %p45 = scmp.eq.s32.totalorder %s15, 1
    %p46 = por %p44, %p45
    %p47 = scmp.ne.s32.totalorder %s39, %s42
    %p48 = scmp.eq.s32.totalorder %s15, 0
    %p49 = por %p47, %p48
    %p50 = scmp.ne.s32.totalorder %s39, %s42
    %p51 = scmp.eq.s32.totalorder %s20, 1
    %p52 = por %p50, %p51
    %p53 = scmp.ne.s32.totalorder %s42, %s43
    %p54 = scmp.eq.s32.totalorder %s20, 0
    %p55 = por %p53, %p54
    %p56 = scmp.ne.s32.totalorder %s42, %s43
    %p57 = scmp.eq.s32.totalorder %s21, 1
    %p58 = por %p56, %p57
    %p60 = scmp.ne.s32.totalorder %s43, %s59
    %p61 = scmp.eq.s32.totalorder %s21, 0
    %p62 = por %p60, %p61
    %s63 = ssub.s32 %s23, %s30
    %p64 = scmp.eq.s32.totalorder %s63, 0
    %s66 = sadd.s32 %s65, 1
    %s67 = scalar_select %p64, %s65, %s66
    %p70 = pneg %p64
    %p71 = scmp.eq.s32.totalorder %s15, 1
    %p72 = por %p70, %p71
    %p73 = scmp.ne.s32.totalorder %s65, %s68
    %p74 = scmp.eq.s32.totalorder %s15, 0
    %p75 = por %p73, %p74
    %p76 = scmp.ne.s32.totalorder %s65, %s68
    %p77 = scmp.eq.s32.totalorder %s20, 1
    %p78 = por %p76, %p77
    %p79 = scmp.ne.s32.totalorder %s68, %s69
    %p80 = scmp.eq.s32.totalorder %s20, 0
    %p81 = por %p79, %p80
    %p82 = scmp.ne.s32.totalorder %s68, %s69
    %p83 = scmp.eq.s32.totalorder %s21, 1
    %p84 = por %p82, %p83
    %p86 = scmp.ne.s32.totalorder %s69, %s85
    %p87 = scmp.eq.s32.totalorder %s21, 0
    %p88 = por %p86, %p87
    %s90 = sadd.s32 %s89, 1
    %p93 = scmp.eq.s32.totalorder %s15, 1
    %p94 = scmp.ne.s32.totalorder %s89, %s91
    %p95 = scmp.eq.s32.totalorder %s15, 0
    %p96 = por %p94, %p95
    %p97 = scmp.ne.s32.totalorder %s89, %s91
    %p98 = scmp.eq.s32.totalorder %s20, 1
    %p99 = por %p97, %p98
    %p100 = scmp.ne.s32.totalorder %s91, %s92
    %p101 = scmp.eq.s32.totalorder %s20, 0
    %p102 = por %p100, %p101
    %p103 = scmp.ne.s32.totalorder %s91, %s92
    %p104 = scmp.eq.s32.totalorder %s21, 1
    %p105 = por %p103, %p104
    %p107 = scmp.ne.s32.totalorder %s92, %s106
    %p108 = scmp.eq.s32.totalorder %s21, 0
    %p109 = por %p107, %p108
    %s111 = sadd.s32 %s110, 1
    %p114 = scmp.eq.s32.totalorder %s15, 1
    %p115 = scmp.ne.s32.totalorder %s110, %s112
    %p116 = scmp.eq.s32.totalorder %s15, 0
    %p117 = por %p115, %p116
    %p118 = scmp.ne.s32.totalorder %s110, %s112
    %p119 = scmp.eq.s32.totalorder %s20, 1
    %p120 = por %p118, %p119
    %p121 = scmp.ne.s32.totalorder %s112, %s113
    %p122 = scmp.eq.s32.totalorder %s20, 0
    %p123 = por %p121, %p122
    %p124 = scmp.ne.s32.totalorder %s112, %s113
    %p125 = scmp.eq.s32.totalorder %s21, 1
    %p126 = por %p124, %p125
    %p128 = scmp.ne.s32.totalorder %s113, %s127
    %p129 = scmp.eq.s32.totalorder %s21, 0
    %p130 = por %p128, %p129
    %s132 = sadd.s32 %s131, 1
    %p135 = scmp.eq.s32.totalorder %s15, 1
    %p136 = scmp.ne.s32.totalorder %s131, %s133
    %p137 = scmp.eq.s32.totalorder %s15, 0
    %p138 = por %p136, %p137
    %p139 = scmp.ne.s32.totalorder %s131, %s133
    %p140 = scmp.eq.s32.totalorder %s20, 1
    %p141 = por %p139, %p140
    %p142 = scmp.ne.s32.totalorder %s133, %s134
    %p143 = scmp.eq.s32.totalorder %s20, 0
    %p144 = por %p142, %p143
    %p145 = scmp.ne.s32.totalorder %s133, %s134
    %p146 = scmp.eq.s32.totalorder %s21, 1
    %p147 = por %p145, %p146
    %p149 = scmp.ne.s32.totalorder %s134, %s148
    %p150 = scmp.eq.s32.totalorder %s21, 0
    %p151 = por %p149, %p150
    %s153 = sadd.s32 %s152, 1
    %p156 = scmp.eq.s32.totalorder %s15, 1
    %p157 = scmp.ne.s32.totalorder %s152, %s154
    %p158 = scmp.eq.s32.totalorder %s15, 0
    %p159 = por %p157, %p158
    %p160 = scmp.ne.s32.totalorder %s152, %s154
    %p161 = scmp.eq.s32.totalorder %s20, 1
    %p162 = por %p160, %p161
    %p163 = scmp.ne.s32.totalorder %s154, %s155
    %p164 = scmp.eq.s32.totalorder %s20, 0
    %p165 = por %p163, %p164
    %p166 = scmp.ne.s32.totalorder %s154, %s155
    %p167 = scmp.eq.s32.totalorder %s21, 1
    %p168 = por %p166, %p167
    %p170 = scmp.ne.s32.totalorder %s155, %s169
    %p171 = scmp.eq.s32.totalorder %s21, 0
    %p172 = por %p170, %p171
    %s174 = sadd.s32 %s173, 1
    %p177 = scmp.eq.s32.totalorder %s15, 1
    %p178 = scmp.ne.s32.totalorder %s173, %s175
    %p179 = scmp.eq.s32.totalorder %s15, 0
    %p180 = por %p178, %p179
    %p181 = scmp.ne.s32.totalorder %s173, %s175
    %p182 = scmp.eq.s32.totalorder %s20, 1
    %p183 = por %p181, %p182
    %p184 = scmp.ne.s32.totalorder %s175, %s176
    %p185 = scmp.eq.s32.totalorder %s20, 0
    %p186 = por %p184, %p185
    %p187 = scmp.ne.s32.totalorder %s175, %s176
    %p188 = scmp.eq.s32.totalorder %s21, 1
    %p189 = por %p187, %p188
    %p191 = scmp.ne.s32.totalorder %s176, %s190
    %p192 = scmp.eq.s32.totalorder %s21, 0
    %p193 = por %p191, %p192
    %s194 = ssub.s32 %s22, %s34
    %p195 = scmp.eq.s32.totalorder %s194, 0
    %s197 = sadd.s32 %s196, 1
    %s198 = scalar_select %p195, %s196, %s197
    %p201 = pneg %p195
    %p202 = scmp.eq.s32.totalorder %s15, 1
    %p203 = por %p201, %p202
    %p204 = scmp.ne.s32.totalorder %s196, %s199
    %p205 = scmp.eq.s32.totalorder %s15, 0
    %p206 = por %p204, %p205
    %p207 = scmp.ne.s32.totalorder %s196, %s199
    %p208 = scmp.eq.s32.totalorder %s20, 1
    %p209 = por %p207, %p208
    %p210 = scmp.ne.s32.totalorder %s199, %s200
    %p211 = scmp.eq.s32.totalorder %s20, 0
    %p212 = por %p210, %p211
    %p213 = scmp.ne.s32.totalorder %s199, %s200
    %p214 = scmp.eq.s32.totalorder %s21, 1
    %p215 = por %p213, %p214
    %p217 = scmp.ne.s32.totalorder %s200, %s216
    %p218 = scmp.eq.s32.totalorder %s21, 0
    %p219 = por %p217, %p218
    %s220 = ssub.s32 %s22, %s34
    %p221 = scmp.eq.s32.totalorder %s220, 0
    %s223 = sadd.s32 %s222, 1
    %s224 = scalar_select %p221, %s222, %s223
    %p227 = pneg %p221
    %p228 = scmp.eq.s32.totalorder %s15, 1
    %p229 = por %p227, %p228
    %p230 = scmp.ne.s32.totalorder %s222, %s225
    %p231 = scmp.eq.s32.totalorder %s15, 0
    %p232 = por %p230, %p231
    %p233 = scmp.ne.s32.totalorder %s222, %s225
    %p234 = scmp.eq.s32.totalorder %s20, 1
    %p235 = por %p233, %p234
    %p236 = scmp.ne.s32.totalorder %s225, %s226
    %p237 = scmp.eq.s32.totalorder %s20, 0
    %p238 = por %p236, %p237
    %p239 = scmp.ne.s32.totalorder %s225, %s226
    %p240 = scmp.eq.s32.totalorder %s21, 1
    %p241 = por %p239, %p240
    %p243 = scmp.ne.s32.totalorder %s226, %s242
    %p244 = scmp.eq.s32.totalorder %s21, 0
    %p245 = por %p243, %p244
    %p246 = scmp.le.s32.totalorder 1, %s15
    %p247 = scmp.lt.s32.totalorder %s15, 3
    %p248 = pnand %p246, %p247
    %p249 = pneg %p248
    // Predicated region
    $region9: #{edge_module_forward.4} parent=5 // pred_check
      _
    $region10: #{edge_module_forward.4} parent=5 // pred_check_branch
      %251 = sbr.rel (%p248) target = $region12
    $region11: #{edge_module_forward.4} parent=5 // pred_region
      %s252 = ssub.s32 %s15, 1
      // Predicated region
      $region13: #{edge_module_forward.4} parent=11 // pred_check
        %p253 = pneg %p81
      $region14: #{edge_module_forward.4} parent=11 // pred_check_branch
        %255 = sbr.rel (%p253) target = $region16
      $region15: #{edge_module_forward.4} parent=11 // pred_region
        %p256 = scmp.lt.s32.totalorder %s25, 0
        %s257 = scalar_select %p256, %s25, 0
        %s258 = smul.addr %s257, 4
        %s259 = scalar_lea.vmem %s1, %s258
      $region16: #{edge_module_forward.4} parent=11 // pred_fallthru
        _
      // Predicated region
      $region17: #{edge_module_forward.4} parent=11 // pred_check
        %p260 = pneg %p102
      $region18: #{edge_module_forward.4} parent=11 // pred_check_branch
        %262 = sbr.rel (%p260) target = $region20
      $region19: #{edge_module_forward.4} parent=11 // pred_region
        _
      $region20: #{edge_module_forward.4} parent=11 // pred_fallthru
        _
      // Predicated region
      $region21: #{edge_module_forward.4} parent=11 // pred_check
        %p263 = pneg %p123
      $region22: #{edge_module_forward.4} parent=11 // pred_check_branch
        %265 = sbr.rel (%p263) target = $region24
      $region23: #{edge_module_forward.4} parent=11 // pred_region
        _
      $region24: #{edge_module_forward.4} parent=11 // pred_fallthru
        _
      // Predicated region
      $region25: #{edge_module_forward.4} parent=11 // pred_check
        %p266 = pneg %p144
      $region26: #{edge_module_forward.4} parent=11 // pred_check_branch
        %268 = sbr.rel (%p266) target = $region28
      $region27: #{edge_module_forward.4} parent=11 // pred_region
        _
      $region28: #{edge_module_forward.4} parent=11 // pred_fallthru
        _
      // Predicated region
      $region29: #{edge_module_forward.4} parent=11 // pred_check
        %p269 = pneg %p165
      $region30: #{edge_module_forward.4} parent=11 // pred_check_branch
        %271 = sbr.rel (%p269) target = $region32
      $region31: #{edge_module_forward.4} parent=11 // pred_region
        _
      $region32: #{edge_module_forward.4} parent=11 // pred_fallthru
        _
      // Predicated region
      $region33: #{edge_module_forward.4} parent=11 // pred_check
        %p272 = pneg %p186
      $region34: #{edge_module_forward.4} parent=11 // pred_check_branch
        %274 = sbr.rel (%p272) target = $region36
      $region35: #{edge_module_forward.4} parent=11 // pred_region
        _
      $region36: #{edge_module_forward.4} parent=11 // pred_fallthru
        _
    $region12: #{edge_module_forward.4} parent=5 // pred_fallthru
      _
    %p275 = scmp.lt.s32.totalorder %s15, 2
    // Predicated region
    $region37: #{edge_module_forward.4} parent=5 // pred_check
      %p276 = pneg %p275
    $region38: #{edge_module_forward.4} parent=5 // pred_check_branch
      %278 = sbr.rel (%p276) target = $region40
    $region39: #{edge_module_forward.4} parent=5 // pred_region
      // Predicated region
      $region41: #{edge_module_forward.4} parent=39 // pred_check
        %p279 = pneg %p49
      $region42: #{edge_module_forward.4} parent=39 // pred_check_branch
        %281 = sbr.rel (%p279) target = $region44
      $region43: #{edge_module_forward.4} parent=39 // pred_region
        %s282 = smul.u32 2, %s23
        %p283 = scmp.lt.s32.totalorder %s22, 1
        %s284 = scalar_select %p283, %s22, 1
        %p285 = scmp.lt.s32.totalorder %s282, 1
        %s286 = scalar_select %p285, %s282, 1
        %s287 = smul.addr %s286, 2
        %s288 = smul.addr %s284, 4
        %s289 = sadd.s32 %s287, %s288
        %s290 = smul.addr %s289, 4
        %s291 = scalar_lea.vmem %s0, %s290
        %s292 = smul.u32 2, %s23
      $region44: #{edge_module_forward.4} parent=39 // pred_fallthru
        _
    $region40: #{edge_module_forward.4} parent=5 // pred_fallthru
      _
    %p293 = scmp.le.s32.totalorder 1, %s15
    %p294 = scmp.lt.s32.totalorder %s15, 3
    %p295 = pnand %p293, %p294
    %p296 = pneg %p295
    // Predicated region
    $region45: #{edge_module_forward.4} parent=5 // pred_check
      _
    $region46: #{edge_module_forward.4} parent=5 // pred_check_branch
      %298 = sbr.rel (%p295) target = $region48
    $region47: #{edge_module_forward.4} parent=5 // pred_region
      %s299 = ssub.s32 %s15, 1
      %s300 = smul.u32 2, %s25
      %p301 = scmp.lt.s32.totalorder %s24, 1
      %s302 = scalar_select %p301, %s24, 1
      %p303 = scmp.lt.s32.totalorder %s300, 1
      %s304 = scalar_select %p303, %s300, 1
      %s305 = smul.addr %s304, 2
      %s306 = smul.addr %s302, 4
      %s307 = sadd.s32 %s305, %s306
      %s308 = smul.addr %s307, 4
      %s309 = scalar_lea.vmem %s0, %s308
      %p310 = pneg %p55
      %p311 = pneg %p52
      %p312 = scmp.lt.s32.totalorder %s25, 0
      %s313 = scalar_select %p312, %s25, 0
      %s314 = smul.addr %s313, 4
      %s315 = scalar_lea.vmem %s1, %s314
      %p316 = pneg %p81
      %p317 = pneg %p78
      %p318 = pneg %p102
      %p319 = pneg %p99
      %p320 = pneg %p123
      %p321 = pneg %p120
      %p322 = pneg %p144
      %p323 = pneg %p141
      %p324 = pneg %p165
      %p325 = pneg %p162
      %p326 = pneg %p186
      %p327 = pneg %p183
      %p328 = pneg %p212
      %p329 = pneg %p209
      %p330 = scmp.lt.s32.totalorder %s24, 1
      %s331 = scalar_select %p330, %s24, 1
      %s332 = smul.addr %s331, 8
      %s333 = smul.addr %s332, 4
      %s334 = scalar_lea.vmem %s7, %s333
      %p335 = pneg %p238
      %p336 = pneg %p235
      %p337 = scmp.lt.s32.totalorder %s24, 1
      %s338 = scalar_select %p337, %s24, 1
      %s339 = smul.addr %s338, 2
      %s340 = smul.addr %s339, 8
      %s341 = scalar_lea.vmem %s8, %s340
      %s342 = smul.u32 2, %s25
      %p343 = scmp.lt.s32.totalorder %s24, 1
      %s344 = scalar_select %p343, %s24, 1
      %p345 = scmp.lt.s32.totalorder %s342, 1
      %s346 = scalar_select %p345, %s342, 1
      %s347 = smul.addr %s346, 2
      %s348 = smul.addr %s344, 4
      %s349 = sadd.s32 %s347, %s348
      %s350 = smul.addr %s349, 4
      %s351 = scalar_lea.vmem %s0, %s350
      %s352 = smul.u32 2, %s25
      %p353 = scmp.lt.s32.totalorder %s25, 0
      %s354 = scalar_select %p353, %s25, 0
      %s355 = smul.addr %s354, 4
      %s356 = scalar_lea.vmem %s1, %s355
      %p357 = scmp.lt.s32.totalorder %s24, 1
      %s358 = scalar_select %p357, %s24, 1
      %s359 = smul.addr %s358, 8
      %s360 = smul.addr %s359, 4
      %s361 = scalar_lea.vmem %s7, %s360
      %p362 = scmp.lt.s32.totalorder %s24, 1
      %s363 = scalar_select %p362, %s24, 1
      %s364 = smul.addr %s363, 2
      %s365 = smul.addr %s364, 8
      %s366 = scalar_lea.vmem %s8, %s365
      %p368 = scmp.eq.s32.totalorder %s25, 0
      // Predicated region
      $region49: #{edge_module_forward.4} parent=47 // pred_check
        %p369 = pneg %p368
      $region50: #{edge_module_forward.4} parent=47 // pred_check_branch
        %371 = sbr.rel (%p369) target = $region52
      $region51: #{edge_module_forward.4} parent=47 // pred_region
        %372 = vst [vmem:[#allocation2] sm:$0xff] 0.0
        %373 = vst [vmem:[#allocation2 + $0x8] sm:$0xff] 0.0
        %374 = vst [vmem:[#allocation2 + $0x10] sm:$0xff] 0.0
        %375 = vst [vmem:[#allocation2 + $0x18] sm:$0xff] 0.0
        %376 = vst [vmem:[#allocation2 + $0x20] sm:$0xff] 0.0
        %377 = vst [vmem:[#allocation2 + $0x28] sm:$0xff] 0.0
        %378 = vst [vmem:[#allocation2 + $0x30] sm:$0xff] 0.0
        %379 = vst [vmem:[#allocation2 + $0x38] sm:$0xff] 0.0
      $region52: #{edge_module_forward.4} parent=47 // pred_fallthru
        _
      %v380 = vld [vmem:[#allocation2] sm:$0xff]
      %v381 = vld [vmem:[#allocation2 + $0x8] sm:$0xff]
      %v382 = vld [vmem:[#allocation2 + $0x10] sm:$0xff]
      %v383 = vld [vmem:[#allocation2 + $0x18] sm:$0xff]
      %v384 = vld [vmem:[#allocation2 + $0x20] sm:$0xff]
      %v385 = vld [vmem:[#allocation2 + $0x28] sm:$0xff]
      %v386 = vld [vmem:[#allocation2 + $0x30] sm:$0xff]
      %v387 = vld [vmem:[#allocation2 + $0x38] sm:$0xff]
      %v388 = vld [vmem:[%s356] sm:$0xf]
      %v389 = vld [vmem:[%s356 + $0x4] sm:$0xf]
      %v390 = vld [vmem:[%s356 + $0x8] sm:$0xf]
      %v391 = vld [vmem:[%s356 + $0xc] sm:$0xf]
      %v392 = vld [vmem:[%s351] sm:$0xff]
      %v393 = vld [vmem:[%s351 + $0x8] sm:$0xff]
      %v398 = vunpack.c.l.b16 %v388
      %v399 = vunpack.c.l.b16 %v389
      %v400 = vunpack.c.l.b16 %v390
      %v401 = vunpack.c.l.b16 %v391
      %v402 = vpack.c.b16 %v399, %v398
      %v403 = vpack.c.b16 %v401, %v400
      %v406 = vunpack.c.l.b16 %v392
      %v407 = vunpack.c.h.b16 %v392
      %v408 = vunpack.c.l.b16 %v393
      %v409 = vunpack.c.h.b16 %v393
      %v410 = vpack.c.b16 %v408, %v406
      %v411 = vpack.c.b16 %v409, %v407
      %vm414 = vcmask 130048
      %v416 = vsel %vm414, %v402, 0
      %v419 = vsel %vm414, %v403, 0
      %421 = vmatpush.bf16.msra.mxu0 0
      %422 = vmatpush.bf16.msra.mxu0 0
      %423 = vmatpush.bf16.msra.mxu0 0
      %424 = vmatpush.bf16.msra.mxu0 0
      %425 = vmatpush.bf16.msra.mxu0 0
      %426 = vmatpush.bf16.msra.mxu0 0
      %427 = vmatpush.bf16.msra.mxu0 0
      %428 = vmatpush.bf16.msra.mxu0 %v410
      %429 = vmatmul.bf16.gmra.mxu0 %v416
      %v430 = vpop.f32.mrf.mxu0
      %v431 = vadd.f32 0.0, %v430
      %v432 = vpop.f32.mrf.mxu0
      %v433 = vadd.f32 0.0, %v432
      %434 = vmatmul.bf16.gmra.mxu0 %v419
      %v435 = vpop.f32.mrf.mxu0
      %v436 = vadd.f32 0.0, %v435
      %v437 = vpop.f32.mrf.mxu0
      %v438 = vadd.f32 0.0, %v437
      %439 = vdwg.mxu0
      %440 = vmatpush.bf16.msra.mxu0 0
      %441 = vmatpush.bf16.msra.mxu0 0
      %442 = vmatpush.bf16.msra.mxu0 0
      %443 = vmatpush.bf16.msra.mxu0 0
      %444 = vmatpush.bf16.msra.mxu0 0
      %445 = vmatpush.bf16.msra.mxu0 0
      %446 = vmatpush.bf16.msra.mxu0 0
      %447 = vmatpush.bf16.msra.mxu0 %v411
      %448 = vmatmul.bf16.gmra.mxu0 %v416
      %v449 = vpop.f32.mrf.mxu0
      %v450 = vadd.f32 0.0, %v449
      %v451 = vpop.f32.mrf.mxu0
      %v452 = vadd.f32 0.0, %v451
      %453 = vmatmul.bf16.gmra.mxu0 %v419
      %v454 = vpop.f32.mrf.mxu0
      %v455 = vadd.f32 0.0, %v454
      %v456 = vpop.f32.mrf.mxu0
      %v457 = vadd.f32 0.0, %v456
      %458 = vdwg.mxu0
      %v459 = vadd.f32 %v380, %v431
      %v460 = vadd.f32 %v381, %v450
      %v461 = vadd.f32 %v382, %v433
      %v462 = vadd.f32 %v383, %v452
      %v463 = vadd.f32 %v384, %v436
      %v464 = vadd.f32 %v385, %v455
      %v465 = vadd.f32 %v386, %v438
      %v466 = vadd.f32 %v387, %v457
      %467 = vst [vmem:[#allocation2] sm:$0xff] %v459
      %468 = vst [vmem:[#allocation2 + $0x8] sm:$0xff] %v460
      %469 = vst [vmem:[#allocation2 + $0x10] sm:$0xff] %v461
      %470 = vst [vmem:[#allocation2 + $0x18] sm:$0xff] %v462
      %471 = vst [vmem:[#allocation2 + $0x20] sm:$0xff] %v463
      %472 = vst [vmem:[#allocation2 + $0x28] sm:$0xff] %v464
      %473 = vst [vmem:[#allocation2 + $0x30] sm:$0xff] %v465
      %474 = vst [vmem:[#allocation2 + $0x38] sm:$0xff] %v466
      // Predicated region
      $region53: #{edge_module_forward.4} parent=47 // pred_check
        %p475 = pneg %p368
      $region54: #{edge_module_forward.4} parent=47 // pred_check_branch
        %477 = sbr.rel (%p475) target = $region56
      $region55: #{edge_module_forward.4} parent=47 // pred_region
        %v478 = vld [vmem:[#allocation2] sm:$0xff]
        %v479 = vld [vmem:[#allocation2 + $0x8] sm:$0xff]
        %v480 = vld [vmem:[#allocation2 + $0x10] sm:$0xff]
        %v481 = vld [vmem:[#allocation2 + $0x18] sm:$0xff]
        %v482 = vld [vmem:[#allocation2 + $0x20] sm:$0xff]
        %v483 = vld [vmem:[#allocation2 + $0x28] sm:$0xff]
        %v484 = vld [vmem:[#allocation2 + $0x30] sm:$0xff]
        %v485 = vld [vmem:[#allocation2 + $0x38] sm:$0xff]
        %v486 = vld [vmem:[%s2] sm:$0xff]
        %v487 = vld [vmem:[%s2 + $0x8] sm:$0xff]
        %v488 = vld [vmem:[%s2 + $0x10] sm:$0xff]
        %v489 = vld [vmem:[%s2 + $0x18] sm:$0xff]
        %491 = vset.pattern.permute.xlu0 0
        %492 = vperm.xlu0 %491, %v486
        %v493 = vpop.permute.xlu0 %492
        %496 = vset.pattern.permute.xlu0 0
        %497 = vperm.xlu0 %496, %v487
        %v498 = vpop.permute.xlu0 %497
        %501 = vset.pattern.permute.xlu0 0
        %502 = vperm.xlu0 %501, %v488
        %v503 = vpop.permute.xlu0 %502
        %506 = vset.pattern.permute.xlu0 0
        %507 = vperm.xlu0 %506, %v489
        %v508 = vpop.permute.xlu0 %507
        %v510 = vmul.f32 %v478, %v493
        %v511 = vmul.f32 %v479, %v493
        %v512 = vmul.f32 %v480, %v498
        %v513 = vmul.f32 %v481, %v498
        %v514 = vmul.f32 %v482, %v503
        %v515 = vmul.f32 %v483, %v503
        %v516 = vmul.f32 %v484, %v508
        %v517 = vmul.f32 %v485, %v508
        %v518 = vld [vmem:[%s3] sm:$0xff]
        %v519 = vld [vmem:[%s3 + $0x8] sm:$0xff]
        %v520 = vld [vmem:[%s3 + $0x10] sm:$0xff]
        %v521 = vld [vmem:[%s3 + $0x18] sm:$0xff]
        %523 = vset.pattern.permute.xlu0 0
        %524 = vperm.xlu0 %523, %v518
        %v525 = vpop.permute.xlu0 %524
        %528 = vset.pattern.permute.xlu0 0
        %529 = vperm.xlu0 %528, %v519
        %v530 = vpop.permute.xlu0 %529
        %533 = vset.pattern.permute.xlu0 0
        %534 = vperm.xlu0 %533, %v520
        %v535 = vpop.permute.xlu0 %534
        %538 = vset.pattern.permute.xlu0 0
        %539 = vperm.xlu0 %538, %v521
        %v540 = vpop.permute.xlu0 %539
        %v542 = vadd.f32 %v510, %v525
        %v543 = vadd.f32 %v511, %v525
        %v544 = vadd.f32 %v512, %v530
        %v545 = vadd.f32 %v513, %v530
        %v546 = vadd.f32 %v514, %v535
        %v547 = vadd.f32 %v515, %v535
        %v548 = vadd.f32 %v516, %v540
        %v549 = vadd.f32 %v517, %v540
        %550 = vst [vmem:[#allocation2] sm:$0xff] %v542
        %551 = vst [vmem:[#allocation2 + $0x8] sm:$0xff] %v543
        %552 = vst [vmem:[#allocation2 + $0x10] sm:$0xff] %v544
        %553 = vst [vmem:[#allocation2 + $0x18] sm:$0xff] %v545
        %554 = vst [vmem:[#allocation2 + $0x20] sm:$0xff] %v546
        %555 = vst [vmem:[#allocation2 + $0x28] sm:$0xff] %v547
        %556 = vst [vmem:[#allocation2 + $0x30] sm:$0xff] %v548
        %557 = vst [vmem:[#allocation2 + $0x38] sm:$0xff] %v549
        %v558 = vld [vmem:[#allocation2] sm:$0xff]
        %v559 = vld [vmem:[#allocation2 + $0x8] sm:$0xff]
        %v560 = vld [vmem:[#allocation2 + $0x10] sm:$0xff]
        %v561 = vld [vmem:[#allocation2 + $0x18] sm:$0xff]
        %v562 = vld [vmem:[#allocation2 + $0x20] sm:$0xff]
        %v563 = vld [vmem:[#allocation2 + $0x28] sm:$0xff]
        %v564 = vld [vmem:[#allocation2 + $0x30] sm:$0xff]
        %v565 = vld [vmem:[#allocation2 + $0x38] sm:$0xff]
        %v566 = vpack.c.bf16 %v559, %v558
        %v567 = vpack.c.bf16 %v561, %v560
        %v568 = vpack.c.bf16 %v563, %v562
        %v569 = vpack.c.bf16 %v565, %v564
        %570 = vst [vmem:[%s361] sm:$0xff] %v566
        %571 = vst [vmem:[%s361 + $0x8] sm:$0xff] %v567
        %572 = vst [vmem:[%s361 + $0x10] sm:$0xff] %v568
        %573 = vst [vmem:[%s361 + $0x18] sm:$0xff] %v569
        %v574 = vld [vmem:[%s4] sm:$0xf]
        %v575 = vld [vmem:[%s4 + $0x4] sm:$0xf]
        %v576 = vld [vmem:[%s4 + $0x8] sm:$0xf]
        %v577 = vld [vmem:[%s4 + $0xc] sm:$0xf]
        %v578 = vld [vmem:[%s4 + $0x10] sm:$0xf]
        %v579 = vld [vmem:[%s4 + $0x14] sm:$0xf]
        %v580 = vld [vmem:[%s4 + $0x18] sm:$0xf]
        %v581 = vld [vmem:[%s4 + $0x1c] sm:$0xf]
        %v582 = vld [vmem:[%s4 + $0x20] sm:$0xf]
        %v583 = vld [vmem:[%s361] sm:$0xff]
        %v584 = vld [vmem:[%s361 + $0x8] sm:$0xff]
        %v585 = vld [vmem:[%s361 + $0x10] sm:$0xff]
        %v586 = vld [vmem:[%s361 + $0x18] sm:$0xff]
        %v596 = vunpack.c.l.b16 %v574
        %v597 = vunpack.c.l.b16 %v575
        %v598 = vunpack.c.l.b16 %v576
        %v599 = vunpack.c.l.b16 %v577
        %v600 = vunpack.c.l.b16 %v578
        %v601 = vunpack.c.l.b16 %v579
        %v602 = vunpack.c.l.b16 %v580
        %v603 = vunpack.c.l.b16 %v581
        %v604 = vunpack.c.l.b16 %v582
        %v605 = vpack.c.b16 %v597, %v596
        %v606 = vpack.c.b16 %v599, %v598
        %v607 = vpack.c.b16 %v601, %v600
        %v608 = vpack.c.b16 %v603, %v602
        %v609 = vpack.c.b16 %v604, %v604
        %v614 = vunpack.c.l.b16 %v583
        %v615 = vunpack.c.h.b16 %v583
        %v616 = vunpack.c.l.b16 %v584
        %v617 = vunpack.c.h.b16 %v584
        %v618 = vunpack.c.l.b16 %v585
        %v619 = vunpack.c.h.b16 %v585
        %v620 = vunpack.c.l.b16 %v586
        %v621 = vunpack.c.h.b16 %v586
        %v622 = vpack.c.b16 %v616, %v614
        %v623 = vpack.c.b16 %v617, %v615
        %v624 = vpack.c.b16 %v620, %v618
        %v625 = vpack.c.b16 %v621, %v619
        %vm630 = vcmask 261120
        %v632 = vsel %vm630, %v605, 0
        %v635 = vsel %vm630, %v606, 0
        %v638 = vsel %vm630, %v607, 0
        %v641 = vsel %vm630, %v608, 0
        %v644 = vsel %vm630, %v609, 0
        %646 = vmatpush.bf16.msra.mxu0 0
        %647 = vmatpush.bf16.msra.mxu0 0
        %648 = vmatpush.bf16.msra.mxu0 0
        %649 = vmatpush.bf16.msra.mxu0 0
        %650 = vmatpush.bf16.msra.mxu0 0
        %651 = vmatpush.bf16.msra.mxu0 0
        %652 = vmatpush.bf16.msra.mxu0 %v624
        %653 = vmatpush.bf16.msra.mxu0 %v622
        %654 = vmatmul.bf16.gmra.mxu0 %v632
        %v655 = vpop.f32.mrf.mxu0
        %v656 = vadd.f32 0.0, %v655
        %v657 = vpop.f32.mrf.mxu0
        %v658 = vadd.f32 0.0, %v657
        %659 = vmatmul.bf16.gmra.mxu0 %v635
        %v660 = vpop.f32.mrf.mxu0
        %v661 = vadd.f32 0.0, %v660
        %v662 = vpop.f32.mrf.mxu0
        %v663 = vadd.f32 0.0, %v662
        %664 = vmatmul.bf16.gmra.mxu0 %v638
        %v665 = vpop.f32.mrf.mxu0
        %v666 = vadd.f32 0.0, %v665
        %v667 = vpop.f32.mrf.mxu0
        %v668 = vadd.f32 0.0, %v667
        %669 = vmatmul.bf16.gmra.mxu0 %v641
        %v670 = vpop.f32.mrf.mxu0
        %v671 = vadd.f32 0.0, %v670
        %v672 = vpop.f32.mrf.mxu0
        %v673 = vadd.f32 0.0, %v672
        %674 = vmatmul.bf16.gmra.mxu0 %v644
        %v675 = vpop.f32.mrf.mxu0
        %v676 = vadd.f32 0.0, %v675
        %v677 = vpop.f32.mrf.mxu0
        %678 = vdwg.mxu0
        %679 = vmatpush.bf16.msra.mxu0 0
        %680 = vmatpush.bf16.msra.mxu0 0
        %681 = vmatpush.bf16.msra.mxu0 0
        %682 = vmatpush.bf16.msra.mxu0 0
        %683 = vmatpush.bf16.msra.mxu0 0
        %684 = vmatpush.bf16.msra.mxu0 0
        %685 = vmatpush.bf16.msra.mxu0 %v625
        %686 = vmatpush.bf16.msra.mxu0 %v623
        %687 = vmatmul.bf16.gmra.mxu0 %v632
        %v688 = vpop.f32.mrf.mxu0
        %v689 = vadd.f32 0.0, %v688
        %v690 = vpop.f32.mrf.mxu0
        %v691 = vadd.f32 0.0, %v690
        %692 = vmatmul.bf16.gmra.mxu0 %v635
        %v693 = vpop.f32.mrf.mxu0
        %v694 = vadd.f32 0.0, %v693
        %v695 = vpop.f32.mrf.mxu0
        %v696 = vadd.f32 0.0, %v695
        %697 = vmatmul.bf16.gmra.mxu0 %v638
        %v698 = vpop.f32.mrf.mxu0
        %v699 = vadd.f32 0.0, %v698
        %v700 = vpop.f32.mrf.mxu0
        %v701 = vadd.f32 0.0, %v700
        %702 = vmatmul.bf16.gmra.mxu0 %v641
        %v703 = vpop.f32.mrf.mxu0
        %v704 = vadd.f32 0.0, %v703
        %v705 = vpop.f32.mrf.mxu0
        %v706 = vadd.f32 0.0, %v705
        %707 = vmatmul.bf16.gmra.mxu0 %v644
        %v708 = vpop.f32.mrf.mxu0
        %v709 = vadd.f32 0.0, %v708
        %v710 = vpop.f32.mrf.mxu0
        %711 = vdwg.mxu0
        %712 = vrot.lane.b32.xlu0 %v656, 17
        %v713 = vpop.permute.xlu0 %712
        %714 = vrot.lane.b32.xlu0 %v689, 17
        %v715 = vpop.permute.xlu0 %714
        %v716 = vlaneseq
        %v717 = vand.u32 %v716, 127
        %vm718 = vcmp.lt.s32.totalorder %v717, 17
        %v719 = vsel %vm718, %v713, %v715
        %v720 = vsel %vm718, %v715, %v713
        %v721 = vld [vmem:[%s6] sm:$0x3]
        %v723 = vperm.slane %v721, 0
        %v724 = vperm.slane %v721, 1
        %v727 = vmul.f32 %v720, %v723
        %v728 = vmul.f32 %v719, %v724
        %v729 = vadd.f32 %v727, 0.0
        %v730 = vadd.f32 %v728, 0.0
        %731 = vrot.lane.b32.xlu0 %v658, 16
        %v732 = vpop.permute.xlu0 %731
        %733 = vrot.lane.b32.xlu0 %v691, 16
        %v734 = vpop.permute.xlu0 %733
        %vm735 = vcmp.lt.s32.totalorder %v717, 16
        %v736 = vsel %vm735, %v732, %v734
        %v737 = vsel %vm735, %v734, %v732
        %s738 = scalar_lea.vmem %s6, 2
        %v739 = vld [vmem:[%s738] sm:$0x3]
        %v741 = vperm.slane %v739, 0
        %v742 = vperm.slane %v739, 1
        %v745 = vmul.f32 %v737, %v741
        %v746 = vmul.f32 %v736, %v742
        %v747 = vadd.f32 %v729, %v745
        %v748 = vadd.f32 %v730, %v746
        %749 = vrot.lane.b32.xlu0 %v661, 15
        %v750 = vpop.permute.xlu0 %749
        %751 = vrot.lane.b32.xlu0 %v694, 15
        %v752 = vpop.permute.xlu0 %751
        %vm753 = vcmp.lt.s32.totalorder %v717, 15
        %v754 = vsel %vm753, %v750, %v752
        %v755 = vsel %vm753, %v752, %v750
        %s756 = scalar_lea.vmem %s6, 4
        %v757 = vld [vmem:[%s756] sm:$0x3]
        %v759 = vperm.slane %v757, 0
        %v760 = vperm.slane %v757, 1
        %v763 = vmul.f32 %v755, %v759
        %v764 = vmul.f32 %v754, %v760
        %v765 = vadd.f32 %v747, %v763
        %v766 = vadd.f32 %v748, %v764
        %767 = vrot.lane.b32.xlu0 %v663, 1
        %v768 = vpop.permute.xlu0 %767
        %769 = vrot.lane.b32.xlu0 %v696, 1
        %v770 = vpop.permute.xlu0 %769
        %vm771 = vcmp.lt.s32.totalorder %v717, 1
        %v772 = vsel %vm771, %v768, %v770
        %v773 = vsel %vm771, %v770, %v768
        %s774 = scalar_lea.vmem %s6, 6
        %v775 = vld [vmem:[%s774] sm:$0x3]
        %v777 = vperm.slane %v775, 0
        %v778 = vperm.slane %v775, 1
        %v781 = vmul.f32 %v773, %v777
        %v782 = vmul.f32 %v772, %v778
        %v783 = vadd.f32 %v765, %v781
        %v784 = vadd.f32 %v766, %v782
        %s785 = scalar_lea.vmem %s6, 8
        %v786 = vld [vmem:[%s785] sm:$0x3]
        %v788 = vperm.slane %v786, 0
        %v789 = vperm.slane %v786, 1
        %v792 = vmul.f32 %v666, %v788
        %v793 = vmul.f32 %v699, %v789
        %v794 = vadd.f32 %v783, %v792
        %v795 = vadd.f32 %v784, %v793
        %796 = vrot.lane.b32.xlu0 %v668, 127
        %v797 = vpop.permute.xlu0 %796
        %798 = vrot.lane.b32.xlu0 %v701, 127
        %v799 = vpop.permute.xlu0 %798
        %vm800 = vcmp.lt.s32.totalorder %v717, 127
        %v801 = vsel %vm800, %v797, %v799
        %v802 = vsel %vm800, %v799, %v797
        %s803 = scalar_lea.vmem %s6, 10
        %v804 = vld [vmem:[%s803] sm:$0x3]
        %v806 = vperm.slane %v804, 0
        %v807 = vperm.slane %v804, 1
        %v810 = vmul.f32 %v801, %v806
        %v811 = vmul.f32 %v802, %v807
        %v812 = vadd.f32 %v794, %v810
        %v813 = vadd.f32 %v795, %v811
        %814 = vrot.lane.b32.xlu0 %v671, 113
        %v815 = vpop.permute.xlu0 %814
        %816 = vrot.lane.b32.xlu0 %v704, 113
        %v817 = vpop.permute.xlu0 %816
        %vm818 = vcmp.lt.s32.totalorder %v717, 113
        %v819 = vsel %vm818, %v815, %v817
        %v820 = vsel %vm818, %v817, %v815
        %s821 = scalar_lea.vmem %s6, 12
        %v822 = vld [vmem:[%s821] sm:$0x3]
        %v824 = vperm.slane %v822, 0
        %v825 = vperm.slane %v822, 1
        %v828 = vmul.f32 %v819, %v824
        %v829 = vmul.f32 %v820, %v825
        %v830 = vadd.f32 %v812, %v828
        %v831 = vadd.f32 %v813, %v829
        %832 = vrot.lane.b32.xlu0 %v673, 112
        %v833 = vpop.permute.xlu0 %832
        %834 = vrot.lane.b32.xlu0 %v706, 112
        %v835 = vpop.permute.xlu0 %834
        %vm836 = vcmp.lt.s32.totalorder %v717, 112
        %v837 = vsel %vm836, %v833, %v835
        %v838 = vsel %vm836, %v835, %v833
        %s839 = scalar_lea.vmem %s6, 14
        %v840 = vld [vmem:[%s839] sm:$0x3]
        %v842 = vperm.slane %v840, 0
        %v843 = vperm.slane %v840, 1
        %v846 = vmul.f32 %v837, %v842
        %v847 = vmul.f32 %v838, %v843
        %v848 = vadd.f32 %v830, %v846
        %v849 = vadd.f32 %v831, %v847
        %850 = vrot.lane.b32.xlu0 %v676, 111
        %v851 = vpop.permute.xlu0 %850
        %852 = vrot.lane.b32.xlu0 %v709, 111
        %v853 = vpop.permute.xlu0 %852
        %vm854 = vcmp.lt.s32.totalorder %v717, 111
        %v855 = vsel %vm854, %v851, %v853
        %v856 = vsel %vm854, %v853, %v851
        %s857 = scalar_lea.vmem %s6, 16
        %v858 = vld [vmem:[%s857] sm:$0x3]
        %v860 = vperm.slane %v858, 0
        %v861 = vperm.slane %v858, 1
        %v864 = vmul.f32 %v855, %v860
        %v865 = vmul.f32 %v856, %v861
        %v866 = vadd.f32 %v848, %v864
        %v867 = vadd.f32 %v849, %v865
        %v868 = vld [vmem:[%s5] sm:$0xff]
        %870 = vset.pattern.permute.xlu0 0
        %871 = vperm.xlu0 %870, %v868
        %v872 = vpop.permute.xlu0 %871
        %v874 = vadd.f32 %v866, %v872
        %v875 = vadd.f32 %v867, %v872
        %876 = vst [vmem:[%s366] sm:$0xff] %v874
        %877 = vst [vmem:[%s366 + $0x8] sm:$0xff] %v875
      $region56: #{edge_module_forward.4} parent=47 // pred_fallthru
        _
      %p878 = scmp.lt.s32.totalorder %s24, 1
      %s879 = scalar_select %p878, %s24, 1
      %s880 = smul.addr %s879, 8
      %s881 = smul.addr %s880, 4
      %s882 = scalar_lea.vmem %s7, %s881
      %p883 = scmp.lt.s32.totalorder %s24, 1
      %s884 = scalar_select %p883, %s24, 1
      %s885 = smul.addr %s884, 2
      %s886 = smul.addr %s885, 8
      %s887 = scalar_lea.vmem %s8, %s886
      // Predicated region
      $region57: #{edge_module_forward.4} parent=47 // pred_check
        %p888 = pneg %p209
      $region58: #{edge_module_forward.4} parent=47 // pred_check_branch
        %890 = sbr.rel (%p888) target = $region60
      $region59: #{edge_module_forward.4} parent=47 // pred_region
        _
      $region60: #{edge_module_forward.4} parent=47 // pred_fallthru
        _
      // Predicated region
      $region61: #{edge_module_forward.4} parent=47 // pred_check
        %p891 = pneg %p235
      $region62: #{edge_module_forward.4} parent=47 // pred_check_branch
        %893 = sbr.rel (%p891) target = $region64
      $region63: #{edge_module_forward.4} parent=47 // pred_region
        _
      $region64: #{edge_module_forward.4} parent=47 // pred_fallthru
        _
    $region48: #{edge_module_forward.4} parent=5 // pred_fallthru
      _
    %p894 = scmp.le.s32.totalorder 2, %s15
    // Predicated region
    $region65: #{edge_module_forward.4} parent=5 // pred_check
      %p895 = pneg %p894
    $region66: #{edge_module_forward.4} parent=5 // pred_check_branch
      %897 = sbr.rel (%p895) target = $region68
    $region67: #{edge_module_forward.4} parent=5 // pred_region
      %s898 = ssub.s32 %s15, 2
      // Predicated region
      $region69: #{edge_module_forward.4} parent=67 // pred_check
        %p899 = pneg %p215
      $region70: #{edge_module_forward.4} parent=67 // pred_check_branch
        %901 = sbr.rel (%p899) target = $region72
      $region71: #{edge_module_forward.4} parent=67 // pred_region
        %p902 = scmp.lt.s32.totalorder %s26, 1
        %s903 = scalar_select %p902, %s26, 1
        %s904 = smul.addr %s903, 8
        %s905 = smul.addr %s904, 4
        %s906 = scalar_lea.vmem %s7, %s905
      $region72: #{edge_module_forward.4} parent=67 // pred_fallthru
        _
      // Predicated region
      $region73: #{edge_module_forward.4} parent=67 // pred_check
        %p907 = pneg %p241
      $region74: #{edge_module_forward.4} parent=67 // pred_check_branch
        %909 = sbr.rel (%p907) target = $region76
      $region75: #{edge_module_forward.4} parent=67 // pred_region
        %p910 = scmp.lt.s32.totalorder %s26, 1
        %s911 = scalar_select %p910, %s26, 1
        %s912 = smul.addr %s911, 2
        %s913 = smul.addr %s912, 8
        %s914 = scalar_lea.vmem %s8, %s913
      $region76: #{edge_module_forward.4} parent=67 // pred_fallthru
        _
    $region68: #{edge_module_forward.4} parent=5 // pred_fallthru
      _
  $region6: #{edge_module_forward.4} parent=0 // loop_footer
    %s19 = sadd.s32 1, %s15
  $region7: #{edge_module_forward.4} parent=0 // loop_footer_branch
    %14 = sbr.rel target = $region3
  $region8: #{edge_module_forward.4} parent=0 // loop_exit
    _

</llo_original>
